<compile_context>
chip_gen: v7x
topology: tpu7x:2x2x1
jax: 0.10.0
libtpu: 0.0.40
codegen_flags: <defaults>
</compile_context>

<pallas_src>
import functools
import math

import jax
import jax.numpy as jnp
from jax import lax
from jax.experimental import pallas as pl
from jax.experimental.pallas import tpu as pltpu

BN_EPS = 1e-5
BN_SCALE = float(1.0 / math.sqrt(1.0 + BN_EPS))

PRIMITIVES = (
    "none", "max_pool_3x3", "avg_pool_3x3", "skip_connect",
    "sep_conv_3x3", "sep_conv_5x5", "dil_conv_3x3", "dil_conv_5x5",
)


# ----------------------------- fused Pallas kernel ----------------------------

def _mixed_op_kernel(ws_ref, th_ref, x_ref, o_ref, *, N, C, H, W, offs):
    """All non-trivial primitives computed and mixed in one invocation.

    Layout: plane p = n*C + c on sublanes, flattened pixel q = h*W + w on lanes.
    Spatial shifts = lane rolls + boundary masks; 1x1 pointwise = sublane rolls
    + per-plane coefficient columns read from th_ref (weights pre-packed on host).
    """
    f32 = jnp.float32
    NC, HW = N * C, H * W

    x = x_ref[...]                                        # (NC, HW) float32

    # ---- boundary masks (float32), one per shift magnitude actually used ----
    q = lax.broadcasted_iota(jnp.int32, (NC, HW), 1)      # flat pixel index h*W+w
    ww = q & (W - 1)                                      # w   (W is a power of 2)
    mh, mw = {}, {}
    for d in (1, 2, 4):
        mh[d] = (q < (H - d) * W).astype(f32)             # valid where h + d <  H
        mh[-d] = (q >= d * W).astype(f32)                 # valid where h - d >= 0
        mw[d] = (ww < (W - d)).astype(f32)
        mw[-d] = (ww >= d).astype(f32)

    def tap(src, dy, dx, fill=0.0):
        """src shifted by (dy, dx); out-of-image positions replaced by `fill`."""
        off = dy * W + dx
        v = src if off == 0 else pltpu.roll(src, shift=(-off) % HW, axis=1)
        if fill == 0.0:                       # zero padding -> multiply by mask
            if dy:
                v = v * mh[dy]
            if dx:
                v = v * mw[dx]
        else:                                 # -inf padding (max pool)
            if dy:
                v = jnp.where(mh[dy] > 0.5, v, fill)
            if dx:
                v = jnp.where(mw[dx] > 0.5, v, fill)
        return v

    def dw_conv(src, K, dil, c0):
        """Depthwise KxK conv (zero pad, stride 1); weights = th_ref columns."""
        pad = dil * (K - 1) // 2
        out = None
        t = 0
        for ky in range(K):
            for kx in range(K):
                dy, dx = ky * dil - pad, kx * dil - pad
                term = th_ref[:, c0 + t:c0 + t + 1] * tap(src, dy, dx)
                out = term if out is None else out + term
                t += 1
        return out

    def pw_conv(src, c0):
        """1x1 conv across channels via sublane rolls + coefficient columns."""
        out = None
        for i, d in enumerate(range(-(C - 1), C)):
            v = src if d == 0 else pltpu.roll(src, shift=(-d) % NC, axis=0)
            term = th_ref[:, c0 + i:c0 + i + 1] * v
            out = term if out is None else out + term
        return out

    # ---- accumulate-as-you-go mix ('none' contributes 0 and is dropped) ------
    acc = ws_ref[0] * x                                    # skip_connect

    # 3x3 stride-1 pad-1 pools (BatchNorm scale folded into the SMEM weights)
    mx = x
    sm = x
    for dy in (-1, 0, 1):
        for dx in (-1, 0, 1):
            if dy == 0 and dx == 0:
                continue
            mx = jnp.maximum(mx, tap(x, dy, dx, fill=float("-inf")))
            sm = sm + tap(x, dy, dx)
    acc = acc + ws_ref[1] * mx                             # max_pool_3x3
    # count_include_pad=False divisor built from the index arrays (no divide)
    inv_h = jnp.where((q >= W) & (q < (H - 1) * W), f32(1.0 / 3.0), f32(0.5))
    inv_w = jnp.where((ww >= 1) & (ww < W - 1), f32(1.0 / 3.0), f32(0.5))
    acc = acc + (ws_ref[2] * (inv_h * inv_w)) * sm         # avg_pool_3x3

    xr = jnp.maximum(x, 0.0)                               # shared ReLU for convs
    (s3d1, s3p1, s3d2, s3p2,
     s5d1, s5p1, s5d2, s5p2, d3d, d3p, d5d, d5p) = offs

    # sep_conv_3x3 / sep_conv_5x5: (ReLU -> dw -> pw -> BN) x 2; BN and the
    # architecture mix weight are folded into the pointwise columns host-side.
    y = pw_conv(dw_conv(xr, 3, 1, s3d1), s3p1)
    acc = acc + pw_conv(dw_conv(jnp.maximum(y, 0.0), 3, 1, s3d2), s3p2)

    y = pw_conv(dw_conv(xr, 5, 1, s5d1), s5p1)
    acc = acc + pw_conv(dw_conv(jnp.maximum(y, 0.0), 5, 1, s5d2), s5p2)

    # dil_conv_3x3 (dil=2, pad=2) / dil_conv_5x5 (dil=2, pad=4)
    acc = acc + pw_conv(dw_conv(xr, 3, 2, d3d), d3p)
    acc = acc + pw_conv(dw_conv(xr, 5, 2, d5d), d5p)

    o_ref[...] = acc                                       # single lane-dense store


# ----------------------------- wrapper -----------------------------------------

def _col_offsets(C):
    """Static lane offsets of each weight-column block inside theta."""
    sizes = (9, 2 * C - 1, 9, 2 * C - 1,        # sep3: dw1, pw1, dw2, pw2
             25, 2 * C - 1, 25, 2 * C - 1,      # sep5: dw1, pw1, dw2, pw2
             9, 2 * C - 1,                      # dil3: dw, pw
             25, 2 * C - 1)                     # dil5: dw, pw
    offs, a = [], 0
    for s in sizes:
        offs.append(a)
        a += s
    return tuple(offs), a


def _build_weight_columns(params, w, N, C):
    """Pack every per-plane coefficient the kernel needs into one (N*C, T) array.

    Depthwise tap t  -> column dw[ky, kx, c] replicated over n.
    Pointwise delta d -> column pw[c+d, c] (zero where c+d is out of range) with
    BatchNorm scale (and, for the final pointwise of each conv primitive, the
    architecture mixing weight) folded in.
    """
    def dw_cols(dw):                                        # (K,K,C) -> (N*C, K*K)
        K = dw.shape[0]
        cols = jnp.tile(dw.reshape(K * K, 1, C), (1, N, 1)).reshape(K * K, N * C)
        return cols.T.astype(jnp.float32)

    def pw_cols(pw, scale):                                 # (Cin,Cout) -> (N*C, 2C-1)
        cols = []
        for d in range(-(C - 1), C):
            col = []
            for co in range(C):
                ci = co + d
                col.append(pw[ci, co] * scale if 0 <= ci < C
                           else jnp.zeros((), jnp.float32))
            cols.append(jnp.stack(col))
        cols = jnp.stack(cols, axis=1)                      # (C, 2C-1)
        return jnp.tile(cols, (N, 1)).astype(jnp.float32)   # (N*C, 2C-1)

    p3, p5, d3, d5 = params["sep3"], params["sep5"], params["dil3"], params["dil5"]
    blocks = [
        dw_cols(p3["dw1"]), pw_cols(p3["pw1"], BN_SCALE),
        dw_cols(p3["dw2"]), pw_cols(p3["pw2"], BN_SCALE * w[4]),
        dw_cols(p5["dw1"]), pw_cols(p5["pw1"], BN_SCALE),
        dw_cols(p5["dw2"]), pw_cols(p5["pw2"], BN_SCALE * w[5]),
        dw_cols(d3["dw"]), pw_cols(d3["pw"], BN_SCALE * w[6]),
        dw_cols(d5["dw"]), pw_cols(d5["pw"], BN_SCALE * w[7]),
    ]
    return jnp.concatenate(blocks, axis=1)


def mixed_op_forward(x_nchw, weights, params, stride=1):
    assert stride == 1, "only the stride=1 MixedOp is implemented"
    # TODO(synk): stride=2 (FactorizedReduce skip, strided pools/convs) missing.
    N, C, H, W = x_nchw.shape
    assert H >= 3 and W >= 3
    assert (W & (W - 1)) == 0, "kernel derives the column index as q & (W-1)"

    w = weights.astype(jnp.float32).reshape(len(PRIMITIVES))
    x = x_nchw.astype(jnp.float32).reshape(N * C, H * W)    # lane-dense packing
    theta = _build_weight_columns(params, w, N, C)
    offs, ncols = _col_offsets(C)
    assert theta.shape == (N * C, ncols)
    # pool BatchNorm scale folded into the pool mixing weights; 'none' dropped.
    ws = jnp.stack([w[3], w[1] * BN_SCALE, w[2] * BN_SCALE])   # skip, max, avg

    kernel = functools.partial(_mixed_op_kernel, N=N, C=C, H=H, W=W, offs=offs)
    out = pl.pallas_call(
        kernel,
        out_shape=jax.ShapeDtypeStruct((N * C, H * W), jnp.float32),
        # No grid: the whole (tiny) batch is one invocation -> no per-image
        # grid-step overhead, everything resident in VMEM.
        # TODO(synk): for v7x megacore, shard the N*C planes over a 2-wide
        #             "parallel" grid when the batch is large enough to matter.
        in_specs=[
            pl.BlockSpec(memory_space=pltpu.MemorySpace.SMEM),   # mix weights (3,)
            pl.BlockSpec(memory_space=pltpu.MemorySpace.VMEM),   # theta (N*C, T)
            pl.BlockSpec(memory_space=pltpu.MemorySpace.VMEM),   # x (N*C, H*W)
        ],
        out_specs=pl.BlockSpec(memory_space=pltpu.MemorySpace.VMEM),
    )(ws, theta, x)
    return out.reshape(N, C, H, W)


# ----------------------------- parameter init ----------------------------------

def init_mixed_op_params(key, C):
    """Deterministic parameter init for the conv primitives (bias=False everywhere)."""
    def dw(k, K):
        return jax.random.normal(k, (K, K, C), jnp.float32) / float(K * K)

    def pw(k):
        return jax.random.normal(k, (C, C), jnp.float32) / math.sqrt(C)

    ks = jax.random.split(key, 12)
    return {
        "sep3": dict(dw1=dw(ks[0], 3), pw1=pw(ks[1]), dw2=dw(ks[2], 3), pw2=pw(ks[3])),
        "sep5": dict(dw1=dw(ks[4], 5), pw1=pw(ks[5]), dw2=dw(ks[6], 5), pw2=pw(ks[7])),
        "dil3": dict(dw=dw(ks[8], 3), pw=pw(ks[9])),
        "dil5": dict(dw=dw(ks[10], 5), pw=pw(ks[11])),
    }


# ----------------------------- pure-JAX reference -------------------------------

def _ref_dwconv_pw(x, dw, pw, pad, dil):
    x = jnp.maximum(x, 0.0)
    C = x.shape[-1]
    K = dw.shape[0]
    y = lax.conv_general_dilated(
        x, dw.reshape(K, K, 1, C), window_strides=(1, 1),
        padding=[(pad, pad), (pad, pad)], rhs_dilation=(dil, dil),
        dimension_numbers=("NHWC", "HWIO", "NHWC"),
        feature_group_count=C, precision=lax.Precision.HIGHEST)
    return lax.conv_general_dilated(
        y, pw.reshape(1, 1, C, C), window_strides=(1, 1), padding="VALID",
        dimension_numbers=("NHWC", "HWIO", "NHWC"),
        precision=lax.Precision.HIGHEST)


def _ref_maxpool3(x):
    return BN_SCALE * lax.reduce_window(
        x, -jnp.inf, lax.max, (1, 3, 3, 1), (1, 1, 1, 1),
        [(0, 0), (1, 1), (1, 1), (0, 0)])


def _ref_avgpool3(x):
    win = ((1, 3, 3, 1), (1, 1, 1, 1), [(0, 0), (1, 1), (1, 1), (0, 0)])
    s = lax.reduce_window(x, 0.0, lax.add, *win)
    cnt = lax.reduce_window(jnp.ones_like(x), 0.0, lax.add, *win)
    return BN_SCALE * (s / cnt)


def _ref_mixed_op(x_nchw, weights, params):
    x = jnp.transpose(x_nchw, (0, 2, 3, 1)).astype(jnp.float32)
    outs = [jnp.zeros_like(x), _ref_maxpool3(x), _ref_avgpool3(x), x]
    p = params["sep3"]
    y = _ref_dwconv_pw(x, p["dw1"], p["pw1"] * BN_SCALE, 1, 1)
    y = _ref_dwconv_pw(y, p["dw2"], p["pw2"] * BN_SCALE, 1, 1)
    outs.append(y)
    p = params["sep5"]
    y = _ref_dwconv_pw(x, p["dw1"], p["pw1"] * BN_SCALE, 2, 1)
    y = _ref_dwconv_pw(y, p["dw2"], p["pw2"] * BN_SCALE, 2, 1)
    outs.append(y)
    p = params["dil3"]
    outs.append(_ref_dwconv_pw(x, p["dw"], p["pw"] * BN_SCALE, 2, 2))
    p = params["dil5"]
    outs.append(_ref_dwconv_pw(x, p["dw"], p["pw"] * BN_SCALE, 4, 2))
    y = sum(w * o for w, o in zip(weights, outs))
    return jnp.transpose(y, (0, 3, 1, 2))


# ----------------------------- main ----------------------------------------------

if __name__ == "__main__":
    key = jax.random.PRNGKey(0)
    k_x, k_a, k_p = jax.random.split(key, 3)

    N, C, H, W = 2, 4, 16, 16                 # NCHW, matching the PyTorch module
    x = jax.random.normal(k_x, (N, C, H, W), jnp.float32)
    alphas = jax.random.normal(k_a, (len(PRIMITIVES),), jnp.float32)
    weights = jax.nn.softmax(alphas)          # architecture mixing weights
    params = init_mixed_op_params(k_p, C)

    fwd = jax.jit(functools.partial(mixed_op_forward, stride=1))
    out = jax.block_until_ready(fwd(x, weights, params))

    assert out.shape == (N, C, H, W), out.shape
    assert bool(jnp.all(jnp.isfinite(out)))

    ref = _ref_mixed_op(x, weights, params)
    max_err = float(jnp.max(jnp.abs(out - ref)))
    assert max_err < 1e-2, f"mismatch vs reference, max abs err {max_err}"

    print("KERNEL_OK")
</pallas_src>

<mosaic_0001>
module attributes {stable_mosaic.version = 11 : i64} {
  func.func @_mixed_op_kernel(%arg0: memref<3xf32, #tpu.memory_space<smem>>, %arg1: memref<8x144xf32, #tpu.memory_space<vmem>>, %arg2: memref<8x256xf32, #tpu.memory_space<vmem>>, %arg3: memref<8x256xf32, #tpu.memory_space<vmem>>) attributes {dimension_semantics = [], scalar_prefetch = 0 : i64, scratch_operands = 0 : i64, tpu.core_type = #tpu.core_type<tc>} {
    %c0 = arith.constant 0 : index
    %c0_0 = arith.constant 0 : index
    %0 = vector.load %arg2[%c0, %c0_0] : memref<8x256xf32, #tpu.memory_space<vmem>>, vector<8x256xf32>
    %1 = tpu.iota {dimensions = array<i32: 1>} : vector<8x256xi32>
    %c15_i32 = arith.constant 15 : i32
    %2 = vector.broadcast %c15_i32 : i32 to vector<8x256xi32>
    %3 = arith.andi %1, %2 : vector<8x256xi32>
    %c240_i32 = arith.constant 240 : i32
    %4 = vector.broadcast %c240_i32 : i32 to vector<8x256xi32>
    %5 = arith.cmpi slt, %1, %4 : vector<8x256xi32>
    %6 = arith.extui %5 : vector<8x256xi1> to vector<8x256xi32>
    %7 = arith.sitofp %6 : vector<8x256xi32> to vector<8x256xf32>
    %c16_i32 = arith.constant 16 : i32
    %8 = vector.broadcast %c16_i32 : i32 to vector<8x256xi32>
    %9 = arith.cmpi sge, %1, %8 : vector<8x256xi32>
    %10 = arith.extui %9 : vector<8x256xi1> to vector<8x256xi32>
    %11 = arith.sitofp %10 : vector<8x256xi32> to vector<8x256xf32>
    %c15_i32_1 = arith.constant 15 : i32
    %12 = vector.broadcast %c15_i32_1 : i32 to vector<8x256xi32>
    %13 = arith.cmpi slt, %3, %12 : vector<8x256xi32>
    %14 = arith.extui %13 : vector<8x256xi1> to vector<8x256xi32>
    %15 = arith.sitofp %14 : vector<8x256xi32> to vector<8x256xf32>
    %c1_i32 = arith.constant 1 : i32
    %16 = vector.broadcast %c1_i32 : i32 to vector<8x256xi32>
    %17 = arith.cmpi sge, %3, %16 : vector<8x256xi32>
    %18 = arith.extui %17 : vector<8x256xi1> to vector<8x256xi32>
    %19 = arith.sitofp %18 : vector<8x256xi32> to vector<8x256xf32>
    %c224_i32 = arith.constant 224 : i32
    %20 = vector.broadcast %c224_i32 : i32 to vector<8x256xi32>
    %21 = arith.cmpi slt, %1, %20 : vector<8x256xi32>
    %22 = arith.extui %21 : vector<8x256xi1> to vector<8x256xi32>
    %23 = arith.sitofp %22 : vector<8x256xi32> to vector<8x256xf32>
    %c32_i32 = arith.constant 32 : i32
    %24 = vector.broadcast %c32_i32 : i32 to vector<8x256xi32>
    %25 = arith.cmpi sge, %1, %24 : vector<8x256xi32>
    %26 = arith.extui %25 : vector<8x256xi1> to vector<8x256xi32>
    %27 = arith.sitofp %26 : vector<8x256xi32> to vector<8x256xf32>
    %c14_i32 = arith.constant 14 : i32
    %28 = vector.broadcast %c14_i32 : i32 to vector<8x256xi32>
    %29 = arith.cmpi slt, %3, %28 : vector<8x256xi32>
    %30 = arith.extui %29 : vector<8x256xi1> to vector<8x256xi32>
    %31 = arith.sitofp %30 : vector<8x256xi32> to vector<8x256xf32>
    %c2_i32 = arith.constant 2 : i32
    %32 = vector.broadcast %c2_i32 : i32 to vector<8x256xi32>
    %33 = arith.cmpi sge, %3, %32 : vector<8x256xi32>
    %34 = arith.extui %33 : vector<8x256xi1> to vector<8x256xi32>
    %35 = arith.sitofp %34 : vector<8x256xi32> to vector<8x256xf32>
    %c192_i32 = arith.constant 192 : i32
    %36 = vector.broadcast %c192_i32 : i32 to vector<8x256xi32>
    %37 = arith.cmpi slt, %1, %36 : vector<8x256xi32>
    %38 = arith.extui %37 : vector<8x256xi1> to vector<8x256xi32>
    %39 = arith.sitofp %38 : vector<8x256xi32> to vector<8x256xf32>
    %c64_i32 = arith.constant 64 : i32
    %40 = vector.broadcast %c64_i32 : i32 to vector<8x256xi32>
    %41 = arith.cmpi sge, %1, %40 : vector<8x256xi32>
    %42 = arith.extui %41 : vector<8x256xi1> to vector<8x256xi32>
    %43 = arith.sitofp %42 : vector<8x256xi32> to vector<8x256xf32>
    %c12_i32 = arith.constant 12 : i32
    %44 = vector.broadcast %c12_i32 : i32 to vector<8x256xi32>
    %45 = arith.cmpi slt, %3, %44 : vector<8x256xi32>
    %46 = arith.extui %45 : vector<8x256xi1> to vector<8x256xi32>
    %47 = arith.sitofp %46 : vector<8x256xi32> to vector<8x256xf32>
    %c4_i32 = arith.constant 4 : i32
    %48 = vector.broadcast %c4_i32 : i32 to vector<8x256xi32>
    %49 = arith.cmpi sge, %3, %48 : vector<8x256xi32>
    %50 = arith.extui %49 : vector<8x256xi1> to vector<8x256xi32>
    %51 = arith.sitofp %50 : vector<8x256xi32> to vector<8x256xf32>
    %c0_2 = arith.constant 0 : index
    %52 = memref.load %arg0[%c0_2] : memref<3xf32, #tpu.memory_space<smem>>
    %53 = vector.broadcast %52 : f32 to vector<8x256xf32>
    %54 = arith.mulf %53, %0 : vector<8x256xf32>
    %c17_i32 = arith.constant 17 : i32
    %55 = tpu.dynamic_rotate %0 by %c17_i32 dim 1 : vector<8x256xf32>, i32 -> vector<8x256xf32>
    %cst = arith.constant 5.000000e-01 : f32
    %56 = vector.broadcast %cst : f32 to vector<8x256xf32>
    %57 = arith.cmpf ogt, %11, %56 : vector<8x256xf32>
    %cst_3 = arith.constant 0xFF800000 : f32
    %58 = vector.broadcast %cst_3 : f32 to vector<8x256xf32>
    %59 = arith.select %57, %55, %58 : vector<8x256xi1>, vector<8x256xf32>
    %cst_4 = arith.constant 5.000000e-01 : f32
    %60 = vector.broadcast %cst_4 : f32 to vector<8x256xf32>
    %61 = arith.cmpf ogt, %19, %60 : vector<8x256xf32>
    %cst_5 = arith.constant 0xFF800000 : f32
    %62 = vector.broadcast %cst_5 : f32 to vector<8x256xf32>
    %63 = arith.select %61, %59, %62 : vector<8x256xi1>, vector<8x256xf32>
    %64 = arith.maximumf %0, %63 : vector<8x256xf32>
    %c17_i32_6 = arith.constant 17 : i32
    %65 = tpu.dynamic_rotate %0 by %c17_i32_6 dim 1 : vector<8x256xf32>, i32 -> vector<8x256xf32>
    %66 = arith.mulf %65, %11 : vector<8x256xf32>
    %67 = arith.mulf %66, %19 : vector<8x256xf32>
    %68 = arith.addf %0, %67 : vector<8x256xf32>
    %c16_i32_7 = arith.constant 16 : i32
    %69 = tpu.dynamic_rotate %0 by %c16_i32_7 dim 1 : vector<8x256xf32>, i32 -> vector<8x256xf32>
    %cst_8 = arith.constant 5.000000e-01 : f32
    %70 = vector.broadcast %cst_8 : f32 to vector<8x256xf32>
    %71 = arith.cmpf ogt, %11, %70 : vector<8x256xf32>
    %cst_9 = arith.constant 0xFF800000 : f32
    %72 = vector.broadcast %cst_9 : f32 to vector<8x256xf32>
    %73 = arith.select %71, %69, %72 : vector<8x256xi1>, vector<8x256xf32>
    %74 = arith.maximumf %64, %73 : vector<8x256xf32>
    %c16_i32_10 = arith.constant 16 : i32
    %75 = tpu.dynamic_rotate %0 by %c16_i32_10 dim 1 : vector<8x256xf32>, i32 -> vector<8x256xf32>
    %76 = arith.mulf %75, %11 : vector<8x256xf32>
    %77 = arith.addf %68, %76 : vector<8x256xf32>
    %c15_i32_11 = arith.constant 15 : i32
    %78 = tpu.dynamic_rotate %0 by %c15_i32_11 dim 1 : vector<8x256xf32>, i32 -> vector<8x256xf32>
    %cst_12 = arith.constant 5.000000e-01 : f32
    %79 = vector.broadcast %cst_12 : f32 to vector<8x256xf32>
    %80 = arith.cmpf ogt, %11, %79 : vector<8x256xf32>
    %cst_13 = arith.constant 0xFF800000 : f32
    %81 = vector.broadcast %cst_13 : f32 to vector<8x256xf32>
    %82 = arith.select %80, %78, %81 : vector<8x256xi1>, vector<8x256xf32>
    %cst_14 = arith.constant 5.000000e-01 : f32
    %83 = vector.broadcast %cst_14 : f32 to vector<8x256xf32>
    %84 = arith.cmpf ogt, %15, %83 : vector<8x256xf32>
    %cst_15 = arith.constant 0xFF800000 : f32
    %85 = vector.broadcast %cst_15 : f32 to vector<8x256xf32>
    %86 = arith.select %84, %82, %85 : vector<8x256xi1>, vector<8x256xf32>
    %87 = arith.maximumf %74, %86 : vector<8x256xf32>
    %c15_i32_16 = arith.constant 15 : i32
    %88 = tpu.dynamic_rotate %0 by %c15_i32_16 dim 1 : vector<8x256xf32>, i32 -> vector<8x256xf32>
    %89 = arith.mulf %88, %11 : vector<8x256xf32>
    %90 = arith.mulf %89, %15 : vector<8x256xf32>
    %91 = arith.addf %77, %90 : vector<8x256xf32>
    %c1_i32_17 = arith.constant 1 : i32
    %92 = tpu.dynamic_rotate %0 by %c1_i32_17 dim 1 : vector<8x256xf32>, i32 -> vector<8x256xf32>
    %cst_18 = arith.constant 5.000000e-01 : f32
    %93 = vector.broadcast %cst_18 : f32 to vector<8x256xf32>
    %94 = arith.cmpf ogt, %19, %93 : vector<8x256xf32>
    %cst_19 = arith.constant 0xFF800000 : f32
    %95 = vector.broadcast %cst_19 : f32 to vector<8x256xf32>
    %96 = arith.select %94, %92, %95 : vector<8x256xi1>, vector<8x256xf32>
    %97 = arith.maximumf %87, %96 : vector<8x256xf32>
    %c1_i32_20 = arith.constant 1 : i32
    %98 = tpu.dynamic_rotate %0 by %c1_i32_20 dim 1 : vector<8x256xf32>, i32 -> vector<8x256xf32>
    %99 = arith.mulf %98, %19 : vector<8x256xf32>
    %100 = arith.addf %91, %99 : vector<8x256xf32>
    %c255_i32 = arith.constant 255 : i32
    %101 = tpu.dynamic_rotate %0 by %c255_i32 dim 1 : vector<8x256xf32>, i32 -> vector<8x256xf32>
    %cst_21 = arith.constant 5.000000e-01 : f32
    %102 = vector.broadcast %cst_21 : f32 to vector<8x256xf32>
    %103 = arith.cmpf ogt, %15, %102 : vector<8x256xf32>
    %cst_22 = arith.constant 0xFF800000 : f32
    %104 = vector.broadcast %cst_22 : f32 to vector<8x256xf32>
    %105 = arith.select %103, %101, %104 : vector<8x256xi1>, vector<8x256xf32>
    %106 = arith.maximumf %97, %105 : vector<8x256xf32>
    %c255_i32_23 = arith.constant 255 : i32
    %107 = tpu.dynamic_rotate %0 by %c255_i32_23 dim 1 : vector<8x256xf32>, i32 -> vector<8x256xf32>
    %108 = arith.mulf %107, %15 : vector<8x256xf32>
    %109 = arith.addf %100, %108 : vector<8x256xf32>
    %c241_i32 = arith.constant 241 : i32
    %110 = tpu.dynamic_rotate %0 by %c241_i32 dim 1 : vector<8x256xf32>, i32 -> vector<8x256xf32>
    %cst_24 = arith.constant 5.000000e-01 : f32
    %111 = vector.broadcast %cst_24 : f32 to vector<8x256xf32>
    %112 = arith.cmpf ogt, %7, %111 : vector<8x256xf32>
    %cst_25 = arith.constant 0xFF800000 : f32
    %113 = vector.broadcast %cst_25 : f32 to vector<8x256xf32>
    %114 = arith.select %112, %110, %113 : vector<8x256xi1>, vector<8x256xf32>
    %cst_26 = arith.constant 5.000000e-01 : f32
    %115 = vector.broadcast %cst_26 : f32 to vector<8x256xf32>
    %116 = arith.cmpf ogt, %19, %115 : vector<8x256xf32>
    %cst_27 = arith.constant 0xFF800000 : f32
    %117 = vector.broadcast %cst_27 : f32 to vector<8x256xf32>
    %118 = arith.select %116, %114, %117 : vector<8x256xi1>, vector<8x256xf32>
    %119 = arith.maximumf %106, %118 : vector<8x256xf32>
    %c241_i32_28 = arith.constant 241 : i32
    %120 = tpu.dynamic_rotate %0 by %c241_i32_28 dim 1 : vector<8x256xf32>, i32 -> vector<8x256xf32>
    %121 = arith.mulf %120, %7 : vector<8x256xf32>
    %122 = arith.mulf %121, %19 : vector<8x256xf32>
    %123 = arith.addf %109, %122 : vector<8x256xf32>
    %c240_i32_29 = arith.constant 240 : i32
    %124 = tpu.dynamic_rotate %0 by %c240_i32_29 dim 1 : vector<8x256xf32>, i32 -> vector<8x256xf32>
    %cst_30 = arith.constant 5.000000e-01 : f32
    %125 = vector.broadcast %cst_30 : f32 to vector<8x256xf32>
    %126 = arith.cmpf ogt, %7, %125 : vector<8x256xf32>
    %cst_31 = arith.constant 0xFF800000 : f32
    %127 = vector.broadcast %cst_31 : f32 to vector<8x256xf32>
    %128 = arith.select %126, %124, %127 : vector<8x256xi1>, vector<8x256xf32>
    %129 = arith.maximumf %119, %128 : vector<8x256xf32>
    %c240_i32_32 = arith.constant 240 : i32
    %130 = tpu.dynamic_rotate %0 by %c240_i32_32 dim 1 : vector<8x256xf32>, i32 -> vector<8x256xf32>
    %131 = arith.mulf %130, %7 : vector<8x256xf32>
    %132 = arith.addf %123, %131 : vector<8x256xf32>
    %c239_i32 = arith.constant 239 : i32
    %133 = tpu.dynamic_rotate %0 by %c239_i32 dim 1 : vector<8x256xf32>, i32 -> vector<8x256xf32>
    %cst_33 = arith.constant 5.000000e-01 : f32
    %134 = vector.broadcast %cst_33 : f32 to vector<8x256xf32>
    %135 = arith.cmpf ogt, %7, %134 : vector<8x256xf32>
    %cst_34 = arith.constant 0xFF800000 : f32
    %136 = vector.broadcast %cst_34 : f32 to vector<8x256xf32>
    %137 = arith.select %135, %133, %136 : vector<8x256xi1>, vector<8x256xf32>
    %cst_35 = arith.constant 5.000000e-01 : f32
    %138 = vector.broadcast %cst_35 : f32 to vector<8x256xf32>
    %139 = arith.cmpf ogt, %15, %138 : vector<8x256xf32>
    %cst_36 = arith.constant 0xFF800000 : f32
    %140 = vector.broadcast %cst_36 : f32 to vector<8x256xf32>
    %141 = arith.select %139, %137, %140 : vector<8x256xi1>, vector<8x256xf32>
    %142 = arith.maximumf %129, %141 : vector<8x256xf32>
    %c239_i32_37 = arith.constant 239 : i32
    %143 = tpu.dynamic_rotate %0 by %c239_i32_37 dim 1 : vector<8x256xf32>, i32 -> vector<8x256xf32>
    %144 = arith.mulf %143, %7 : vector<8x256xf32>
    %145 = arith.mulf %144, %15 : vector<8x256xf32>
    %146 = arith.addf %132, %145 : vector<8x256xf32>
    %c1 = arith.constant 1 : index
    %147 = memref.load %arg0[%c1] : memref<3xf32, #tpu.memory_space<smem>>
    %148 = vector.broadcast %147 : f32 to vector<8x256xf32>
    %149 = arith.mulf %148, %142 : vector<8x256xf32>
    %150 = arith.addf %54, %149 : vector<8x256xf32>
    %c16_i32_38 = arith.constant 16 : i32
    %151 = vector.broadcast %c16_i32_38 : i32 to vector<8x256xi32>
    %152 = arith.cmpi sge, %1, %151 : vector<8x256xi32>
    %c240_i32_39 = arith.constant 240 : i32
    %153 = vector.broadcast %c240_i32_39 : i32 to vector<8x256xi32>
    %154 = arith.cmpi slt, %1, %153 : vector<8x256xi32>
    %155 = arith.andi %152, %154 : vector<8x256xi1>
    %cst_40 = arith.constant 0.333333343 : f32
    %cst_41 = arith.constant 5.000000e-01 : f32
    %156 = vector.broadcast %cst_40 : f32 to vector<8x256xf32>
    %157 = vector.broadcast %cst_41 : f32 to vector<8x256xf32>
    %158 = arith.select %155, %156, %157 : vector<8x256xi1>, vector<8x256xf32>
    %c1_i32_42 = arith.constant 1 : i32
    %159 = vector.broadcast %c1_i32_42 : i32 to vector<8x256xi32>
    %160 = arith.cmpi sge, %3, %159 : vector<8x256xi32>
    %c15_i32_43 = arith.constant 15 : i32
    %161 = vector.broadcast %c15_i32_43 : i32 to vector<8x256xi32>
    %162 = arith.cmpi slt, %3, %161 : vector<8x256xi32>
    %163 = arith.andi %160, %162 : vector<8x256xi1>
    %cst_44 = arith.constant 0.333333343 : f32
    %cst_45 = arith.constant 5.000000e-01 : f32
    %164 = vector.broadcast %cst_44 : f32 to vector<8x256xf32>
    %165 = vector.broadcast %cst_45 : f32 to vector<8x256xf32>
    %166 = arith.select %163, %164, %165 : vector<8x256xi1>, vector<8x256xf32>
    %c2 = arith.constant 2 : index
    %167 = memref.load %arg0[%c2] : memref<3xf32, #tpu.memory_space<smem>>
    %168 = arith.mulf %158, %166 : vector<8x256xf32>
    %169 = vector.broadcast %167 : f32 to vector<8x256xf32>
    %170 = arith.mulf %169, %168 : vector<8x256xf32>
    %171 = arith.mulf %170, %146 : vector<8x256xf32>
    %172 = arith.addf %150, %171 : vector<8x256xf32>
    %cst_46 = arith.constant 0.000000e+00 : f32
    %173 = vector.broadcast %cst_46 : f32 to vector<8x256xf32>
    %174 = arith.maximumf %0, %173 : vector<8x256xf32>
    %c0_47 = arith.constant 0 : index
    %c0_48 = arith.constant 0 : index
    %175 = vector.load %arg1[%c0_47, %c0_48] : memref<8x144xf32, #tpu.memory_space<vmem>>, vector<8x1xf32>
    %c17_i32_49 = arith.constant 17 : i32
    %176 = tpu.dynamic_rotate %174 by %c17_i32_49 dim 1 : vector<8x256xf32>, i32 -> vector<8x256xf32>
    %177 = arith.mulf %176, %11 : vector<8x256xf32>
    %178 = arith.mulf %177, %19 : vector<8x256xf32>
    %179 = vector.broadcast %175 : vector<8x1xf32> to vector<8x256xf32>
    %180 = arith.mulf %179, %178 : vector<8x256xf32>
    %c0_50 = arith.constant 0 : index
    %c1_51 = arith.constant 1 : index
    %181 = vector.load %arg1[%c0_50, %c1_51] : memref<8x144xf32, #tpu.memory_space<vmem>>, vector<8x1xf32>
    %c16_i32_52 = arith.constant 16 : i32
    %182 = tpu.dynamic_rotate %174 by %c16_i32_52 dim 1 : vector<8x256xf32>, i32 -> vector<8x256xf32>
    %183 = arith.mulf %182, %11 : vector<8x256xf32>
    %184 = vector.broadcast %181 : vector<8x1xf32> to vector<8x256xf32>
    %185 = arith.mulf %184, %183 : vector<8x256xf32>
    %186 = arith.addf %180, %185 : vector<8x256xf32>
    %c0_53 = arith.constant 0 : index
    %c2_54 = arith.constant 2 : index
    %187 = vector.load %arg1[%c0_53, %c2_54] : memref<8x144xf32, #tpu.memory_space<vmem>>, vector<8x1xf32>
    %c15_i32_55 = arith.constant 15 : i32
    %188 = tpu.dynamic_rotate %174 by %c15_i32_55 dim 1 : vector<8x256xf32>, i32 -> vector<8x256xf32>
    %189 = arith.mulf %188, %11 : vector<8x256xf32>
    %190 = arith.mulf %189, %15 : vector<8x256xf32>
    %191 = vector.broadcast %187 : vector<8x1xf32> to vector<8x256xf32>
    %192 = arith.mulf %191, %190 : vector<8x256xf32>
    %193 = arith.addf %186, %192 : vector<8x256xf32>
    %c0_56 = arith.constant 0 : index
    %c3 = arith.constant 3 : index
    %194 = vector.load %arg1[%c0_56, %c3] : memref<8x144xf32, #tpu.memory_space<vmem>>, vector<8x1xf32>
    %c1_i32_57 = arith.constant 1 : i32
    %195 = tpu.dynamic_rotate %174 by %c1_i32_57 dim 1 : vector<8x256xf32>, i32 -> vector<8x256xf32>
    %196 = arith.mulf %195, %19 : vector<8x256xf32>
    %197 = vector.broadcast %194 : vector<8x1xf32> to vector<8x256xf32>
    %198 = arith.mulf %197, %196 : vector<8x256xf32>
    %199 = arith.addf %193, %198 : vector<8x256xf32>
    %c0_58 = arith.constant 0 : index
    %c4 = arith.constant 4 : index
    %200 = vector.load %arg1[%c0_58, %c4] : memref<8x144xf32, #tpu.memory_space<vmem>>, vector<8x1xf32>
    %201 = vector.broadcast %200 : vector<8x1xf32> to vector<8x256xf32>
    %202 = arith.mulf %201, %174 : vector<8x256xf32>
    %203 = arith.addf %199, %202 : vector<8x256xf32>
    %c0_59 = arith.constant 0 : index
    %c5 = arith.constant 5 : index
    %204 = vector.load %arg1[%c0_59, %c5] : memref<8x144xf32, #tpu.memory_space<vmem>>, vector<8x1xf32>
    %c255_i32_60 = arith.constant 255 : i32
    %205 = tpu.dynamic_rotate %174 by %c255_i32_60 dim 1 : vector<8x256xf32>, i32 -> vector<8x256xf32>
    %206 = arith.mulf %205, %15 : vector<8x256xf32>
    %207 = vector.broadcast %204 : vector<8x1xf32> to vector<8x256xf32>
    %208 = arith.mulf %207, %206 : vector<8x256xf32>
    %209 = arith.addf %203, %208 : vector<8x256xf32>
    %c0_61 = arith.constant 0 : index
    %c6 = arith.constant 6 : index
    %210 = vector.load %arg1[%c0_61, %c6] : memref<8x144xf32, #tpu.memory_space<vmem>>, vector<8x1xf32>
    %c241_i32_62 = arith.constant 241 : i32
    %211 = tpu.dynamic_rotate %174 by %c241_i32_62 dim 1 : vector<8x256xf32>, i32 -> vector<8x256xf32>
    %212 = arith.mulf %211, %7 : vector<8x256xf32>
    %213 = arith.mulf %212, %19 : vector<8x256xf32>
    %214 = vector.broadcast %210 : vector<8x1xf32> to vector<8x256xf32>
    %215 = arith.mulf %214, %213 : vector<8x256xf32>
    %216 = arith.addf %209, %215 : vector<8x256xf32>
    %c0_63 = arith.constant 0 : index
    %c7 = arith.constant 7 : index
    %217 = vector.load %arg1[%c0_63, %c7] : memref<8x144xf32, #tpu.memory_space<vmem>>, vector<8x1xf32>
    %c240_i32_64 = arith.constant 240 : i32
    %218 = tpu.dynamic_rotate %174 by %c240_i32_64 dim 1 : vector<8x256xf32>, i32 -> vector<8x256xf32>
    %219 = arith.mulf %218, %7 : vector<8x256xf32>
    %220 = vector.broadcast %217 : vector<8x1xf32> to vector<8x256xf32>
    %221 = arith.mulf %220, %219 : vector<8x256xf32>
    %222 = arith.addf %216, %221 : vector<8x256xf32>
    %c0_65 = arith.constant 0 : index
    %c8 = arith.constant 8 : index
    %223 = vector.load %arg1[%c0_65, %c8] : memref<8x144xf32, #tpu.memory_space<vmem>>, vector<8x1xf32>
    %c239_i32_66 = arith.constant 239 : i32
    %224 = tpu.dynamic_rotate %174 by %c239_i32_66 dim 1 : vector<8x256xf32>, i32 -> vector<8x256xf32>
    %225 = arith.mulf %224, %7 : vector<8x256xf32>
    %226 = arith.mulf %225, %15 : vector<8x256xf32>
    %227 = vector.broadcast %223 : vector<8x1xf32> to vector<8x256xf32>
    %228 = arith.mulf %227, %226 : vector<8x256xf32>
    %229 = arith.addf %222, %228 : vector<8x256xf32>
    %c3_i32 = arith.constant 3 : i32
    %230 = tpu.dynamic_rotate %229 by %c3_i32 dim 0 : vector<8x256xf32>, i32 -> vector<8x256xf32>
    %c0_67 = arith.constant 0 : index
    %c9 = arith.constant 9 : index
    %231 = vector.load %arg1[%c0_67, %c9] : memref<8x144xf32, #tpu.memory_space<vmem>>, vector<8x1xf32>
    %232 = vector.broadcast %231 : vector<8x1xf32> to vector<8x256xf32>
    %233 = arith.mulf %232, %230 : vector<8x256xf32>
    %c2_i32_68 = arith.constant 2 : i32
    %234 = tpu.dynamic_rotate %229 by %c2_i32_68 dim 0 : vector<8x256xf32>, i32 -> vector<8x256xf32>
    %c0_69 = arith.constant 0 : index
    %c10 = arith.constant 10 : index
    %235 = vector.load %arg1[%c0_69, %c10] : memref<8x144xf32, #tpu.memory_space<vmem>>, vector<8x1xf32>
    %236 = vector.broadcast %235 : vector<8x1xf32> to vector<8x256xf32>
    %237 = arith.mulf %236, %234 : vector<8x256xf32>
    %238 = arith.addf %233, %237 : vector<8x256xf32>
    %c1_i32_70 = arith.constant 1 : i32
    %239 = tpu.dynamic_rotate %229 by %c1_i32_70 dim 0 : vector<8x256xf32>, i32 -> vector<8x256xf32>
    %c0_71 = arith.constant 0 : index
    %c11 = arith.constant 11 : index
    %240 = vector.load %arg1[%c0_71, %c11] : memref<8x144xf32, #tpu.memory_space<vmem>>, vector<8x1xf32>
    %241 = vector.broadcast %240 : vector<8x1xf32> to vector<8x256xf32>
    %242 = arith.mulf %241, %239 : vector<8x256xf32>
    %243 = arith.addf %238, %242 : vector<8x256xf32>
    %c0_72 = arith.constant 0 : index
    %c12 = arith.constant 12 : index
    %244 = vector.load %arg1[%c0_72, %c12] : memref<8x144xf32, #tpu.memory_space<vmem>>, vector<8x1xf32>
    %245 = vector.broadcast %244 : vector<8x1xf32> to vector<8x256xf32>
    %246 = arith.mulf %245, %229 : vector<8x256xf32>
    %247 = arith.addf %243, %246 : vector<8x256xf32>
    %c7_i32 = arith.constant 7 : i32
    %248 = tpu.dynamic_rotate %229 by %c7_i32 dim 0 : vector<8x256xf32>, i32 -> vector<8x256xf32>
    %c0_73 = arith.constant 0 : index
    %c13 = arith.constant 13 : index
    %249 = vector.load %arg1[%c0_73, %c13] : memref<8x144xf32, #tpu.memory_space<vmem>>, vector<8x1xf32>
    %250 = vector.broadcast %249 : vector<8x1xf32> to vector<8x256xf32>
    %251 = arith.mulf %250, %248 : vector<8x256xf32>
    %252 = arith.addf %247, %251 : vector<8x256xf32>
    %c6_i32 = arith.constant 6 : i32
    %253 = tpu.dynamic_rotate %229 by %c6_i32 dim 0 : vector<8x256xf32>, i32 -> vector<8x256xf32>
    %c0_74 = arith.constant 0 : index
    %c14 = arith.constant 14 : index
    %254 = vector.load %arg1[%c0_74, %c14] : memref<8x144xf32, #tpu.memory_space<vmem>>, vector<8x1xf32>
    %255 = vector.broadcast %254 : vector<8x1xf32> to vector<8x256xf32>
    %256 = arith.mulf %255, %253 : vector<8x256xf32>
    %257 = arith.addf %252, %256 : vector<8x256xf32>
    %c5_i32 = arith.constant 5 : i32
    %258 = tpu.dynamic_rotate %229 by %c5_i32 dim 0 : vector<8x256xf32>, i32 -> vector<8x256xf32>
    %c0_75 = arith.constant 0 : index
    %c15 = arith.constant 15 : index
    %259 = vector.load %arg1[%c0_75, %c15] : memref<8x144xf32, #tpu.memory_space<vmem>>, vector<8x1xf32>
    %260 = vector.broadcast %259 : vector<8x1xf32> to vector<8x256xf32>
    %261 = arith.mulf %260, %258 : vector<8x256xf32>
    %262 = arith.addf %257, %261 : vector<8x256xf32>
    %cst_76 = arith.constant 0.000000e+00 : f32
    %263 = vector.broadcast %cst_76 : f32 to vector<8x256xf32>
    %264 = arith.maximumf %262, %263 : vector<8x256xf32>
    %c0_77 = arith.constant 0 : index
    %c16 = arith.constant 16 : index
    %265 = vector.load %arg1[%c0_77, %c16] : memref<8x144xf32, #tpu.memory_space<vmem>>, vector<8x1xf32>
    %c17_i32_78 = arith.constant 17 : i32
    %266 = tpu.dynamic_rotate %264 by %c17_i32_78 dim 1 : vector<8x256xf32>, i32 -> vector<8x256xf32>
    %267 = arith.mulf %266, %11 : vector<8x256xf32>
    %268 = arith.mulf %267, %19 : vector<8x256xf32>
    %269 = vector.broadcast %265 : vector<8x1xf32> to vector<8x256xf32>
    %270 = arith.mulf %269, %268 : vector<8x256xf32>
    %c0_79 = arith.constant 0 : index
    %c17 = arith.constant 17 : index
    %271 = vector.load %arg1[%c0_79, %c17] : memref<8x144xf32, #tpu.memory_space<vmem>>, vector<8x1xf32>
    %c16_i32_80 = arith.constant 16 : i32
    %272 = tpu.dynamic_rotate %264 by %c16_i32_80 dim 1 : vector<8x256xf32>, i32 -> vector<8x256xf32>
    %273 = arith.mulf %272, %11 : vector<8x256xf32>
    %274 = vector.broadcast %271 : vector<8x1xf32> to vector<8x256xf32>
    %275 = arith.mulf %274, %273 : vector<8x256xf32>
    %276 = arith.addf %270, %275 : vector<8x256xf32>
    %c0_81 = arith.constant 0 : index
    %c18 = arith.constant 18 : index
    %277 = vector.load %arg1[%c0_81, %c18] : memref<8x144xf32, #tpu.memory_space<vmem>>, vector<8x1xf32>
    %c15_i32_82 = arith.constant 15 : i32
    %278 = tpu.dynamic_rotate %264 by %c15_i32_82 dim 1 : vector<8x256xf32>, i32 -> vector<8x256xf32>
    %279 = arith.mulf %278, %11 : vector<8x256xf32>
    %280 = arith.mulf %279, %15 : vector<8x256xf32>
    %281 = vector.broadcast %277 : vector<8x1xf32> to vector<8x256xf32>
    %282 = arith.mulf %281, %280 : vector<8x256xf32>
    %283 = arith.addf %276, %282 : vector<8x256xf32>
    %c0_83 = arith.constant 0 : index
    %c19 = arith.constant 19 : index
    %284 = vector.load %arg1[%c0_83, %c19] : memref<8x144xf32, #tpu.memory_space<vmem>>, vector<8x1xf32>
    %c1_i32_84 = arith.constant 1 : i32
    %285 = tpu.dynamic_rotate %264 by %c1_i32_84 dim 1 : vector<8x256xf32>, i32 -> vector<8x256xf32>
    %286 = arith.mulf %285, %19 : vector<8x256xf32>
    %287 = vector.broadcast %284 : vector<8x1xf32> to vector<8x256xf32>
    %288 = arith.mulf %287, %286 : vector<8x256xf32>
    %289 = arith.addf %283, %288 : vector<8x256xf32>
    %c0_85 = arith.constant 0 : index
    %c20 = arith.constant 20 : index
    %290 = vector.load %arg1[%c0_85, %c20] : memref<8x144xf32, #tpu.memory_space<vmem>>, vector<8x1xf32>
    %291 = vector.broadcast %290 : vector<8x1xf32> to vector<8x256xf32>
    %292 = arith.mulf %291, %264 : vector<8x256xf32>
    %293 = arith.addf %289, %292 : vector<8x256xf32>
    %c0_86 = arith.constant 0 : index
    %c21 = arith.constant 21 : index
    %294 = vector.load %arg1[%c0_86, %c21] : memref<8x144xf32, #tpu.memory_space<vmem>>, vector<8x1xf32>
    %c255_i32_87 = arith.constant 255 : i32
    %295 = tpu.dynamic_rotate %264 by %c255_i32_87 dim 1 : vector<8x256xf32>, i32 -> vector<8x256xf32>
    %296 = arith.mulf %295, %15 : vector<8x256xf32>
    %297 = vector.broadcast %294 : vector<8x1xf32> to vector<8x256xf32>
    %298 = arith.mulf %297, %296 : vector<8x256xf32>
    %299 = arith.addf %293, %298 : vector<8x256xf32>
    %c0_88 = arith.constant 0 : index
    %c22 = arith.constant 22 : index
    %300 = vector.load %arg1[%c0_88, %c22] : memref<8x144xf32, #tpu.memory_space<vmem>>, vector<8x1xf32>
    %c241_i32_89 = arith.constant 241 : i32
    %301 = tpu.dynamic_rotate %264 by %c241_i32_89 dim 1 : vector<8x256xf32>, i32 -> vector<8x256xf32>
    %302 = arith.mulf %301, %7 : vector<8x256xf32>
    %303 = arith.mulf %302, %19 : vector<8x256xf32>
    %304 = vector.broadcast %300 : vector<8x1xf32> to vector<8x256xf32>
    %305 = arith.mulf %304, %303 : vector<8x256xf32>
    %306 = arith.addf %299, %305 : vector<8x256xf32>
    %c0_90 = arith.constant 0 : index
    %c23 = arith.constant 23 : index
    %307 = vector.load %arg1[%c0_90, %c23] : memref<8x144xf32, #tpu.memory_space<vmem>>, vector<8x1xf32>
    %c240_i32_91 = arith.constant 240 : i32
    %308 = tpu.dynamic_rotate %264 by %c240_i32_91 dim 1 : vector<8x256xf32>, i32 -> vector<8x256xf32>
    %309 = arith.mulf %308, %7 : vector<8x256xf32>
    %310 = vector.broadcast %307 : vector<8x1xf32> to vector<8x256xf32>
    %311 = arith.mulf %310, %309 : vector<8x256xf32>
    %312 = arith.addf %306, %311 : vector<8x256xf32>
    %c0_92 = arith.constant 0 : index
    %c24 = arith.constant 24 : index
    %313 = vector.load %arg1[%c0_92, %c24] : memref<8x144xf32, #tpu.memory_space<vmem>>, vector<8x1xf32>
    %c239_i32_93 = arith.constant 239 : i32
    %314 = tpu.dynamic_rotate %264 by %c239_i32_93 dim 1 : vector<8x256xf32>, i32 -> vector<8x256xf32>
    %315 = arith.mulf %314, %7 : vector<8x256xf32>
    %316 = arith.mulf %315, %15 : vector<8x256xf32>
    %317 = vector.broadcast %313 : vector<8x1xf32> to vector<8x256xf32>
    %318 = arith.mulf %317, %316 : vector<8x256xf32>
    %319 = arith.addf %312, %318 : vector<8x256xf32>
    %c3_i32_94 = arith.constant 3 : i32
    %320 = tpu.dynamic_rotate %319 by %c3_i32_94 dim 0 : vector<8x256xf32>, i32 -> vector<8x256xf32>
    %c0_95 = arith.constant 0 : index
    %c25 = arith.constant 25 : index
    %321 = vector.load %arg1[%c0_95, %c25] : memref<8x144xf32, #tpu.memory_space<vmem>>, vector<8x1xf32>
    %322 = vector.broadcast %321 : vector<8x1xf32> to vector<8x256xf32>
    %323 = arith.mulf %322, %320 : vector<8x256xf32>
    %c2_i32_96 = arith.constant 2 : i32
    %324 = tpu.dynamic_rotate %319 by %c2_i32_96 dim 0 : vector<8x256xf32>, i32 -> vector<8x256xf32>
    %c0_97 = arith.constant 0 : index
    %c26 = arith.constant 26 : index
    %325 = vector.load %arg1[%c0_97, %c26] : memref<8x144xf32, #tpu.memory_space<vmem>>, vector<8x1xf32>
    %326 = vector.broadcast %325 : vector<8x1xf32> to vector<8x256xf32>
    %327 = arith.mulf %326, %324 : vector<8x256xf32>
    %328 = arith.addf %323, %327 : vector<8x256xf32>
    %c1_i32_98 = arith.constant 1 : i32
    %329 = tpu.dynamic_rotate %319 by %c1_i32_98 dim 0 : vector<8x256xf32>, i32 -> vector<8x256xf32>
    %c0_99 = arith.constant 0 : index
    %c27 = arith.constant 27 : index
    %330 = vector.load %arg1[%c0_99, %c27] : memref<8x144xf32, #tpu.memory_space<vmem>>, vector<8x1xf32>
    %331 = vector.broadcast %330 : vector<8x1xf32> to vector<8x256xf32>
    %332 = arith.mulf %331, %329 : vector<8x256xf32>
    %333 = arith.addf %328, %332 : vector<8x256xf32>
    %c0_100 = arith.constant 0 : index
    %c28 = arith.constant 28 : index
    %334 = vector.load %arg1[%c0_100, %c28] : memref<8x144xf32, #tpu.memory_space<vmem>>, vector<8x1xf32>
    %335 = vector.broadcast %334 : vector<8x1xf32> to vector<8x256xf32>
    %336 = arith.mulf %335, %319 : vector<8x256xf32>
    %337 = arith.addf %333, %336 : vector<8x256xf32>
    %c7_i32_101 = arith.constant 7 : i32
    %338 = tpu.dynamic_rotate %319 by %c7_i32_101 dim 0 : vector<8x256xf32>, i32 -> vector<8x256xf32>
    %c0_102 = arith.constant 0 : index
    %c29 = arith.constant 29 : index
    %339 = vector.load %arg1[%c0_102, %c29] : memref<8x144xf32, #tpu.memory_space<vmem>>, vector<8x1xf32>
    %340 = vector.broadcast %339 : vector<8x1xf32> to vector<8x256xf32>
    %341 = arith.mulf %340, %338 : vector<8x256xf32>
    %342 = arith.addf %337, %341 : vector<8x256xf32>
    %c6_i32_103 = arith.constant 6 : i32
    %343 = tpu.dynamic_rotate %319 by %c6_i32_103 dim 0 : vector<8x256xf32>, i32 -> vector<8x256xf32>
    %c0_104 = arith.constant 0 : index
    %c30 = arith.constant 30 : index
    %344 = vector.load %arg1[%c0_104, %c30] : memref<8x144xf32, #tpu.memory_space<vmem>>, vector<8x1xf32>
    %345 = vector.broadcast %344 : vector<8x1xf32> to vector<8x256xf32>
    %346 = arith.mulf %345, %343 : vector<8x256xf32>
    %347 = arith.addf %342, %346 : vector<8x256xf32>
    %c5_i32_105 = arith.constant 5 : i32
    %348 = tpu.dynamic_rotate %319 by %c5_i32_105 dim 0 : vector<8x256xf32>, i32 -> vector<8x256xf32>
    %c0_106 = arith.constant 0 : index
    %c31 = arith.constant 31 : index
    %349 = vector.load %arg1[%c0_106, %c31] : memref<8x144xf32, #tpu.memory_space<vmem>>, vector<8x1xf32>
    %350 = vector.broadcast %349 : vector<8x1xf32> to vector<8x256xf32>
    %351 = arith.mulf %350, %348 : vector<8x256xf32>
    %352 = arith.addf %347, %351 : vector<8x256xf32>
    %353 = arith.addf %172, %352 : vector<8x256xf32>
    %c0_107 = arith.constant 0 : index
    %c32 = arith.constant 32 : index
    %354 = vector.load %arg1[%c0_107, %c32] : memref<8x144xf32, #tpu.memory_space<vmem>>, vector<8x1xf32>
    %c34_i32 = arith.constant 34 : i32
    %355 = tpu.dynamic_rotate %174 by %c34_i32 dim 1 : vector<8x256xf32>, i32 -> vector<8x256xf32>
    %356 = arith.mulf %355, %27 : vector<8x256xf32>
    %357 = arith.mulf %356, %35 : vector<8x256xf32>
    %358 = vector.broadcast %354 : vector<8x1xf32> to vector<8x256xf32>
    %359 = arith.mulf %358, %357 : vector<8x256xf32>
    %c0_108 = arith.constant 0 : index
    %c33 = arith.constant 33 : index
    %360 = vector.load %arg1[%c0_108, %c33] : memref<8x144xf32, #tpu.memory_space<vmem>>, vector<8x1xf32>
    %c33_i32 = arith.constant 33 : i32
    %361 = tpu.dynamic_rotate %174 by %c33_i32 dim 1 : vector<8x256xf32>, i32 -> vector<8x256xf32>
    %362 = arith.mulf %361, %27 : vector<8x256xf32>
    %363 = arith.mulf %362, %19 : vector<8x256xf32>
    %364 = vector.broadcast %360 : vector<8x1xf32> to vector<8x256xf32>
    %365 = arith.mulf %364, %363 : vector<8x256xf32>
    %366 = arith.addf %359, %365 : vector<8x256xf32>
    %c0_109 = arith.constant 0 : index
    %c34 = arith.constant 34 : index
    %367 = vector.load %arg1[%c0_109, %c34] : memref<8x144xf32, #tpu.memory_space<vmem>>, vector<8x1xf32>
    %c32_i32_110 = arith.constant 32 : i32
    %368 = tpu.dynamic_rotate %174 by %c32_i32_110 dim 1 : vector<8x256xf32>, i32 -> vector<8x256xf32>
    %369 = arith.mulf %368, %27 : vector<8x256xf32>
    %370 = vector.broadcast %367 : vector<8x1xf32> to vector<8x256xf32>
    %371 = arith.mulf %370, %369 : vector<8x256xf32>
    %372 = arith.addf %366, %371 : vector<8x256xf32>
    %c0_111 = arith.constant 0 : index
    %c35 = arith.constant 35 : index
    %373 = vector.load %arg1[%c0_111, %c35] : memref<8x144xf32, #tpu.memory_space<vmem>>, vector<8x1xf32>
    %c31_i32 = arith.constant 31 : i32
    %374 = tpu.dynamic_rotate %174 by %c31_i32 dim 1 : vector<8x256xf32>, i32 -> vector<8x256xf32>
    %375 = arith.mulf %374, %27 : vector<8x256xf32>
    %376 = arith.mulf %375, %15 : vector<8x256xf32>
    %377 = vector.broadcast %373 : vector<8x1xf32> to vector<8x256xf32>
    %378 = arith.mulf %377, %376 : vector<8x256xf32>
    %379 = arith.addf %372, %378 : vector<8x256xf32>
    %c0_112 = arith.constant 0 : index
    %c36 = arith.constant 36 : index
    %380 = vector.load %arg1[%c0_112, %c36] : memref<8x144xf32, #tpu.memory_space<vmem>>, vector<8x1xf32>
    %c30_i32 = arith.constant 30 : i32
    %381 = tpu.dynamic_rotate %174 by %c30_i32 dim 1 : vector<8x256xf32>, i32 -> vector<8x256xf32>
    %382 = arith.mulf %381, %27 : vector<8x256xf32>
    %383 = arith.mulf %382, %31 : vector<8x256xf32>
    %384 = vector.broadcast %380 : vector<8x1xf32> to vector<8x256xf32>
    %385 = arith.mulf %384, %383 : vector<8x256xf32>
    %386 = arith.addf %379, %385 : vector<8x256xf32>
    %c0_113 = arith.constant 0 : index
    %c37 = arith.constant 37 : index
    %387 = vector.load %arg1[%c0_113, %c37] : memref<8x144xf32, #tpu.memory_space<vmem>>, vector<8x1xf32>
    %c18_i32 = arith.constant 18 : i32
    %388 = tpu.dynamic_rotate %174 by %c18_i32 dim 1 : vector<8x256xf32>, i32 -> vector<8x256xf32>
    %389 = arith.mulf %388, %11 : vector<8x256xf32>
    %390 = arith.mulf %389, %35 : vector<8x256xf32>
    %391 = vector.broadcast %387 : vector<8x1xf32> to vector<8x256xf32>
    %392 = arith.mulf %391, %390 : vector<8x256xf32>
    %393 = arith.addf %386, %392 : vector<8x256xf32>
    %c0_114 = arith.constant 0 : index
    %c38 = arith.constant 38 : index
    %394 = vector.load %arg1[%c0_114, %c38] : memref<8x144xf32, #tpu.memory_space<vmem>>, vector<8x1xf32>
    %c17_i32_115 = arith.constant 17 : i32
    %395 = tpu.dynamic_rotate %174 by %c17_i32_115 dim 1 : vector<8x256xf32>, i32 -> vector<8x256xf32>
    %396 = arith.mulf %395, %11 : vector<8x256xf32>
    %397 = arith.mulf %396, %19 : vector<8x256xf32>
    %398 = vector.broadcast %394 : vector<8x1xf32> to vector<8x256xf32>
    %399 = arith.mulf %398, %397 : vector<8x256xf32>
    %400 = arith.addf %393, %399 : vector<8x256xf32>
    %c0_116 = arith.constant 0 : index
    %c39 = arith.constant 39 : index
    %401 = vector.load %arg1[%c0_116, %c39] : memref<8x144xf32, #tpu.memory_space<vmem>>, vector<8x1xf32>
    %c16_i32_117 = arith.constant 16 : i32
    %402 = tpu.dynamic_rotate %174 by %c16_i32_117 dim 1 : vector<8x256xf32>, i32 -> vector<8x256xf32>
    %403 = arith.mulf %402, %11 : vector<8x256xf32>
    %404 = vector.broadcast %401 : vector<8x1xf32> to vector<8x256xf32>
    %405 = arith.mulf %404, %403 : vector<8x256xf32>
    %406 = arith.addf %400, %405 : vector<8x256xf32>
    %c0_118 = arith.constant 0 : index
    %c40 = arith.constant 40 : index
    %407 = vector.load %arg1[%c0_118, %c40] : memref<8x144xf32, #tpu.memory_space<vmem>>, vector<8x1xf32>
    %c15_i32_119 = arith.constant 15 : i32
    %408 = tpu.dynamic_rotate %174 by %c15_i32_119 dim 1 : vector<8x256xf32>, i32 -> vector<8x256xf32>
    %409 = arith.mulf %408, %11 : vector<8x256xf32>
    %410 = arith.mulf %409, %15 : vector<8x256xf32>
    %411 = vector.broadcast %407 : vector<8x1xf32> to vector<8x256xf32>
    %412 = arith.mulf %411, %410 : vector<8x256xf32>
    %413 = arith.addf %406, %412 : vector<8x256xf32>
    %c0_120 = arith.constant 0 : index
    %c41 = arith.constant 41 : index
    %414 = vector.load %arg1[%c0_120, %c41] : memref<8x144xf32, #tpu.memory_space<vmem>>, vector<8x1xf32>
    %c14_i32_121 = arith.constant 14 : i32
    %415 = tpu.dynamic_rotate %174 by %c14_i32_121 dim 1 : vector<8x256xf32>, i32 -> vector<8x256xf32>
    %416 = arith.mulf %415, %11 : vector<8x256xf32>
    %417 = arith.mulf %416, %31 : vector<8x256xf32>
    %418 = vector.broadcast %414 : vector<8x1xf32> to vector<8x256xf32>
    %419 = arith.mulf %418, %417 : vector<8x256xf32>
    %420 = arith.addf %413, %419 : vector<8x256xf32>
    %c0_122 = arith.constant 0 : index
    %c42 = arith.constant 42 : index
    %421 = vector.load %arg1[%c0_122, %c42] : memref<8x144xf32, #tpu.memory_space<vmem>>, vector<8x1xf32>
    %c2_i32_123 = arith.constant 2 : i32
    %422 = tpu.dynamic_rotate %174 by %c2_i32_123 dim 1 : vector<8x256xf32>, i32 -> vector<8x256xf32>
    %423 = arith.mulf %422, %35 : vector<8x256xf32>
    %424 = vector.broadcast %421 : vector<8x1xf32> to vector<8x256xf32>
    %425 = arith.mulf %424, %423 : vector<8x256xf32>
    %426 = arith.addf %420, %425 : vector<8x256xf32>
    %c0_124 = arith.constant 0 : index
    %c43 = arith.constant 43 : index
    %427 = vector.load %arg1[%c0_124, %c43] : memref<8x144xf32, #tpu.memory_space<vmem>>, vector<8x1xf32>
    %c1_i32_125 = arith.constant 1 : i32
    %428 = tpu.dynamic_rotate %174 by %c1_i32_125 dim 1 : vector<8x256xf32>, i32 -> vector<8x256xf32>
    %429 = arith.mulf %428, %19 : vector<8x256xf32>
    %430 = vector.broadcast %427 : vector<8x1xf32> to vector<8x256xf32>
    %431 = arith.mulf %430, %429 : vector<8x256xf32>
    %432 = arith.addf %426, %431 : vector<8x256xf32>
    %c0_126 = arith.constant 0 : index
    %c44 = arith.constant 44 : index
    %433 = vector.load %arg1[%c0_126, %c44] : memref<8x144xf32, #tpu.memory_space<vmem>>, vector<8x1xf32>
    %434 = vector.broadcast %433 : vector<8x1xf32> to vector<8x256xf32>
    %435 = arith.mulf %434, %174 : vector<8x256xf32>
    %436 = arith.addf %432, %435 : vector<8x256xf32>
    %c0_127 = arith.constant 0 : index
    %c45 = arith.constant 45 : index
    %437 = vector.load %arg1[%c0_127, %c45] : memref<8x144xf32, #tpu.memory_space<vmem>>, vector<8x1xf32>
    %c255_i32_128 = arith.constant 255 : i32
    %438 = tpu.dynamic_rotate %174 by %c255_i32_128 dim 1 : vector<8x256xf32>, i32 -> vector<8x256xf32>
    %439 = arith.mulf %438, %15 : vector<8x256xf32>
    %440 = vector.broadcast %437 : vector<8x1xf32> to vector<8x256xf32>
    %441 = arith.mulf %440, %439 : vector<8x256xf32>
    %442 = arith.addf %436, %441 : vector<8x256xf32>
    %c0_129 = arith.constant 0 : index
    %c46 = arith.constant 46 : index
    %443 = vector.load %arg1[%c0_129, %c46] : memref<8x144xf32, #tpu.memory_space<vmem>>, vector<8x1xf32>
    %c254_i32 = arith.constant 254 : i32
    %444 = tpu.dynamic_rotate %174 by %c254_i32 dim 1 : vector<8x256xf32>, i32 -> vector<8x256xf32>
    %445 = arith.mulf %444, %31 : vector<8x256xf32>
    %446 = vector.broadcast %443 : vector<8x1xf32> to vector<8x256xf32>
    %447 = arith.mulf %446, %445 : vector<8x256xf32>
    %448 = arith.addf %442, %447 : vector<8x256xf32>
    %c0_130 = arith.constant 0 : index
    %c47 = arith.constant 47 : index
    %449 = vector.load %arg1[%c0_130, %c47] : memref<8x144xf32, #tpu.memory_space<vmem>>, vector<8x1xf32>
    %c242_i32 = arith.constant 242 : i32
    %450 = tpu.dynamic_rotate %174 by %c242_i32 dim 1 : vector<8x256xf32>, i32 -> vector<8x256xf32>
    %451 = arith.mulf %450, %7 : vector<8x256xf32>
    %452 = arith.mulf %451, %35 : vector<8x256xf32>
    %453 = vector.broadcast %449 : vector<8x1xf32> to vector<8x256xf32>
    %454 = arith.mulf %453, %452 : vector<8x256xf32>
    %455 = arith.addf %448, %454 : vector<8x256xf32>
    %c0_131 = arith.constant 0 : index
    %c48 = arith.constant 48 : index
    %456 = vector.load %arg1[%c0_131, %c48] : memref<8x144xf32, #tpu.memory_space<vmem>>, vector<8x1xf32>
    %c241_i32_132 = arith.constant 241 : i32
    %457 = tpu.dynamic_rotate %174 by %c241_i32_132 dim 1 : vector<8x256xf32>, i32 -> vector<8x256xf32>
    %458 = arith.mulf %457, %7 : vector<8x256xf32>
    %459 = arith.mulf %458, %19 : vector<8x256xf32>
    %460 = vector.broadcast %456 : vector<8x1xf32> to vector<8x256xf32>
    %461 = arith.mulf %460, %459 : vector<8x256xf32>
    %462 = arith.addf %455, %461 : vector<8x256xf32>
    %c0_133 = arith.constant 0 : index
    %c49 = arith.constant 49 : index
    %463 = vector.load %arg1[%c0_133, %c49] : memref<8x144xf32, #tpu.memory_space<vmem>>, vector<8x1xf32>
    %c240_i32_134 = arith.constant 240 : i32
    %464 = tpu.dynamic_rotate %174 by %c240_i32_134 dim 1 : vector<8x256xf32>, i32 -> vector<8x256xf32>
    %465 = arith.mulf %464, %7 : vector<8x256xf32>
    %466 = vector.broadcast %463 : vector<8x1xf32> to vector<8x256xf32>
    %467 = arith.mulf %466, %465 : vector<8x256xf32>
    %468 = arith.addf %462, %467 : vector<8x256xf32>
    %c0_135 = arith.constant 0 : index
    %c50 = arith.constant 50 : index
    %469 = vector.load %arg1[%c0_135, %c50] : memref<8x144xf32, #tpu.memory_space<vmem>>, vector<8x1xf32>
    %c239_i32_136 = arith.constant 239 : i32
    %470 = tpu.dynamic_rotate %174 by %c239_i32_136 dim 1 : vector<8x256xf32>, i32 -> vector<8x256xf32>
    %471 = arith.mulf %470, %7 : vector<8x256xf32>
    %472 = arith.mulf %471, %15 : vector<8x256xf32>
    %473 = vector.broadcast %469 : vector<8x1xf32> to vector<8x256xf32>
    %474 = arith.mulf %473, %472 : vector<8x256xf32>
    %475 = arith.addf %468, %474 : vector<8x256xf32>
    %c0_137 = arith.constant 0 : index
    %c51 = arith.constant 51 : index
    %476 = vector.load %arg1[%c0_137, %c51] : memref<8x144xf32, #tpu.memory_space<vmem>>, vector<8x1xf32>
    %c238_i32 = arith.constant 238 : i32
    %477 = tpu.dynamic_rotate %174 by %c238_i32 dim 1 : vector<8x256xf32>, i32 -> vector<8x256xf32>
    %478 = arith.mulf %477, %7 : vector<8x256xf32>
    %479 = arith.mulf %478, %31 : vector<8x256xf32>
    %480 = vector.broadcast %476 : vector<8x1xf32> to vector<8x256xf32>
    %481 = arith.mulf %480, %479 : vector<8x256xf32>
    %482 = arith.addf %475, %481 : vector<8x256xf32>
    %c0_138 = arith.constant 0 : index
    %c52 = arith.constant 52 : index
    %483 = vector.load %arg1[%c0_138, %c52] : memref<8x144xf32, #tpu.memory_space<vmem>>, vector<8x1xf32>
    %c226_i32 = arith.constant 226 : i32
    %484 = tpu.dynamic_rotate %174 by %c226_i32 dim 1 : vector<8x256xf32>, i32 -> vector<8x256xf32>
    %485 = arith.mulf %484, %23 : vector<8x256xf32>
    %486 = arith.mulf %485, %35 : vector<8x256xf32>
    %487 = vector.broadcast %483 : vector<8x1xf32> to vector<8x256xf32>
    %488 = arith.mulf %487, %486 : vector<8x256xf32>
    %489 = arith.addf %482, %488 : vector<8x256xf32>
    %c0_139 = arith.constant 0 : index
    %c53 = arith.constant 53 : index
    %490 = vector.load %arg1[%c0_139, %c53] : memref<8x144xf32, #tpu.memory_space<vmem>>, vector<8x1xf32>
    %c225_i32 = arith.constant 225 : i32
    %491 = tpu.dynamic_rotate %174 by %c225_i32 dim 1 : vector<8x256xf32>, i32 -> vector<8x256xf32>
    %492 = arith.mulf %491, %23 : vector<8x256xf32>
    %493 = arith.mulf %492, %19 : vector<8x256xf32>
    %494 = vector.broadcast %490 : vector<8x1xf32> to vector<8x256xf32>
    %495 = arith.mulf %494, %493 : vector<8x256xf32>
    %496 = arith.addf %489, %495 : vector<8x256xf32>
    %c0_140 = arith.constant 0 : index
    %c54 = arith.constant 54 : index
    %497 = vector.load %arg1[%c0_140, %c54] : memref<8x144xf32, #tpu.memory_space<vmem>>, vector<8x1xf32>
    %c224_i32_141 = arith.constant 224 : i32
    %498 = tpu.dynamic_rotate %174 by %c224_i32_141 dim 1 : vector<8x256xf32>, i32 -> vector<8x256xf32>
    %499 = arith.mulf %498, %23 : vector<8x256xf32>
    %500 = vector.broadcast %497 : vector<8x1xf32> to vector<8x256xf32>
    %501 = arith.mulf %500, %499 : vector<8x256xf32>
    %502 = arith.addf %496, %501 : vector<8x256xf32>
    %c0_142 = arith.constant 0 : index
    %c55 = arith.constant 55 : index
    %503 = vector.load %arg1[%c0_142, %c55] : memref<8x144xf32, #tpu.memory_space<vmem>>, vector<8x1xf32>
    %c223_i32 = arith.constant 223 : i32
    %504 = tpu.dynamic_rotate %174 by %c223_i32 dim 1 : vector<8x256xf32>, i32 -> vector<8x256xf32>
    %505 = arith.mulf %504, %23 : vector<8x256xf32>
    %506 = arith.mulf %505, %15 : vector<8x256xf32>
    %507 = vector.broadcast %503 : vector<8x1xf32> to vector<8x256xf32>
    %508 = arith.mulf %507, %506 : vector<8x256xf32>
    %509 = arith.addf %502, %508 : vector<8x256xf32>
    %c0_143 = arith.constant 0 : index
    %c56 = arith.constant 56 : index
    %510 = vector.load %arg1[%c0_143, %c56] : memref<8x144xf32, #tpu.memory_space<vmem>>, vector<8x1xf32>
    %c222_i32 = arith.constant 222 : i32
    %511 = tpu.dynamic_rotate %174 by %c222_i32 dim 1 : vector<8x256xf32>, i32 -> vector<8x256xf32>
    %512 = arith.mulf %511, %23 : vector<8x256xf32>
    %513 = arith.mulf %512, %31 : vector<8x256xf32>
    %514 = vector.broadcast %510 : vector<8x1xf32> to vector<8x256xf32>
    %515 = arith.mulf %514, %513 : vector<8x256xf32>
    %516 = arith.addf %509, %515 : vector<8x256xf32>
    %c3_i32_144 = arith.constant 3 : i32
    %517 = tpu.dynamic_rotate %516 by %c3_i32_144 dim 0 : vector<8x256xf32>, i32 -> vector<8x256xf32>
    %c0_145 = arith.constant 0 : index
    %c57 = arith.constant 57 : index
    %518 = vector.load %arg1[%c0_145, %c57] : memref<8x144xf32, #tpu.memory_space<vmem>>, vector<8x1xf32>
    %519 = vector.broadcast %518 : vector<8x1xf32> to vector<8x256xf32>
    %520 = arith.mulf %519, %517 : vector<8x256xf32>
    %c2_i32_146 = arith.constant 2 : i32
    %521 = tpu.dynamic_rotate %516 by %c2_i32_146 dim 0 : vector<8x256xf32>, i32 -> vector<8x256xf32>
    %c0_147 = arith.constant 0 : index
    %c58 = arith.constant 58 : index
    %522 = vector.load %arg1[%c0_147, %c58] : memref<8x144xf32, #tpu.memory_space<vmem>>, vector<8x1xf32>
    %523 = vector.broadcast %522 : vector<8x1xf32> to vector<8x256xf32>
    %524 = arith.mulf %523, %521 : vector<8x256xf32>
    %525 = arith.addf %520, %524 : vector<8x256xf32>
    %c1_i32_148 = arith.constant 1 : i32
    %526 = tpu.dynamic_rotate %516 by %c1_i32_148 dim 0 : vector<8x256xf32>, i32 -> vector<8x256xf32>
    %c0_149 = arith.constant 0 : index
    %c59 = arith.constant 59 : index
    %527 = vector.load %arg1[%c0_149, %c59] : memref<8x144xf32, #tpu.memory_space<vmem>>, vector<8x1xf32>
    %528 = vector.broadcast %527 : vector<8x1xf32> to vector<8x256xf32>
    %529 = arith.mulf %528, %526 : vector<8x256xf32>
    %530 = arith.addf %525, %529 : vector<8x256xf32>
    %c0_150 = arith.constant 0 : index
    %c60 = arith.constant 60 : index
    %531 = vector.load %arg1[%c0_150, %c60] : memref<8x144xf32, #tpu.memory_space<vmem>>, vector<8x1xf32>
    %532 = vector.broadcast %531 : vector<8x1xf32> to vector<8x256xf32>
    %533 = arith.mulf %532, %516 : vector<8x256xf32>
    %534 = arith.addf %530, %533 : vector<8x256xf32>
    %c7_i32_151 = arith.constant 7 : i32
    %535 = tpu.dynamic_rotate %516 by %c7_i32_151 dim 0 : vector<8x256xf32>, i32 -> vector<8x256xf32>
    %c0_152 = arith.constant 0 : index
    %c61 = arith.constant 61 : index
    %536 = vector.load %arg1[%c0_152, %c61] : memref<8x144xf32, #tpu.memory_space<vmem>>, vector<8x1xf32>
    %537 = vector.broadcast %536 : vector<8x1xf32> to vector<8x256xf32>
    %538 = arith.mulf %537, %535 : vector<8x256xf32>
    %539 = arith.addf %534, %538 : vector<8x256xf32>
    %c6_i32_153 = arith.constant 6 : i32
    %540 = tpu.dynamic_rotate %516 by %c6_i32_153 dim 0 : vector<8x256xf32>, i32 -> vector<8x256xf32>
    %c0_154 = arith.constant 0 : index
    %c62 = arith.constant 62 : index
    %541 = vector.load %arg1[%c0_154, %c62] : memref<8x144xf32, #tpu.memory_space<vmem>>, vector<8x1xf32>
    %542 = vector.broadcast %541 : vector<8x1xf32> to vector<8x256xf32>
    %543 = arith.mulf %542, %540 : vector<8x256xf32>
    %544 = arith.addf %539, %543 : vector<8x256xf32>
    %c5_i32_155 = arith.constant 5 : i32
    %545 = tpu.dynamic_rotate %516 by %c5_i32_155 dim 0 : vector<8x256xf32>, i32 -> vector<8x256xf32>
    %c0_156 = arith.constant 0 : index
    %c63 = arith.constant 63 : index
    %546 = vector.load %arg1[%c0_156, %c63] : memref<8x144xf32, #tpu.memory_space<vmem>>, vector<8x1xf32>
    %547 = vector.broadcast %546 : vector<8x1xf32> to vector<8x256xf32>
    %548 = arith.mulf %547, %545 : vector<8x256xf32>
    %549 = arith.addf %544, %548 : vector<8x256xf32>
    %cst_157 = arith.constant 0.000000e+00 : f32
    %550 = vector.broadcast %cst_157 : f32 to vector<8x256xf32>
    %551 = arith.maximumf %549, %550 : vector<8x256xf32>
    %c0_158 = arith.constant 0 : index
    %c64 = arith.constant 64 : index
    %552 = vector.load %arg1[%c0_158, %c64] : memref<8x144xf32, #tpu.memory_space<vmem>>, vector<8x1xf32>
    %c34_i32_159 = arith.constant 34 : i32
    %553 = tpu.dynamic_rotate %551 by %c34_i32_159 dim 1 : vector<8x256xf32>, i32 -> vector<8x256xf32>
    %554 = arith.mulf %553, %27 : vector<8x256xf32>
    %555 = arith.mulf %554, %35 : vector<8x256xf32>
    %556 = vector.broadcast %552 : vector<8x1xf32> to vector<8x256xf32>
    %557 = arith.mulf %556, %555 : vector<8x256xf32>
    %c0_160 = arith.constant 0 : index
    %c65 = arith.constant 65 : index
    %558 = vector.load %arg1[%c0_160, %c65] : memref<8x144xf32, #tpu.memory_space<vmem>>, vector<8x1xf32>
    %c33_i32_161 = arith.constant 33 : i32
    %559 = tpu.dynamic_rotate %551 by %c33_i32_161 dim 1 : vector<8x256xf32>, i32 -> vector<8x256xf32>
    %560 = arith.mulf %559, %27 : vector<8x256xf32>
    %561 = arith.mulf %560, %19 : vector<8x256xf32>
    %562 = vector.broadcast %558 : vector<8x1xf32> to vector<8x256xf32>
    %563 = arith.mulf %562, %561 : vector<8x256xf32>
    %564 = arith.addf %557, %563 : vector<8x256xf32>
    %c0_162 = arith.constant 0 : index
    %c66 = arith.constant 66 : index
    %565 = vector.load %arg1[%c0_162, %c66] : memref<8x144xf32, #tpu.memory_space<vmem>>, vector<8x1xf32>
    %c32_i32_163 = arith.constant 32 : i32
    %566 = tpu.dynamic_rotate %551 by %c32_i32_163 dim 1 : vector<8x256xf32>, i32 -> vector<8x256xf32>
    %567 = arith.mulf %566, %27 : vector<8x256xf32>
    %568 = vector.broadcast %565 : vector<8x1xf32> to vector<8x256xf32>
    %569 = arith.mulf %568, %567 : vector<8x256xf32>
    %570 = arith.addf %564, %569 : vector<8x256xf32>
    %c0_164 = arith.constant 0 : index
    %c67 = arith.constant 67 : index
    %571 = vector.load %arg1[%c0_164, %c67] : memref<8x144xf32, #tpu.memory_space<vmem>>, vector<8x1xf32>
    %c31_i32_165 = arith.constant 31 : i32
    %572 = tpu.dynamic_rotate %551 by %c31_i32_165 dim 1 : vector<8x256xf32>, i32 -> vector<8x256xf32>
    %573 = arith.mulf %572, %27 : vector<8x256xf32>
    %574 = arith.mulf %573, %15 : vector<8x256xf32>
    %575 = vector.broadcast %571 : vector<8x1xf32> to vector<8x256xf32>
    %576 = arith.mulf %575, %574 : vector<8x256xf32>
    %577 = arith.addf %570, %576 : vector<8x256xf32>
    %c0_166 = arith.constant 0 : index
    %c68 = arith.constant 68 : index
    %578 = vector.load %arg1[%c0_166, %c68] : memref<8x144xf32, #tpu.memory_space<vmem>>, vector<8x1xf32>
    %c30_i32_167 = arith.constant 30 : i32
    %579 = tpu.dynamic_rotate %551 by %c30_i32_167 dim 1 : vector<8x256xf32>, i32 -> vector<8x256xf32>
    %580 = arith.mulf %579, %27 : vector<8x256xf32>
    %581 = arith.mulf %580, %31 : vector<8x256xf32>
    %582 = vector.broadcast %578 : vector<8x1xf32> to vector<8x256xf32>
    %583 = arith.mulf %582, %581 : vector<8x256xf32>
    %584 = arith.addf %577, %583 : vector<8x256xf32>
    %c0_168 = arith.constant 0 : index
    %c69 = arith.constant 69 : index
    %585 = vector.load %arg1[%c0_168, %c69] : memref<8x144xf32, #tpu.memory_space<vmem>>, vector<8x1xf32>
    %c18_i32_169 = arith.constant 18 : i32
    %586 = tpu.dynamic_rotate %551 by %c18_i32_169 dim 1 : vector<8x256xf32>, i32 -> vector<8x256xf32>
    %587 = arith.mulf %586, %11 : vector<8x256xf32>
    %588 = arith.mulf %587, %35 : vector<8x256xf32>
    %589 = vector.broadcast %585 : vector<8x1xf32> to vector<8x256xf32>
    %590 = arith.mulf %589, %588 : vector<8x256xf32>
    %591 = arith.addf %584, %590 : vector<8x256xf32>
    %c0_170 = arith.constant 0 : index
    %c70 = arith.constant 70 : index
    %592 = vector.load %arg1[%c0_170, %c70] : memref<8x144xf32, #tpu.memory_space<vmem>>, vector<8x1xf32>
    %c17_i32_171 = arith.constant 17 : i32
    %593 = tpu.dynamic_rotate %551 by %c17_i32_171 dim 1 : vector<8x256xf32>, i32 -> vector<8x256xf32>
    %594 = arith.mulf %593, %11 : vector<8x256xf32>
    %595 = arith.mulf %594, %19 : vector<8x256xf32>
    %596 = vector.broadcast %592 : vector<8x1xf32> to vector<8x256xf32>
    %597 = arith.mulf %596, %595 : vector<8x256xf32>
    %598 = arith.addf %591, %597 : vector<8x256xf32>
    %c0_172 = arith.constant 0 : index
    %c71 = arith.constant 71 : index
    %599 = vector.load %arg1[%c0_172, %c71] : memref<8x144xf32, #tpu.memory_space<vmem>>, vector<8x1xf32>
    %c16_i32_173 = arith.constant 16 : i32
    %600 = tpu.dynamic_rotate %551 by %c16_i32_173 dim 1 : vector<8x256xf32>, i32 -> vector<8x256xf32>
    %601 = arith.mulf %600, %11 : vector<8x256xf32>
    %602 = vector.broadcast %599 : vector<8x1xf32> to vector<8x256xf32>
    %603 = arith.mulf %602, %601 : vector<8x256xf32>
    %604 = arith.addf %598, %603 : vector<8x256xf32>
    %c0_174 = arith.constant 0 : index
    %c72 = arith.constant 72 : index
    %605 = vector.load %arg1[%c0_174, %c72] : memref<8x144xf32, #tpu.memory_space<vmem>>, vector<8x1xf32>
    %c15_i32_175 = arith.constant 15 : i32
    %606 = tpu.dynamic_rotate %551 by %c15_i32_175 dim 1 : vector<8x256xf32>, i32 -> vector<8x256xf32>
    %607 = arith.mulf %606, %11 : vector<8x256xf32>
    %608 = arith.mulf %607, %15 : vector<8x256xf32>
    %609 = vector.broadcast %605 : vector<8x1xf32> to vector<8x256xf32>
    %610 = arith.mulf %609, %608 : vector<8x256xf32>
    %611 = arith.addf %604, %610 : vector<8x256xf32>
    %c0_176 = arith.constant 0 : index
    %c73 = arith.constant 73 : index
    %612 = vector.load %arg1[%c0_176, %c73] : memref<8x144xf32, #tpu.memory_space<vmem>>, vector<8x1xf32>
    %c14_i32_177 = arith.constant 14 : i32
    %613 = tpu.dynamic_rotate %551 by %c14_i32_177 dim 1 : vector<8x256xf32>, i32 -> vector<8x256xf32>
    %614 = arith.mulf %613, %11 : vector<8x256xf32>
    %615 = arith.mulf %614, %31 : vector<8x256xf32>
    %616 = vector.broadcast %612 : vector<8x1xf32> to vector<8x256xf32>
    %617 = arith.mulf %616, %615 : vector<8x256xf32>
    %618 = arith.addf %611, %617 : vector<8x256xf32>
    %c0_178 = arith.constant 0 : index
    %c74 = arith.constant 74 : index
    %619 = vector.load %arg1[%c0_178, %c74] : memref<8x144xf32, #tpu.memory_space<vmem>>, vector<8x1xf32>
    %c2_i32_179 = arith.constant 2 : i32
    %620 = tpu.dynamic_rotate %551 by %c2_i32_179 dim 1 : vector<8x256xf32>, i32 -> vector<8x256xf32>
    %621 = arith.mulf %620, %35 : vector<8x256xf32>
    %622 = vector.broadcast %619 : vector<8x1xf32> to vector<8x256xf32>
    %623 = arith.mulf %622, %621 : vector<8x256xf32>
    %624 = arith.addf %618, %623 : vector<8x256xf32>
    %c0_180 = arith.constant 0 : index
    %c75 = arith.constant 75 : index
    %625 = vector.load %arg1[%c0_180, %c75] : memref<8x144xf32, #tpu.memory_space<vmem>>, vector<8x1xf32>
    %c1_i32_181 = arith.constant 1 : i32
    %626 = tpu.dynamic_rotate %551 by %c1_i32_181 dim 1 : vector<8x256xf32>, i32 -> vector<8x256xf32>
    %627 = arith.mulf %626, %19 : vector<8x256xf32>
    %628 = vector.broadcast %625 : vector<8x1xf32> to vector<8x256xf32>
    %629 = arith.mulf %628, %627 : vector<8x256xf32>
    %630 = arith.addf %624, %629 : vector<8x256xf32>
    %c0_182 = arith.constant 0 : index
    %c76 = arith.constant 76 : index
    %631 = vector.load %arg1[%c0_182, %c76] : memref<8x144xf32, #tpu.memory_space<vmem>>, vector<8x1xf32>
    %632 = vector.broadcast %631 : vector<8x1xf32> to vector<8x256xf32>
    %633 = arith.mulf %632, %551 : vector<8x256xf32>
    %634 = arith.addf %630, %633 : vector<8x256xf32>
    %c0_183 = arith.constant 0 : index
    %c77 = arith.constant 77 : index
    %635 = vector.load %arg1[%c0_183, %c77] : memref<8x144xf32, #tpu.memory_space<vmem>>, vector<8x1xf32>
    %c255_i32_184 = arith.constant 255 : i32
    %636 = tpu.dynamic_rotate %551 by %c255_i32_184 dim 1 : vector<8x256xf32>, i32 -> vector<8x256xf32>
    %637 = arith.mulf %636, %15 : vector<8x256xf32>
    %638 = vector.broadcast %635 : vector<8x1xf32> to vector<8x256xf32>
    %639 = arith.mulf %638, %637 : vector<8x256xf32>
    %640 = arith.addf %634, %639 : vector<8x256xf32>
    %c0_185 = arith.constant 0 : index
    %c78 = arith.constant 78 : index
    %641 = vector.load %arg1[%c0_185, %c78] : memref<8x144xf32, #tpu.memory_space<vmem>>, vector<8x1xf32>
    %c254_i32_186 = arith.constant 254 : i32
    %642 = tpu.dynamic_rotate %551 by %c254_i32_186 dim 1 : vector<8x256xf32>, i32 -> vector<8x256xf32>
    %643 = arith.mulf %642, %31 : vector<8x256xf32>
    %644 = vector.broadcast %641 : vector<8x1xf32> to vector<8x256xf32>
    %645 = arith.mulf %644, %643 : vector<8x256xf32>
    %646 = arith.addf %640, %645 : vector<8x256xf32>
    %c0_187 = arith.constant 0 : index
    %c79 = arith.constant 79 : index
    %647 = vector.load %arg1[%c0_187, %c79] : memref<8x144xf32, #tpu.memory_space<vmem>>, vector<8x1xf32>
    %c242_i32_188 = arith.constant 242 : i32
    %648 = tpu.dynamic_rotate %551 by %c242_i32_188 dim 1 : vector<8x256xf32>, i32 -> vector<8x256xf32>
    %649 = arith.mulf %648, %7 : vector<8x256xf32>
    %650 = arith.mulf %649, %35 : vector<8x256xf32>
    %651 = vector.broadcast %647 : vector<8x1xf32> to vector<8x256xf32>
    %652 = arith.mulf %651, %650 : vector<8x256xf32>
    %653 = arith.addf %646, %652 : vector<8x256xf32>
    %c0_189 = arith.constant 0 : index
    %c80 = arith.constant 80 : index
    %654 = vector.load %arg1[%c0_189, %c80] : memref<8x144xf32, #tpu.memory_space<vmem>>, vector<8x1xf32>
    %c241_i32_190 = arith.constant 241 : i32
    %655 = tpu.dynamic_rotate %551 by %c241_i32_190 dim 1 : vector<8x256xf32>, i32 -> vector<8x256xf32>
    %656 = arith.mulf %655, %7 : vector<8x256xf32>
    %657 = arith.mulf %656, %19 : vector<8x256xf32>
    %658 = vector.broadcast %654 : vector<8x1xf32> to vector<8x256xf32>
    %659 = arith.mulf %658, %657 : vector<8x256xf32>
    %660 = arith.addf %653, %659 : vector<8x256xf32>
    %c0_191 = arith.constant 0 : index
    %c81 = arith.constant 81 : index
    %661 = vector.load %arg1[%c0_191, %c81] : memref<8x144xf32, #tpu.memory_space<vmem>>, vector<8x1xf32>
    %c240_i32_192 = arith.constant 240 : i32
    %662 = tpu.dynamic_rotate %551 by %c240_i32_192 dim 1 : vector<8x256xf32>, i32 -> vector<8x256xf32>
    %663 = arith.mulf %662, %7 : vector<8x256xf32>
    %664 = vector.broadcast %661 : vector<8x1xf32> to vector<8x256xf32>
    %665 = arith.mulf %664, %663 : vector<8x256xf32>
    %666 = arith.addf %660, %665 : vector<8x256xf32>
    %c0_193 = arith.constant 0 : index
    %c82 = arith.constant 82 : index
    %667 = vector.load %arg1[%c0_193, %c82] : memref<8x144xf32, #tpu.memory_space<vmem>>, vector<8x1xf32>
    %c239_i32_194 = arith.constant 239 : i32
    %668 = tpu.dynamic_rotate %551 by %c239_i32_194 dim 1 : vector<8x256xf32>, i32 -> vector<8x256xf32>
    %669 = arith.mulf %668, %7 : vector<8x256xf32>
    %670 = arith.mulf %669, %15 : vector<8x256xf32>
    %671 = vector.broadcast %667 : vector<8x1xf32> to vector<8x256xf32>
    %672 = arith.mulf %671, %670 : vector<8x256xf32>
    %673 = arith.addf %666, %672 : vector<8x256xf32>
    %c0_195 = arith.constant 0 : index
    %c83 = arith.constant 83 : index
    %674 = vector.load %arg1[%c0_195, %c83] : memref<8x144xf32, #tpu.memory_space<vmem>>, vector<8x1xf32>
    %c238_i32_196 = arith.constant 238 : i32
    %675 = tpu.dynamic_rotate %551 by %c238_i32_196 dim 1 : vector<8x256xf32>, i32 -> vector<8x256xf32>
    %676 = arith.mulf %675, %7 : vector<8x256xf32>
    %677 = arith.mulf %676, %31 : vector<8x256xf32>
    %678 = vector.broadcast %674 : vector<8x1xf32> to vector<8x256xf32>
    %679 = arith.mulf %678, %677 : vector<8x256xf32>
    %680 = arith.addf %673, %679 : vector<8x256xf32>
    %c0_197 = arith.constant 0 : index
    %c84 = arith.constant 84 : index
    %681 = vector.load %arg1[%c0_197, %c84] : memref<8x144xf32, #tpu.memory_space<vmem>>, vector<8x1xf32>
    %c226_i32_198 = arith.constant 226 : i32
    %682 = tpu.dynamic_rotate %551 by %c226_i32_198 dim 1 : vector<8x256xf32>, i32 -> vector<8x256xf32>
    %683 = arith.mulf %682, %23 : vector<8x256xf32>
    %684 = arith.mulf %683, %35 : vector<8x256xf32>
    %685 = vector.broadcast %681 : vector<8x1xf32> to vector<8x256xf32>
    %686 = arith.mulf %685, %684 : vector<8x256xf32>
    %687 = arith.addf %680, %686 : vector<8x256xf32>
    %c0_199 = arith.constant 0 : index
    %c85 = arith.constant 85 : index
    %688 = vector.load %arg1[%c0_199, %c85] : memref<8x144xf32, #tpu.memory_space<vmem>>, vector<8x1xf32>
    %c225_i32_200 = arith.constant 225 : i32
    %689 = tpu.dynamic_rotate %551 by %c225_i32_200 dim 1 : vector<8x256xf32>, i32 -> vector<8x256xf32>
    %690 = arith.mulf %689, %23 : vector<8x256xf32>
    %691 = arith.mulf %690, %19 : vector<8x256xf32>
    %692 = vector.broadcast %688 : vector<8x1xf32> to vector<8x256xf32>
    %693 = arith.mulf %692, %691 : vector<8x256xf32>
    %694 = arith.addf %687, %693 : vector<8x256xf32>
    %c0_201 = arith.constant 0 : index
    %c86 = arith.constant 86 : index
    %695 = vector.load %arg1[%c0_201, %c86] : memref<8x144xf32, #tpu.memory_space<vmem>>, vector<8x1xf32>
    %c224_i32_202 = arith.constant 224 : i32
    %696 = tpu.dynamic_rotate %551 by %c224_i32_202 dim 1 : vector<8x256xf32>, i32 -> vector<8x256xf32>
    %697 = arith.mulf %696, %23 : vector<8x256xf32>
    %698 = vector.broadcast %695 : vector<8x1xf32> to vector<8x256xf32>
    %699 = arith.mulf %698, %697 : vector<8x256xf32>
    %700 = arith.addf %694, %699 : vector<8x256xf32>
    %c0_203 = arith.constant 0 : index
    %c87 = arith.constant 87 : index
    %701 = vector.load %arg1[%c0_203, %c87] : memref<8x144xf32, #tpu.memory_space<vmem>>, vector<8x1xf32>
    %c223_i32_204 = arith.constant 223 : i32
    %702 = tpu.dynamic_rotate %551 by %c223_i32_204 dim 1 : vector<8x256xf32>, i32 -> vector<8x256xf32>
    %703 = arith.mulf %702, %23 : vector<8x256xf32>
    %704 = arith.mulf %703, %15 : vector<8x256xf32>
    %705 = vector.broadcast %701 : vector<8x1xf32> to vector<8x256xf32>
    %706 = arith.mulf %705, %704 : vector<8x256xf32>
    %707 = arith.addf %700, %706 : vector<8x256xf32>
    %c0_205 = arith.constant 0 : index
    %c88 = arith.constant 88 : index
    %708 = vector.load %arg1[%c0_205, %c88] : memref<8x144xf32, #tpu.memory_space<vmem>>, vector<8x1xf32>
    %c222_i32_206 = arith.constant 222 : i32
    %709 = tpu.dynamic_rotate %551 by %c222_i32_206 dim 1 : vector<8x256xf32>, i32 -> vector<8x256xf32>
    %710 = arith.mulf %709, %23 : vector<8x256xf32>
    %711 = arith.mulf %710, %31 : vector<8x256xf32>
    %712 = vector.broadcast %708 : vector<8x1xf32> to vector<8x256xf32>
    %713 = arith.mulf %712, %711 : vector<8x256xf32>
    %714 = arith.addf %707, %713 : vector<8x256xf32>
    %c3_i32_207 = arith.constant 3 : i32
    %715 = tpu.dynamic_rotate %714 by %c3_i32_207 dim 0 : vector<8x256xf32>, i32 -> vector<8x256xf32>
    %c0_208 = arith.constant 0 : index
    %c89 = arith.constant 89 : index
    %716 = vector.load %arg1[%c0_208, %c89] : memref<8x144xf32, #tpu.memory_space<vmem>>, vector<8x1xf32>
    %717 = vector.broadcast %716 : vector<8x1xf32> to vector<8x256xf32>
    %718 = arith.mulf %717, %715 : vector<8x256xf32>
    %c2_i32_209 = arith.constant 2 : i32
    %719 = tpu.dynamic_rotate %714 by %c2_i32_209 dim 0 : vector<8x256xf32>, i32 -> vector<8x256xf32>
    %c0_210 = arith.constant 0 : index
    %c90 = arith.constant 90 : index
    %720 = vector.load %arg1[%c0_210, %c90] : memref<8x144xf32, #tpu.memory_space<vmem>>, vector<8x1xf32>
    %721 = vector.broadcast %720 : vector<8x1xf32> to vector<8x256xf32>
    %722 = arith.mulf %721, %719 : vector<8x256xf32>
    %723 = arith.addf %718, %722 : vector<8x256xf32>
    %c1_i32_211 = arith.constant 1 : i32
    %724 = tpu.dynamic_rotate %714 by %c1_i32_211 dim 0 : vector<8x256xf32>, i32 -> vector<8x256xf32>
    %c0_212 = arith.constant 0 : index
    %c91 = arith.constant 91 : index
    %725 = vector.load %arg1[%c0_212, %c91] : memref<8x144xf32, #tpu.memory_space<vmem>>, vector<8x1xf32>
    %726 = vector.broadcast %725 : vector<8x1xf32> to vector<8x256xf32>
    %727 = arith.mulf %726, %724 : vector<8x256xf32>
    %728 = arith.addf %723, %727 : vector<8x256xf32>
    %c0_213 = arith.constant 0 : index
    %c92 = arith.constant 92 : index
    %729 = vector.load %arg1[%c0_213, %c92] : memref<8x144xf32, #tpu.memory_space<vmem>>, vector<8x1xf32>
    %730 = vector.broadcast %729 : vector<8x1xf32> to vector<8x256xf32>
    %731 = arith.mulf %730, %714 : vector<8x256xf32>
    %732 = arith.addf %728, %731 : vector<8x256xf32>
    %c7_i32_214 = arith.constant 7 : i32
    %733 = tpu.dynamic_rotate %714 by %c7_i32_214 dim 0 : vector<8x256xf32>, i32 -> vector<8x256xf32>
    %c0_215 = arith.constant 0 : index
    %c93 = arith.constant 93 : index
    %734 = vector.load %arg1[%c0_215, %c93] : memref<8x144xf32, #tpu.memory_space<vmem>>, vector<8x1xf32>
    %735 = vector.broadcast %734 : vector<8x1xf32> to vector<8x256xf32>
    %736 = arith.mulf %735, %733 : vector<8x256xf32>
    %737 = arith.addf %732, %736 : vector<8x256xf32>
    %c6_i32_216 = arith.constant 6 : i32
    %738 = tpu.dynamic_rotate %714 by %c6_i32_216 dim 0 : vector<8x256xf32>, i32 -> vector<8x256xf32>
    %c0_217 = arith.constant 0 : index
    %c94 = arith.constant 94 : index
    %739 = vector.load %arg1[%c0_217, %c94] : memref<8x144xf32, #tpu.memory_space<vmem>>, vector<8x1xf32>
    %740 = vector.broadcast %739 : vector<8x1xf32> to vector<8x256xf32>
    %741 = arith.mulf %740, %738 : vector<8x256xf32>
    %742 = arith.addf %737, %741 : vector<8x256xf32>
    %c5_i32_218 = arith.constant 5 : i32
    %743 = tpu.dynamic_rotate %714 by %c5_i32_218 dim 0 : vector<8x256xf32>, i32 -> vector<8x256xf32>
    %c0_219 = arith.constant 0 : index
    %c95 = arith.constant 95 : index
    %744 = vector.load %arg1[%c0_219, %c95] : memref<8x144xf32, #tpu.memory_space<vmem>>, vector<8x1xf32>
    %745 = vector.broadcast %744 : vector<8x1xf32> to vector<8x256xf32>
    %746 = arith.mulf %745, %743 : vector<8x256xf32>
    %747 = arith.addf %742, %746 : vector<8x256xf32>
    %748 = arith.addf %353, %747 : vector<8x256xf32>
    %c0_220 = arith.constant 0 : index
    %c96 = arith.constant 96 : index
    %749 = vector.load %arg1[%c0_220, %c96] : memref<8x144xf32, #tpu.memory_space<vmem>>, vector<8x1xf32>
    %c34_i32_221 = arith.constant 34 : i32
    %750 = tpu.dynamic_rotate %174 by %c34_i32_221 dim 1 : vector<8x256xf32>, i32 -> vector<8x256xf32>
    %751 = arith.mulf %750, %27 : vector<8x256xf32>
    %752 = arith.mulf %751, %35 : vector<8x256xf32>
    %753 = vector.broadcast %749 : vector<8x1xf32> to vector<8x256xf32>
    %754 = arith.mulf %753, %752 : vector<8x256xf32>
    %c0_222 = arith.constant 0 : index
    %c97 = arith.constant 97 : index
    %755 = vector.load %arg1[%c0_222, %c97] : memref<8x144xf32, #tpu.memory_space<vmem>>, vector<8x1xf32>
    %c32_i32_223 = arith.constant 32 : i32
    %756 = tpu.dynamic_rotate %174 by %c32_i32_223 dim 1 : vector<8x256xf32>, i32 -> vector<8x256xf32>
    %757 = arith.mulf %756, %27 : vector<8x256xf32>
    %758 = vector.broadcast %755 : vector<8x1xf32> to vector<8x256xf32>
    %759 = arith.mulf %758, %757 : vector<8x256xf32>
    %760 = arith.addf %754, %759 : vector<8x256xf32>
    %c0_224 = arith.constant 0 : index
    %c98 = arith.constant 98 : index
    %761 = vector.load %arg1[%c0_224, %c98] : memref<8x144xf32, #tpu.memory_space<vmem>>, vector<8x1xf32>
    %c30_i32_225 = arith.constant 30 : i32
    %762 = tpu.dynamic_rotate %174 by %c30_i32_225 dim 1 : vector<8x256xf32>, i32 -> vector<8x256xf32>
    %763 = arith.mulf %762, %27 : vector<8x256xf32>
    %764 = arith.mulf %763, %31 : vector<8x256xf32>
    %765 = vector.broadcast %761 : vector<8x1xf32> to vector<8x256xf32>
    %766 = arith.mulf %765, %764 : vector<8x256xf32>
    %767 = arith.addf %760, %766 : vector<8x256xf32>
    %c0_226 = arith.constant 0 : index
    %c99 = arith.constant 99 : index
    %768 = vector.load %arg1[%c0_226, %c99] : memref<8x144xf32, #tpu.memory_space<vmem>>, vector<8x1xf32>
    %c2_i32_227 = arith.constant 2 : i32
    %769 = tpu.dynamic_rotate %174 by %c2_i32_227 dim 1 : vector<8x256xf32>, i32 -> vector<8x256xf32>
    %770 = arith.mulf %769, %35 : vector<8x256xf32>
    %771 = vector.broadcast %768 : vector<8x1xf32> to vector<8x256xf32>
    %772 = arith.mulf %771, %770 : vector<8x256xf32>
    %773 = arith.addf %767, %772 : vector<8x256xf32>
    %c0_228 = arith.constant 0 : index
    %c100 = arith.constant 100 : index
    %774 = vector.load %arg1[%c0_228, %c100] : memref<8x144xf32, #tpu.memory_space<vmem>>, vector<8x1xf32>
    %775 = vector.broadcast %774 : vector<8x1xf32> to vector<8x256xf32>
    %776 = arith.mulf %775, %174 : vector<8x256xf32>
    %777 = arith.addf %773, %776 : vector<8x256xf32>
    %c0_229 = arith.constant 0 : index
    %c101 = arith.constant 101 : index
    %778 = vector.load %arg1[%c0_229, %c101] : memref<8x144xf32, #tpu.memory_space<vmem>>, vector<8x1xf32>
    %c254_i32_230 = arith.constant 254 : i32
    %779 = tpu.dynamic_rotate %174 by %c254_i32_230 dim 1 : vector<8x256xf32>, i32 -> vector<8x256xf32>
    %780 = arith.mulf %779, %31 : vector<8x256xf32>
    %781 = vector.broadcast %778 : vector<8x1xf32> to vector<8x256xf32>
    %782 = arith.mulf %781, %780 : vector<8x256xf32>
    %783 = arith.addf %777, %782 : vector<8x256xf32>
    %c0_231 = arith.constant 0 : index
    %c102 = arith.constant 102 : index
    %784 = vector.load %arg1[%c0_231, %c102] : memref<8x144xf32, #tpu.memory_space<vmem>>, vector<8x1xf32>
    %c226_i32_232 = arith.constant 226 : i32
    %785 = tpu.dynamic_rotate %174 by %c226_i32_232 dim 1 : vector<8x256xf32>, i32 -> vector<8x256xf32>
    %786 = arith.mulf %785, %23 : vector<8x256xf32>
    %787 = arith.mulf %786, %35 : vector<8x256xf32>
    %788 = vector.broadcast %784 : vector<8x1xf32> to vector<8x256xf32>
    %789 = arith.mulf %788, %787 : vector<8x256xf32>
    %790 = arith.addf %783, %789 : vector<8x256xf32>
    %c0_233 = arith.constant 0 : index
    %c103 = arith.constant 103 : index
    %791 = vector.load %arg1[%c0_233, %c103] : memref<8x144xf32, #tpu.memory_space<vmem>>, vector<8x1xf32>
    %c224_i32_234 = arith.constant 224 : i32
    %792 = tpu.dynamic_rotate %174 by %c224_i32_234 dim 1 : vector<8x256xf32>, i32 -> vector<8x256xf32>
    %793 = arith.mulf %792, %23 : vector<8x256xf32>
    %794 = vector.broadcast %791 : vector<8x1xf32> to vector<8x256xf32>
    %795 = arith.mulf %794, %793 : vector<8x256xf32>
    %796 = arith.addf %790, %795 : vector<8x256xf32>
    %c0_235 = arith.constant 0 : index
    %c104 = arith.constant 104 : index
    %797 = vector.load %arg1[%c0_235, %c104] : memref<8x144xf32, #tpu.memory_space<vmem>>, vector<8x1xf32>
    %c222_i32_236 = arith.constant 222 : i32
    %798 = tpu.dynamic_rotate %174 by %c222_i32_236 dim 1 : vector<8x256xf32>, i32 -> vector<8x256xf32>
    %799 = arith.mulf %798, %23 : vector<8x256xf32>
    %800 = arith.mulf %799, %31 : vector<8x256xf32>
    %801 = vector.broadcast %797 : vector<8x1xf32> to vector<8x256xf32>
    %802 = arith.mulf %801, %800 : vector<8x256xf32>
    %803 = arith.addf %796, %802 : vector<8x256xf32>
    %c3_i32_237 = arith.constant 3 : i32
    %804 = tpu.dynamic_rotate %803 by %c3_i32_237 dim 0 : vector<8x256xf32>, i32 -> vector<8x256xf32>
    %c0_238 = arith.constant 0 : index
    %c105 = arith.constant 105 : index
    %805 = vector.load %arg1[%c0_238, %c105] : memref<8x144xf32, #tpu.memory_space<vmem>>, vector<8x1xf32>
    %806 = vector.broadcast %805 : vector<8x1xf32> to vector<8x256xf32>
    %807 = arith.mulf %806, %804 : vector<8x256xf32>
    %c2_i32_239 = arith.constant 2 : i32
    %808 = tpu.dynamic_rotate %803 by %c2_i32_239 dim 0 : vector<8x256xf32>, i32 -> vector<8x256xf32>
    %c0_240 = arith.constant 0 : index
    %c106 = arith.constant 106 : index
    %809 = vector.load %arg1[%c0_240, %c106] : memref<8x144xf32, #tpu.memory_space<vmem>>, vector<8x1xf32>
    %810 = vector.broadcast %809 : vector<8x1xf32> to vector<8x256xf32>
    %811 = arith.mulf %810, %808 : vector<8x256xf32>
    %812 = arith.addf %807, %811 : vector<8x256xf32>
    %c1_i32_241 = arith.constant 1 : i32
    %813 = tpu.dynamic_rotate %803 by %c1_i32_241 dim 0 : vector<8x256xf32>, i32 -> vector<8x256xf32>
    %c0_242 = arith.constant 0 : index
    %c107 = arith.constant 107 : index
    %814 = vector.load %arg1[%c0_242, %c107] : memref<8x144xf32, #tpu.memory_space<vmem>>, vector<8x1xf32>
    %815 = vector.broadcast %814 : vector<8x1xf32> to vector<8x256xf32>
    %816 = arith.mulf %815, %813 : vector<8x256xf32>
    %817 = arith.addf %812, %816 : vector<8x256xf32>
    %c0_243 = arith.constant 0 : index
    %c108 = arith.constant 108 : index
    %818 = vector.load %arg1[%c0_243, %c108] : memref<8x144xf32, #tpu.memory_space<vmem>>, vector<8x1xf32>
    %819 = vector.broadcast %818 : vector<8x1xf32> to vector<8x256xf32>
    %820 = arith.mulf %819, %803 : vector<8x256xf32>
    %821 = arith.addf %817, %820 : vector<8x256xf32>
    %c7_i32_244 = arith.constant 7 : i32
    %822 = tpu.dynamic_rotate %803 by %c7_i32_244 dim 0 : vector<8x256xf32>, i32 -> vector<8x256xf32>
    %c0_245 = arith.constant 0 : index
    %c109 = arith.constant 109 : index
    %823 = vector.load %arg1[%c0_245, %c109] : memref<8x144xf32, #tpu.memory_space<vmem>>, vector<8x1xf32>
    %824 = vector.broadcast %823 : vector<8x1xf32> to vector<8x256xf32>
    %825 = arith.mulf %824, %822 : vector<8x256xf32>
    %826 = arith.addf %821, %825 : vector<8x256xf32>
    %c6_i32_246 = arith.constant 6 : i32
    %827 = tpu.dynamic_rotate %803 by %c6_i32_246 dim 0 : vector<8x256xf32>, i32 -> vector<8x256xf32>
    %c0_247 = arith.constant 0 : index
    %c110 = arith.constant 110 : index
    %828 = vector.load %arg1[%c0_247, %c110] : memref<8x144xf32, #tpu.memory_space<vmem>>, vector<8x1xf32>
    %829 = vector.broadcast %828 : vector<8x1xf32> to vector<8x256xf32>
    %830 = arith.mulf %829, %827 : vector<8x256xf32>
    %831 = arith.addf %826, %830 : vector<8x256xf32>
    %c5_i32_248 = arith.constant 5 : i32
    %832 = tpu.dynamic_rotate %803 by %c5_i32_248 dim 0 : vector<8x256xf32>, i32 -> vector<8x256xf32>
    %c0_249 = arith.constant 0 : index
    %c111 = arith.constant 111 : index
    %833 = vector.load %arg1[%c0_249, %c111] : memref<8x144xf32, #tpu.memory_space<vmem>>, vector<8x1xf32>
    %834 = vector.broadcast %833 : vector<8x1xf32> to vector<8x256xf32>
    %835 = arith.mulf %834, %832 : vector<8x256xf32>
    %836 = arith.addf %831, %835 : vector<8x256xf32>
    %837 = arith.addf %748, %836 : vector<8x256xf32>
    %c0_250 = arith.constant 0 : index
    %c112 = arith.constant 112 : index
    %838 = vector.load %arg1[%c0_250, %c112] : memref<8x144xf32, #tpu.memory_space<vmem>>, vector<8x1xf32>
    %c68_i32 = arith.constant 68 : i32
    %839 = tpu.dynamic_rotate %174 by %c68_i32 dim 1 : vector<8x256xf32>, i32 -> vector<8x256xf32>
    %840 = arith.mulf %839, %43 : vector<8x256xf32>
    %841 = arith.mulf %840, %51 : vector<8x256xf32>
    %842 = vector.broadcast %838 : vector<8x1xf32> to vector<8x256xf32>
    %843 = arith.mulf %842, %841 : vector<8x256xf32>
    %c0_251 = arith.constant 0 : index
    %c113 = arith.constant 113 : index
    %844 = vector.load %arg1[%c0_251, %c113] : memref<8x144xf32, #tpu.memory_space<vmem>>, vector<8x1xf32>
    %c66_i32 = arith.constant 66 : i32
    %845 = tpu.dynamic_rotate %174 by %c66_i32 dim 1 : vector<8x256xf32>, i32 -> vector<8x256xf32>
    %846 = arith.mulf %845, %43 : vector<8x256xf32>
    %847 = arith.mulf %846, %35 : vector<8x256xf32>
    %848 = vector.broadcast %844 : vector<8x1xf32> to vector<8x256xf32>
    %849 = arith.mulf %848, %847 : vector<8x256xf32>
    %850 = arith.addf %843, %849 : vector<8x256xf32>
    %c0_252 = arith.constant 0 : index
    %c114 = arith.constant 114 : index
    %851 = vector.load %arg1[%c0_252, %c114] : memref<8x144xf32, #tpu.memory_space<vmem>>, vector<8x1xf32>
    %c64_i32_253 = arith.constant 64 : i32
    %852 = tpu.dynamic_rotate %174 by %c64_i32_253 dim 1 : vector<8x256xf32>, i32 -> vector<8x256xf32>
    %853 = arith.mulf %852, %43 : vector<8x256xf32>
    %854 = vector.broadcast %851 : vector<8x1xf32> to vector<8x256xf32>
    %855 = arith.mulf %854, %853 : vector<8x256xf32>
    %856 = arith.addf %850, %855 : vector<8x256xf32>
    %c0_254 = arith.constant 0 : index
    %c115 = arith.constant 115 : index
    %857 = vector.load %arg1[%c0_254, %c115] : memref<8x144xf32, #tpu.memory_space<vmem>>, vector<8x1xf32>
    %c62_i32 = arith.constant 62 : i32
    %858 = tpu.dynamic_rotate %174 by %c62_i32 dim 1 : vector<8x256xf32>, i32 -> vector<8x256xf32>
    %859 = arith.mulf %858, %43 : vector<8x256xf32>
    %860 = arith.mulf %859, %31 : vector<8x256xf32>
    %861 = vector.broadcast %857 : vector<8x1xf32> to vector<8x256xf32>
    %862 = arith.mulf %861, %860 : vector<8x256xf32>
    %863 = arith.addf %856, %862 : vector<8x256xf32>
    %c0_255 = arith.constant 0 : index
    %c116 = arith.constant 116 : index
    %864 = vector.load %arg1[%c0_255, %c116] : memref<8x144xf32, #tpu.memory_space<vmem>>, vector<8x1xf32>
    %c60_i32 = arith.constant 60 : i32
    %865 = tpu.dynamic_rotate %174 by %c60_i32 dim 1 : vector<8x256xf32>, i32 -> vector<8x256xf32>
    %866 = arith.mulf %865, %43 : vector<8x256xf32>
    %867 = arith.mulf %866, %47 : vector<8x256xf32>
    %868 = vector.broadcast %864 : vector<8x1xf32> to vector<8x256xf32>
    %869 = arith.mulf %868, %867 : vector<8x256xf32>
    %870 = arith.addf %863, %869 : vector<8x256xf32>
    %c0_256 = arith.constant 0 : index
    %c117 = arith.constant 117 : index
    %871 = vector.load %arg1[%c0_256, %c117] : memref<8x144xf32, #tpu.memory_space<vmem>>, vector<8x1xf32>
    %c36_i32 = arith.constant 36 : i32
    %872 = tpu.dynamic_rotate %174 by %c36_i32 dim 1 : vector<8x256xf32>, i32 -> vector<8x256xf32>
    %873 = arith.mulf %872, %27 : vector<8x256xf32>
    %874 = arith.mulf %873, %51 : vector<8x256xf32>
    %875 = vector.broadcast %871 : vector<8x1xf32> to vector<8x256xf32>
    %876 = arith.mulf %875, %874 : vector<8x256xf32>
    %877 = arith.addf %870, %876 : vector<8x256xf32>
    %c0_257 = arith.constant 0 : index
    %c118 = arith.constant 118 : index
    %878 = vector.load %arg1[%c0_257, %c118] : memref<8x144xf32, #tpu.memory_space<vmem>>, vector<8x1xf32>
    %c34_i32_258 = arith.constant 34 : i32
    %879 = tpu.dynamic_rotate %174 by %c34_i32_258 dim 1 : vector<8x256xf32>, i32 -> vector<8x256xf32>
    %880 = arith.mulf %879, %27 : vector<8x256xf32>
    %881 = arith.mulf %880, %35 : vector<8x256xf32>
    %882 = vector.broadcast %878 : vector<8x1xf32> to vector<8x256xf32>
    %883 = arith.mulf %882, %881 : vector<8x256xf32>
    %884 = arith.addf %877, %883 : vector<8x256xf32>
    %c0_259 = arith.constant 0 : index
    %c119 = arith.constant 119 : index
    %885 = vector.load %arg1[%c0_259, %c119] : memref<8x144xf32, #tpu.memory_space<vmem>>, vector<8x1xf32>
    %c32_i32_260 = arith.constant 32 : i32
    %886 = tpu.dynamic_rotate %174 by %c32_i32_260 dim 1 : vector<8x256xf32>, i32 -> vector<8x256xf32>
    %887 = arith.mulf %886, %27 : vector<8x256xf32>
    %888 = vector.broadcast %885 : vector<8x1xf32> to vector<8x256xf32>
    %889 = arith.mulf %888, %887 : vector<8x256xf32>
    %890 = arith.addf %884, %889 : vector<8x256xf32>
    %c0_261 = arith.constant 0 : index
    %c120 = arith.constant 120 : index
    %891 = vector.load %arg1[%c0_261, %c120] : memref<8x144xf32, #tpu.memory_space<vmem>>, vector<8x1xf32>
    %c30_i32_262 = arith.constant 30 : i32
    %892 = tpu.dynamic_rotate %174 by %c30_i32_262 dim 1 : vector<8x256xf32>, i32 -> vector<8x256xf32>
    %893 = arith.mulf %892, %27 : vector<8x256xf32>
    %894 = arith.mulf %893, %31 : vector<8x256xf32>
    %895 = vector.broadcast %891 : vector<8x1xf32> to vector<8x256xf32>
    %896 = arith.mulf %895, %894 : vector<8x256xf32>
    %897 = arith.addf %890, %896 : vector<8x256xf32>
    %c0_263 = arith.constant 0 : index
    %c121 = arith.constant 121 : index
    %898 = vector.load %arg1[%c0_263, %c121] : memref<8x144xf32, #tpu.memory_space<vmem>>, vector<8x1xf32>
    %c28_i32 = arith.constant 28 : i32
    %899 = tpu.dynamic_rotate %174 by %c28_i32 dim 1 : vector<8x256xf32>, i32 -> vector<8x256xf32>
    %900 = arith.mulf %899, %27 : vector<8x256xf32>
    %901 = arith.mulf %900, %47 : vector<8x256xf32>
    %902 = vector.broadcast %898 : vector<8x1xf32> to vector<8x256xf32>
    %903 = arith.mulf %902, %901 : vector<8x256xf32>
    %904 = arith.addf %897, %903 : vector<8x256xf32>
    %c0_264 = arith.constant 0 : index
    %c122 = arith.constant 122 : index
    %905 = vector.load %arg1[%c0_264, %c122] : memref<8x144xf32, #tpu.memory_space<vmem>>, vector<8x1xf32>
    %c4_i32_265 = arith.constant 4 : i32
    %906 = tpu.dynamic_rotate %174 by %c4_i32_265 dim 1 : vector<8x256xf32>, i32 -> vector<8x256xf32>
    %907 = arith.mulf %906, %51 : vector<8x256xf32>
    %908 = vector.broadcast %905 : vector<8x1xf32> to vector<8x256xf32>
    %909 = arith.mulf %908, %907 : vector<8x256xf32>
    %910 = arith.addf %904, %909 : vector<8x256xf32>
    %c0_266 = arith.constant 0 : index
    %c123 = arith.constant 123 : index
    %911 = vector.load %arg1[%c0_266, %c123] : memref<8x144xf32, #tpu.memory_space<vmem>>, vector<8x1xf32>
    %c2_i32_267 = arith.constant 2 : i32
    %912 = tpu.dynamic_rotate %174 by %c2_i32_267 dim 1 : vector<8x256xf32>, i32 -> vector<8x256xf32>
    %913 = arith.mulf %912, %35 : vector<8x256xf32>
    %914 = vector.broadcast %911 : vector<8x1xf32> to vector<8x256xf32>
    %915 = arith.mulf %914, %913 : vector<8x256xf32>
    %916 = arith.addf %910, %915 : vector<8x256xf32>
    %c0_268 = arith.constant 0 : index
    %c124 = arith.constant 124 : index
    %917 = vector.load %arg1[%c0_268, %c124] : memref<8x144xf32, #tpu.memory_space<vmem>>, vector<8x1xf32>
    %918 = vector.broadcast %917 : vector<8x1xf32> to vector<8x256xf32>
    %919 = arith.mulf %918, %174 : vector<8x256xf32>
    %920 = arith.addf %916, %919 : vector<8x256xf32>
    %c0_269 = arith.constant 0 : index
    %c125 = arith.constant 125 : index
    %921 = vector.load %arg1[%c0_269, %c125] : memref<8x144xf32, #tpu.memory_space<vmem>>, vector<8x1xf32>
    %c254_i32_270 = arith.constant 254 : i32
    %922 = tpu.dynamic_rotate %174 by %c254_i32_270 dim 1 : vector<8x256xf32>, i32 -> vector<8x256xf32>
    %923 = arith.mulf %922, %31 : vector<8x256xf32>
    %924 = vector.broadcast %921 : vector<8x1xf32> to vector<8x256xf32>
    %925 = arith.mulf %924, %923 : vector<8x256xf32>
    %926 = arith.addf %920, %925 : vector<8x256xf32>
    %c0_271 = arith.constant 0 : index
    %c126 = arith.constant 126 : index
    %927 = vector.load %arg1[%c0_271, %c126] : memref<8x144xf32, #tpu.memory_space<vmem>>, vector<8x1xf32>
    %c252_i32 = arith.constant 252 : i32
    %928 = tpu.dynamic_rotate %174 by %c252_i32 dim 1 : vector<8x256xf32>, i32 -> vector<8x256xf32>
    %929 = arith.mulf %928, %47 : vector<8x256xf32>
    %930 = vector.broadcast %927 : vector<8x1xf32> to vector<8x256xf32>
    %931 = arith.mulf %930, %929 : vector<8x256xf32>
    %932 = arith.addf %926, %931 : vector<8x256xf32>
    %c0_272 = arith.constant 0 : index
    %c127 = arith.constant 127 : index
    %933 = vector.load %arg1[%c0_272, %c127] : memref<8x144xf32, #tpu.memory_space<vmem>>, vector<8x1xf32>
    %c228_i32 = arith.constant 228 : i32
    %934 = tpu.dynamic_rotate %174 by %c228_i32 dim 1 : vector<8x256xf32>, i32 -> vector<8x256xf32>
    %935 = arith.mulf %934, %23 : vector<8x256xf32>
    %936 = arith.mulf %935, %51 : vector<8x256xf32>
    %937 = vector.broadcast %933 : vector<8x1xf32> to vector<8x256xf32>
    %938 = arith.mulf %937, %936 : vector<8x256xf32>
    %939 = arith.addf %932, %938 : vector<8x256xf32>
    %c0_273 = arith.constant 0 : index
    %c128 = arith.constant 128 : index
    %940 = vector.load %arg1[%c0_273, %c128] : memref<8x144xf32, #tpu.memory_space<vmem>>, vector<8x1xf32>
    %c226_i32_274 = arith.constant 226 : i32
    %941 = tpu.dynamic_rotate %174 by %c226_i32_274 dim 1 : vector<8x256xf32>, i32 -> vector<8x256xf32>
    %942 = arith.mulf %941, %23 : vector<8x256xf32>
    %943 = arith.mulf %942, %35 : vector<8x256xf32>
    %944 = vector.broadcast %940 : vector<8x1xf32> to vector<8x256xf32>
    %945 = arith.mulf %944, %943 : vector<8x256xf32>
    %946 = arith.addf %939, %945 : vector<8x256xf32>
    %c0_275 = arith.constant 0 : index
    %c129 = arith.constant 129 : index
    %947 = vector.load %arg1[%c0_275, %c129] : memref<8x144xf32, #tpu.memory_space<vmem>>, vector<8x1xf32>
    %c224_i32_276 = arith.constant 224 : i32
    %948 = tpu.dynamic_rotate %174 by %c224_i32_276 dim 1 : vector<8x256xf32>, i32 -> vector<8x256xf32>
    %949 = arith.mulf %948, %23 : vector<8x256xf32>
    %950 = vector.broadcast %947 : vector<8x1xf32> to vector<8x256xf32>
    %951 = arith.mulf %950, %949 : vector<8x256xf32>
    %952 = arith.addf %946, %951 : vector<8x256xf32>
    %c0_277 = arith.constant 0 : index
    %c130 = arith.constant 130 : index
    %953 = vector.load %arg1[%c0_277, %c130] : memref<8x144xf32, #tpu.memory_space<vmem>>, vector<8x1xf32>
    %c222_i32_278 = arith.constant 222 : i32
    %954 = tpu.dynamic_rotate %174 by %c222_i32_278 dim 1 : vector<8x256xf32>, i32 -> vector<8x256xf32>
    %955 = arith.mulf %954, %23 : vector<8x256xf32>
    %956 = arith.mulf %955, %31 : vector<8x256xf32>
    %957 = vector.broadcast %953 : vector<8x1xf32> to vector<8x256xf32>
    %958 = arith.mulf %957, %956 : vector<8x256xf32>
    %959 = arith.addf %952, %958 : vector<8x256xf32>
    %c0_279 = arith.constant 0 : index
    %c131 = arith.constant 131 : index
    %960 = vector.load %arg1[%c0_279, %c131] : memref<8x144xf32, #tpu.memory_space<vmem>>, vector<8x1xf32>
    %c220_i32 = arith.constant 220 : i32
    %961 = tpu.dynamic_rotate %174 by %c220_i32 dim 1 : vector<8x256xf32>, i32 -> vector<8x256xf32>
    %962 = arith.mulf %961, %23 : vector<8x256xf32>
    %963 = arith.mulf %962, %47 : vector<8x256xf32>
    %964 = vector.broadcast %960 : vector<8x1xf32> to vector<8x256xf32>
    %965 = arith.mulf %964, %963 : vector<8x256xf32>
    %966 = arith.addf %959, %965 : vector<8x256xf32>
    %c0_280 = arith.constant 0 : index
    %c132 = arith.constant 132 : index
    %967 = vector.load %arg1[%c0_280, %c132] : memref<8x144xf32, #tpu.memory_space<vmem>>, vector<8x1xf32>
    %c196_i32 = arith.constant 196 : i32
    %968 = tpu.dynamic_rotate %174 by %c196_i32 dim 1 : vector<8x256xf32>, i32 -> vector<8x256xf32>
    %969 = arith.mulf %968, %39 : vector<8x256xf32>
    %970 = arith.mulf %969, %51 : vector<8x256xf32>
    %971 = vector.broadcast %967 : vector<8x1xf32> to vector<8x256xf32>
    %972 = arith.mulf %971, %970 : vector<8x256xf32>
    %973 = arith.addf %966, %972 : vector<8x256xf32>
    %c0_281 = arith.constant 0 : index
    %c133 = arith.constant 133 : index
    %974 = vector.load %arg1[%c0_281, %c133] : memref<8x144xf32, #tpu.memory_space<vmem>>, vector<8x1xf32>
    %c194_i32 = arith.constant 194 : i32
    %975 = tpu.dynamic_rotate %174 by %c194_i32 dim 1 : vector<8x256xf32>, i32 -> vector<8x256xf32>
    %976 = arith.mulf %975, %39 : vector<8x256xf32>
    %977 = arith.mulf %976, %35 : vector<8x256xf32>
    %978 = vector.broadcast %974 : vector<8x1xf32> to vector<8x256xf32>
    %979 = arith.mulf %978, %977 : vector<8x256xf32>
    %980 = arith.addf %973, %979 : vector<8x256xf32>
    %c0_282 = arith.constant 0 : index
    %c134 = arith.constant 134 : index
    %981 = vector.load %arg1[%c0_282, %c134] : memref<8x144xf32, #tpu.memory_space<vmem>>, vector<8x1xf32>
    %c192_i32_283 = arith.constant 192 : i32
    %982 = tpu.dynamic_rotate %174 by %c192_i32_283 dim 1 : vector<8x256xf32>, i32 -> vector<8x256xf32>
    %983 = arith.mulf %982, %39 : vector<8x256xf32>
    %984 = vector.broadcast %981 : vector<8x1xf32> to vector<8x256xf32>
    %985 = arith.mulf %984, %983 : vector<8x256xf32>
    %986 = arith.addf %980, %985 : vector<8x256xf32>
    %c0_284 = arith.constant 0 : index
    %c135 = arith.constant 135 : index
    %987 = vector.load %arg1[%c0_284, %c135] : memref<8x144xf32, #tpu.memory_space<vmem>>, vector<8x1xf32>
    %c190_i32 = arith.constant 190 : i32
    %988 = tpu.dynamic_rotate %174 by %c190_i32 dim 1 : vector<8x256xf32>, i32 -> vector<8x256xf32>
    %989 = arith.mulf %988, %39 : vector<8x256xf32>
    %990 = arith.mulf %989, %31 : vector<8x256xf32>
    %991 = vector.broadcast %987 : vector<8x1xf32> to vector<8x256xf32>
    %992 = arith.mulf %991, %990 : vector<8x256xf32>
    %993 = arith.addf %986, %992 : vector<8x256xf32>
    %c0_285 = arith.constant 0 : index
    %c136 = arith.constant 136 : index
    %994 = vector.load %arg1[%c0_285, %c136] : memref<8x144xf32, #tpu.memory_space<vmem>>, vector<8x1xf32>
    %c188_i32 = arith.constant 188 : i32
    %995 = tpu.dynamic_rotate %174 by %c188_i32 dim 1 : vector<8x256xf32>, i32 -> vector<8x256xf32>
    %996 = arith.mulf %995, %39 : vector<8x256xf32>
    %997 = arith.mulf %996, %47 : vector<8x256xf32>
    %998 = vector.broadcast %994 : vector<8x1xf32> to vector<8x256xf32>
    %999 = arith.mulf %998, %997 : vector<8x256xf32>
    %1000 = arith.addf %993, %999 : vector<8x256xf32>
    %c3_i32_286 = arith.constant 3 : i32
    %1001 = tpu.dynamic_rotate %1000 by %c3_i32_286 dim 0 : vector<8x256xf32>, i32 -> vector<8x256xf32>
    %c0_287 = arith.constant 0 : index
    %c137 = arith.constant 137 : index
    %1002 = vector.load %arg1[%c0_287, %c137] : memref<8x144xf32, #tpu.memory_space<vmem>>, vector<8x1xf32>
    %1003 = vector.broadcast %1002 : vector<8x1xf32> to vector<8x256xf32>
    %1004 = arith.mulf %1003, %1001 : vector<8x256xf32>
    %c2_i32_288 = arith.constant 2 : i32
    %1005 = tpu.dynamic_rotate %1000 by %c2_i32_288 dim 0 : vector<8x256xf32>, i32 -> vector<8x256xf32>
    %c0_289 = arith.constant 0 : index
    %c138 = arith.constant 138 : index
    %1006 = vector.load %arg1[%c0_289, %c138] : memref<8x144xf32, #tpu.memory_space<vmem>>, vector<8x1xf32>
    %1007 = vector.broadcast %1006 : vector<8x1xf32> to vector<8x256xf32>
    %1008 = arith.mulf %1007, %1005 : vector<8x256xf32>
    %1009 = arith.addf %1004, %1008 : vector<8x256xf32>
    %c1_i32_290 = arith.constant 1 : i32
    %1010 = tpu.dynamic_rotate %1000 by %c1_i32_290 dim 0 : vector<8x256xf32>, i32 -> vector<8x256xf32>
    %c0_291 = arith.constant 0 : index
    %c139 = arith.constant 139 : index
    %1011 = vector.load %arg1[%c0_291, %c139] : memref<8x144xf32, #tpu.memory_space<vmem>>, vector<8x1xf32>
    %1012 = vector.broadcast %1011 : vector<8x1xf32> to vector<8x256xf32>
    %1013 = arith.mulf %1012, %1010 : vector<8x256xf32>
    %1014 = arith.addf %1009, %1013 : vector<8x256xf32>
    %c0_292 = arith.constant 0 : index
    %c140 = arith.constant 140 : index
    %1015 = vector.load %arg1[%c0_292, %c140] : memref<8x144xf32, #tpu.memory_space<vmem>>, vector<8x1xf32>
    %1016 = vector.broadcast %1015 : vector<8x1xf32> to vector<8x256xf32>
    %1017 = arith.mulf %1016, %1000 : vector<8x256xf32>
    %1018 = arith.addf %1014, %1017 : vector<8x256xf32>
    %c7_i32_293 = arith.constant 7 : i32
    %1019 = tpu.dynamic_rotate %1000 by %c7_i32_293 dim 0 : vector<8x256xf32>, i32 -> vector<8x256xf32>
    %c0_294 = arith.constant 0 : index
    %c141 = arith.constant 141 : index
    %1020 = vector.load %arg1[%c0_294, %c141] : memref<8x144xf32, #tpu.memory_space<vmem>>, vector<8x1xf32>
    %1021 = vector.broadcast %1020 : vector<8x1xf32> to vector<8x256xf32>
    %1022 = arith.mulf %1021, %1019 : vector<8x256xf32>
    %1023 = arith.addf %1018, %1022 : vector<8x256xf32>
    %c6_i32_295 = arith.constant 6 : i32
    %1024 = tpu.dynamic_rotate %1000 by %c6_i32_295 dim 0 : vector<8x256xf32>, i32 -> vector<8x256xf32>
    %c0_296 = arith.constant 0 : index
    %c142 = arith.constant 142 : index
    %1025 = vector.load %arg1[%c0_296, %c142] : memref<8x144xf32, #tpu.memory_space<vmem>>, vector<8x1xf32>
    %1026 = vector.broadcast %1025 : vector<8x1xf32> to vector<8x256xf32>
    %1027 = arith.mulf %1026, %1024 : vector<8x256xf32>
    %1028 = arith.addf %1023, %1027 : vector<8x256xf32>
    %c5_i32_297 = arith.constant 5 : i32
    %1029 = tpu.dynamic_rotate %1000 by %c5_i32_297 dim 0 : vector<8x256xf32>, i32 -> vector<8x256xf32>
    %c0_298 = arith.constant 0 : index
    %c143 = arith.constant 143 : index
    %1030 = vector.load %arg1[%c0_298, %c143] : memref<8x144xf32, #tpu.memory_space<vmem>>, vector<8x1xf32>
    %1031 = vector.broadcast %1030 : vector<8x1xf32> to vector<8x256xf32>
    %1032 = arith.mulf %1031, %1029 : vector<8x256xf32>
    %1033 = arith.addf %1028, %1032 : vector<8x256xf32>
    %1034 = arith.addf %837, %1033 : vector<8x256xf32>
    %c0_299 = arith.constant 0 : index
    %c0_300 = arith.constant 0 : index
    %1035 = vector.load %arg3[%c0_299, %c0_300] : memref<8x256xf32, #tpu.memory_space<vmem>>, vector<8x256xf32>
    tpu.vector_store %arg3[%c0_299, %c0_300], %1034 {strides = array<i32>} : memref<8x256xf32, #tpu.memory_space<vmem>>, vector<8x256xf32>,
    return
  }
}

</mosaic_0001>

<llo_original>
// kernel: mixed_op_forward.1
$region0: #{mixed_op_forward.1}
  #allocation0 [shape = 'u32[]', space=smem, size = 0x4, offset = 0x4, fixed_abs, tag = 'smem constant byte address 0x4 - core index']
  #allocation1 [shape = 'u32[144,128]{1,0:T(1,128)}', space=vmem, size = 0x12000, scoped, tag = 'internal scratch']
  %s0 = inlined_call_operand.vmem [shape: f32[3], index: 0, kind: input, shape index: {}]
  %s1 = inlined_call_operand.vmem [shape: f32[8,144], index: 1, kind: input, shape index: {}]
  %s2 = inlined_call_operand.vmem [shape: f32[8,256], index: 2, kind: input, shape index: {}]
  %s3 = inlined_call_operand.vmem [shape: f32[8,256], index: 3, kind: output, shape index: {}]
  %s4 = sld [smem:[#allocation0]]
  $region26: #{mixed_op_forward.1} parent=0
    _
  %s6 = ssub.s32 1, %s4
  %s7 = scalar_select 0, %s6, %s4
  $region1: #{mixed_op_forward.1} parent=0
    #allocation2 [shape = 'u8[512]{0}', space=smem, size = 0x200, scoped, tag = 'input window, operand 0, single buffered']
    #allocation3 [shape = 's32[1]{0}', space=sflag, size = 0x4, scoped, tag = 'scoped memory for mixed_op_forward.1']
    %8 = vsyncpa [#allocation3], 0
    // Predicated region
    $region2: #{mixed_op_forward.1} parent=1 // pred_check
      _
    $region3: #{mixed_op_forward.1} parent=1 // pred_check_branch
      %10 = sbr.rel (0) target = $region5
    $region4: #{mixed_op_forward.1} parent=1 // pred_region
      %s12 = ssub.s32 16, 16
      %13 = vsyncadd [#allocation3], %s12
      %s15 = sshll.u32 %s0, 4
      %s16 = int_to_ptr.vmem [resolvable:$true] %s15
      %18 = dma.vmem_to_smem %s16, 16, [#allocation2], [#allocation3]
    $region5: #{mixed_op_forward.1} parent=1 // pred_fallthru
      _
    // Predicated region
    $region6: #{mixed_op_forward.1} parent=1 // pred_check
      _
    $region7: #{mixed_op_forward.1} parent=1 // pred_check_branch
      %20 = sbr.rel (0) target = $region9
    $region8: #{mixed_op_forward.1} parent=1 // pred_region
      _
    $region9: #{mixed_op_forward.1} parent=1 // pred_fallthru
      _
    // Predicated region
    $region10: #{mixed_op_forward.1} parent=1 // pred_check
      _
    $region11: #{mixed_op_forward.1} parent=1 // pred_check_branch
      %22 = sbr.rel (0) target = $region13
    $region12: #{mixed_op_forward.1} parent=1 // pred_region
      _
    $region13: #{mixed_op_forward.1} parent=1 // pred_fallthru
      _
    // Predicated region
    $region14: #{mixed_op_forward.1} parent=1 // pred_check
      _
    $region15: #{mixed_op_forward.1} parent=1 // pred_check_branch
      %24 = sbr.rel (0) target = $region17
    $region16: #{mixed_op_forward.1} parent=1 // pred_region
      %25 = dma.done [#allocation3], 16
    $region17: #{mixed_op_forward.1} parent=1 // pred_fallthru
      _
    %26 = sfence
    %v27 = vld [vmem:[%s2] sm:$0xff]
    %v28 = vld [vmem:[%s2 + $0x8] sm:$0xff]
    %v29 = vlaneseq
    %v30 = vand.u32 %v29, 127
    %v31 = vadd.s32 %v30, 128
    %v32 = vand.u32 %v30, 15
    %v33 = vand.u32 %v31, 15
    %vm34 = vcmp.lt.s32.totalorder %v30, 240
    %vm35 = vcmp.lt.s32.totalorder %v31, 240
    %v36 = vsel %vm34, 1, 0
    %v37 = vsel %vm35, 1, 0
    %v38 = vcvt.s32.f32 %v36
    %v39 = vcvt.s32.f32 %v37
    %vm40 = vcmp.ge.s32.totalorder %v30, 16
    %vm41 = vcmp.ge.s32.totalorder %v31, 16
    %v42 = vsel %vm40, 1, 0
    %v43 = vsel %vm41, 1, 0
    %v44 = vcvt.s32.f32 %v42
    %v45 = vcvt.s32.f32 %v43
    %vm46 = vcmp.lt.s32.totalorder %v32, 15
    %vm47 = vcmp.lt.s32.totalorder %v33, 15
    %v48 = vsel %vm46, 1, 0
    %v49 = vsel %vm47, 1, 0
    %v50 = vcvt.s32.f32 %v48
    %v51 = vcvt.s32.f32 %v49
    %vm52 = vcmp.ge.s32.totalorder %v32, 1
    %vm53 = vcmp.ge.s32.totalorder %v33, 1
    %v54 = vsel %vm52, 1, 0
    %v55 = vsel %vm53, 1, 0
    %v56 = vcvt.s32.f32 %v54
    %v57 = vcvt.s32.f32 %v55
    %vm58 = vcmp.lt.s32.totalorder %v30, 224
    %vm59 = vcmp.lt.s32.totalorder %v31, 224
    %v60 = vsel %vm58, 1, 0
    %v61 = vsel %vm59, 1, 0
    %v62 = vcvt.s32.f32 %v60
    %v63 = vcvt.s32.f32 %v61
    %vm64 = vcmp.ge.s32.totalorder %v30, 32
    %vm65 = vcmp.ge.s32.totalorder %v31, 32
    %v66 = vsel %vm64, 1, 0
    %v67 = vsel %vm65, 1, 0
    %v68 = vcvt.s32.f32 %v66
    %v69 = vcvt.s32.f32 %v67
    %vm70 = vcmp.lt.s32.totalorder %v32, 14
    %vm71 = vcmp.lt.s32.totalorder %v33, 14
    %v72 = vsel %vm70, 1, 0
    %v73 = vsel %vm71, 1, 0
    %v74 = vcvt.s32.f32 %v72
    %v75 = vcvt.s32.f32 %v73
    %vm76 = vcmp.ge.s32.totalorder %v32, 2
    %vm77 = vcmp.ge.s32.totalorder %v33, 2
    %v78 = vsel %vm76, 1, 0
    %v79 = vsel %vm77, 1, 0
    %v80 = vcvt.s32.f32 %v78
    %v81 = vcvt.s32.f32 %v79
    %vm82 = vcmp.lt.s32.totalorder %v30, 192
    %vm83 = vcmp.lt.s32.totalorder %v31, 192
    %v84 = vsel %vm82, 1, 0
    %v85 = vsel %vm83, 1, 0
    %v86 = vcvt.s32.f32 %v84
    %v87 = vcvt.s32.f32 %v85
    %vm88 = vcmp.ge.s32.totalorder %v30, 64
    %vm89 = vcmp.ge.s32.totalorder %v31, 64
    %v90 = vsel %vm88, 1, 0
    %v91 = vsel %vm89, 1, 0
    %v92 = vcvt.s32.f32 %v90
    %v93 = vcvt.s32.f32 %v91
    %vm94 = vcmp.lt.s32.totalorder %v32, 12
    %vm95 = vcmp.lt.s32.totalorder %v33, 12
    %v96 = vsel %vm94, 1, 0
    %v97 = vsel %vm95, 1, 0
    %v98 = vcvt.s32.f32 %v96
    %v99 = vcvt.s32.f32 %v97
    %vm100 = vcmp.ge.s32.totalorder %v32, 4
    %vm101 = vcmp.ge.s32.totalorder %v33, 4
    %v102 = vsel %vm100, 1, 0
    %v103 = vsel %vm101, 1, 0
    %v104 = vcvt.s32.f32 %v102
    %v105 = vcvt.s32.f32 %v103
    %s106 = sld [smem:[#allocation2]]
    %v107 = vstv %s106
    %v108 = vmul.f32 %v107, %v27
    %v109 = vmul.f32 %v107, %v28
    %110 = vrot.lane.b32.xlu0 %v27, 17
    %v111 = vpop.permute.xlu0 %110
    %112 = vrot.lane.b32.xlu0 %v28, 17
    %v113 = vpop.permute.xlu0 %112
    %vm114 = vcmp.lt.s32.totalorder %v30, 17
    %v115 = vsel %vm114, %v111, %v113
    %v116 = vsel %vm114, %v113, %v111
    %vm117 = vcmp.gt.f32.partialorder %v44, 0.5
    %vm118 = vcmp.gt.f32.partialorder %v45, 0.5
    %v119 = vsel %vm117, %v116, -inf
    %v120 = vsel %vm118, %v115, -inf
    %vm121 = vcmp.gt.f32.partialorder %v56, 0.5
    %vm122 = vcmp.gt.f32.partialorder %v57, 0.5
    %v123 = vsel %vm121, %v119, -inf
    %v124 = vsel %vm122, %v120, -inf
    %v125 = vmax.f32 %v27, %v123
    %v126 = vmax.f32 %v28, %v124
    %v127 = vmul.f32 %v116, %v44
    %v128 = vmul.f32 %v115, %v45
    %v129 = vmul.f32 %v127, %v56
    %v130 = vmul.f32 %v128, %v57
    %v131 = vadd.f32 %v27, %v129
    %v132 = vadd.f32 %v28, %v130
    %133 = vrot.lane.b32.xlu0 %v27, 16
    %v134 = vpop.permute.xlu0 %133
    %135 = vrot.lane.b32.xlu0 %v28, 16
    %v136 = vpop.permute.xlu0 %135
    %vm137 = vcmp.lt.s32.totalorder %v30, 16
    %v138 = vsel %vm137, %v134, %v136
    %v139 = vsel %vm137, %v136, %v134
    %v140 = vsel %vm117, %v139, -inf
    %v141 = vsel %vm118, %v138, -inf
    %v142 = vmax.f32 %v125, %v140
    %v143 = vmax.f32 %v126, %v141
    %v144 = vmul.f32 %v139, %v44
    %v145 = vmul.f32 %v138, %v45
    %v146 = vadd.f32 %v131, %v144
    %v147 = vadd.f32 %v132, %v145
    %148 = vrot.lane.b32.xlu0 %v27, 15
    %v149 = vpop.permute.xlu0 %148
    %150 = vrot.lane.b32.xlu0 %v28, 15
    %v151 = vpop.permute.xlu0 %150
    %vm152 = vcmp.lt.s32.totalorder %v30, 15
    %v153 = vsel %vm152, %v149, %v151
    %v154 = vsel %vm152, %v151, %v149
    %v155 = vsel %vm117, %v154, -inf
    %v156 = vsel %vm118, %v153, -inf
    %vm157 = vcmp.gt.f32.partialorder %v50, 0.5
    %vm158 = vcmp.gt.f32.partialorder %v51, 0.5
    %v159 = vsel %vm157, %v155, -inf
    %v160 = vsel %vm158, %v156, -inf
    %v161 = vmax.f32 %v142, %v159
    %v162 = vmax.f32 %v143, %v160
    %v163 = vmul.f32 %v154, %v44
    %v164 = vmul.f32 %v153, %v45
    %v165 = vmul.f32 %v163, %v50
    %v166 = vmul.f32 %v164, %v51
    %v167 = vadd.f32 %v146, %v165
    %v168 = vadd.f32 %v147, %v166
    %169 = vrot.lane.b32.xlu0 %v27, 1
    %v170 = vpop.permute.xlu0 %169
    %171 = vrot.lane.b32.xlu0 %v28, 1
    %v172 = vpop.permute.xlu0 %171
    %vm173 = vcmp.lt.s32.totalorder %v30, 1
    %v174 = vsel %vm173, %v170, %v172
    %v175 = vsel %vm173, %v172, %v170
    %v176 = vsel %vm121, %v175, -inf
    %v177 = vsel %vm122, %v174, -inf
    %v178 = vmax.f32 %v161, %v176
    %v179 = vmax.f32 %v162, %v177
    %v180 = vmul.f32 %v175, %v56
    %v181 = vmul.f32 %v174, %v57
    %v182 = vadd.f32 %v167, %v180
    %v183 = vadd.f32 %v168, %v181
    %184 = vrot.lane.b32.xlu0 %v27, 127
    %v185 = vpop.permute.xlu0 %184
    %186 = vrot.lane.b32.xlu0 %v28, 127
    %v187 = vpop.permute.xlu0 %186
    %vm188 = vcmp.lt.s32.totalorder %v30, 127
    %v189 = vsel %vm188, %v185, %v187
    %v190 = vsel %vm188, %v187, %v185
    %v191 = vsel %vm157, %v189, -inf
    %v192 = vsel %vm158, %v190, -inf
    %v193 = vmax.f32 %v178, %v191
    %v194 = vmax.f32 %v179, %v192
    %v195 = vmul.f32 %v189, %v50
    %v196 = vmul.f32 %v190, %v51
    %v197 = vadd.f32 %v182, %v195
    %v198 = vadd.f32 %v183, %v196
    %199 = vrot.lane.b32.xlu0 %v27, 113
    %v200 = vpop.permute.xlu0 %199
    %201 = vrot.lane.b32.xlu0 %v28, 113
    %v202 = vpop.permute.xlu0 %201
    %vm203 = vcmp.lt.s32.totalorder %v30, 113
    %v204 = vsel %vm203, %v200, %v202
    %v205 = vsel %vm203, %v202, %v200
    %vm206 = vcmp.gt.f32.partialorder %v38, 0.5
    %vm207 = vcmp.gt.f32.partialorder %v39, 0.5
    %v208 = vsel %vm206, %v204, -inf
    %v209 = vsel %vm207, %v205, -inf
    %v210 = vsel %vm121, %v208, -inf
    %v211 = vsel %vm122, %v209, -inf
    %v212 = vmax.f32 %v193, %v210
    %v213 = vmax.f32 %v194, %v211
    %v214 = vmul.f32 %v204, %v38
    %v215 = vmul.f32 %v205, %v39
    %v216 = vmul.f32 %v214, %v56
    %v217 = vmul.f32 %v215, %v57
    %v218 = vadd.f32 %v197, %v216
    %v219 = vadd.f32 %v198, %v217
    %220 = vrot.lane.b32.xlu0 %v27, 112
    %v221 = vpop.permute.xlu0 %220
    %222 = vrot.lane.b32.xlu0 %v28, 112
    %v223 = vpop.permute.xlu0 %222
    %vm224 = vcmp.lt.s32.totalorder %v30, 112
    %v225 = vsel %vm224, %v221, %v223
    %v226 = vsel %vm224, %v223, %v221
    %v227 = vsel %vm206, %v225, -inf
    %v228 = vsel %vm207, %v226, -inf
    %v229 = vmax.f32 %v212, %v227
    %v230 = vmax.f32 %v213, %v228
    %v231 = vmul.f32 %v225, %v38
    %v232 = vmul.f32 %v226, %v39
    %v233 = vadd.f32 %v218, %v231
    %v234 = vadd.f32 %v219, %v232
    %235 = vrot.lane.b32.xlu0 %v27, 111
    %v236 = vpop.permute.xlu0 %235
    %237 = vrot.lane.b32.xlu0 %v28, 111
    %v238 = vpop.permute.xlu0 %237
    %vm239 = vcmp.lt.s32.totalorder %v30, 111
    %v240 = vsel %vm239, %v236, %v238
    %v241 = vsel %vm239, %v238, %v236
    %v242 = vsel %vm206, %v240, -inf
    %v243 = vsel %vm207, %v241, -inf
    %v244 = vsel %vm157, %v242, -inf
    %v245 = vsel %vm158, %v243, -inf
    %v246 = vmax.f32 %v229, %v244
    %v247 = vmax.f32 %v230, %v245
    %v248 = vmul.f32 %v240, %v38
    %v249 = vmul.f32 %v241, %v39
    %v250 = vmul.f32 %v248, %v50
    %v251 = vmul.f32 %v249, %v51
    %v252 = vadd.f32 %v233, %v250
    %v253 = vadd.f32 %v234, %v251
    %s254 = sld [smem:[#allocation2 + $0x1]]
    %v255 = vstv %s254
    %v256 = vmul.f32 %v255, %v246
    %v257 = vmul.f32 %v255, %v247
    %v258 = vadd.f32 %v108, %v256
    %v259 = vadd.f32 %v109, %v257
    %vm260 = vmand %vm40, %vm34
    %vm261 = vmand %vm41, %vm35
    %v262 = vsel %vm260, 0.33333334, 0.5
    %v263 = vsel %vm261, 0.33333334, 0.5
    %vm264 = vmand %vm52, %vm46
    %vm265 = vmand %vm53, %vm47
    %v266 = vsel %vm264, 0.33333334, 0.5
    %v267 = vsel %vm265, 0.33333334, 0.5
    %s268 = sld [smem:[#allocation2 + $0x2]]
    %v269 = vmul.f32 %v262, %v266
    %v270 = vmul.f32 %v263, %v267
    %v271 = vstv %s268
    %v272 = vmul.f32 %v271, %v269
    %v273 = vmul.f32 %v271, %v270
    %v274 = vmul.f32 %v272, %v252
    %v275 = vmul.f32 %v273, %v253
    %v276 = vadd.f32 %v258, %v274
    %v277 = vadd.f32 %v259, %v275
    %v278 = vmax.f32 %v27, 0.0
    %v279 = vmax.f32 %v28, 0.0
    %v280 = vld [vmem:[%s1] sm:$0xff]
    %281 = vrot.lane.b32.xlu0 %v278, 17
    %v282 = vpop.permute.xlu0 %281
    %283 = vrot.lane.b32.xlu0 %v279, 17
    %v284 = vpop.permute.xlu0 %283
    %v285 = vsel %vm114, %v282, %v284
    %v286 = vsel %vm114, %v284, %v282
    %v287 = vmul.f32 %v286, %v44
    %v288 = vmul.f32 %v285, %v45
    %v289 = vmul.f32 %v287, %v56
    %v290 = vmul.f32 %v288, %v57
    %292 = vset.pattern.permute.xlu0 0
    %293 = vperm.xlu0 %292, %v280
    %v294 = vpop.permute.xlu0 %293
    %v296 = vmul.f32 %v294, %v289
    %v297 = vmul.f32 %v294, %v290
    %298 = vrot.lane.b32.xlu0 %v278, 16
    %v299 = vpop.permute.xlu0 %298
    %300 = vrot.lane.b32.xlu0 %v279, 16
    %v301 = vpop.permute.xlu0 %300
    %v302 = vsel %vm137, %v299, %v301
    %v303 = vsel %vm137, %v301, %v299
    %v304 = vmul.f32 %v303, %v44
    %v305 = vmul.f32 %v302, %v45
    %306 = vset.pattern.permute.xlu0 1
    %307 = vperm.xlu0 %306, %v280
    %v308 = vpop.permute.xlu0 %307
    %v310 = vmul.f32 %v308, %v304
    %v311 = vmul.f32 %v308, %v305
    %v312 = vadd.f32 %v296, %v310
    %v313 = vadd.f32 %v297, %v311
    %314 = vrot.lane.b32.xlu0 %v278, 15
    %v315 = vpop.permute.xlu0 %314
    %316 = vrot.lane.b32.xlu0 %v279, 15
    %v317 = vpop.permute.xlu0 %316
    %v318 = vsel %vm152, %v315, %v317
    %v319 = vsel %vm152, %v317, %v315
    %v320 = vmul.f32 %v319, %v44
    %v321 = vmul.f32 %v318, %v45
    %v322 = vmul.f32 %v320, %v50
    %v323 = vmul.f32 %v321, %v51
    %324 = vset.pattern.permute.xlu0 2
    %325 = vperm.xlu0 %324, %v280
    %v326 = vpop.permute.xlu0 %325
    %v328 = vmul.f32 %v326, %v322
    %v329 = vmul.f32 %v326, %v323
    %v330 = vadd.f32 %v312, %v328
    %v331 = vadd.f32 %v313, %v329
    %332 = vrot.lane.b32.xlu0 %v278, 1
    %v333 = vpop.permute.xlu0 %332
    %334 = vrot.lane.b32.xlu0 %v279, 1
    %v335 = vpop.permute.xlu0 %334
    %v336 = vsel %vm173, %v333, %v335
    %v337 = vsel %vm173, %v335, %v333
    %v338 = vmul.f32 %v337, %v56
    %v339 = vmul.f32 %v336, %v57
    %340 = vset.pattern.permute.xlu0 3
    %341 = vperm.xlu0 %340, %v280
    %v342 = vpop.permute.xlu0 %341
    %v344 = vmul.f32 %v342, %v338
    %v345 = vmul.f32 %v342, %v339
    %v346 = vadd.f32 %v330, %v344
    %v347 = vadd.f32 %v331, %v345
    %348 = vset.pattern.permute.xlu0 4
    %349 = vperm.xlu0 %348, %v280
    %v350 = vpop.permute.xlu0 %349
    %v352 = vmul.f32 %v350, %v278
    %v353 = vmul.f32 %v350, %v279
    %v354 = vadd.f32 %v346, %v352
    %v355 = vadd.f32 %v347, %v353
    %356 = vrot.lane.b32.xlu0 %v278, 127
    %v357 = vpop.permute.xlu0 %356
    %358 = vrot.lane.b32.xlu0 %v279, 127
    %v359 = vpop.permute.xlu0 %358
    %v360 = vsel %vm188, %v357, %v359
    %v361 = vsel %vm188, %v359, %v357
    %v362 = vmul.f32 %v360, %v50
    %v363 = vmul.f32 %v361, %v51
    %364 = vset.pattern.permute.xlu0 5
    %365 = vperm.xlu0 %364, %v280
    %v366 = vpop.permute.xlu0 %365
    %v368 = vmul.f32 %v366, %v362
    %v369 = vmul.f32 %v366, %v363
    %v370 = vadd.f32 %v354, %v368
    %v371 = vadd.f32 %v355, %v369
    %372 = vrot.lane.b32.xlu0 %v278, 113
    %v373 = vpop.permute.xlu0 %372
    %374 = vrot.lane.b32.xlu0 %v279, 113
    %v375 = vpop.permute.xlu0 %374
    %v376 = vsel %vm203, %v373, %v375
    %v377 = vsel %vm203, %v375, %v373
    %v378 = vmul.f32 %v376, %v38
    %v379 = vmul.f32 %v377, %v39
    %v380 = vmul.f32 %v378, %v56
    %v381 = vmul.f32 %v379, %v57
    %382 = vset.pattern.permute.xlu0 6
    %383 = vperm.xlu0 %382, %v280
    %v384 = vpop.permute.xlu0 %383
    %v386 = vmul.f32 %v384, %v380
    %v387 = vmul.f32 %v384, %v381
    %v388 = vadd.f32 %v370, %v386
    %v389 = vadd.f32 %v371, %v387
    %390 = vrot.lane.b32.xlu0 %v278, 112
    %v391 = vpop.permute.xlu0 %390
    %392 = vrot.lane.b32.xlu0 %v279, 112
    %v393 = vpop.permute.xlu0 %392
    %v394 = vsel %vm224, %v391, %v393
    %v395 = vsel %vm224, %v393, %v391
    %v396 = vmul.f32 %v394, %v38
    %v397 = vmul.f32 %v395, %v39
    %398 = vset.pattern.permute.xlu0 7
    %399 = vperm.xlu0 %398, %v280
    %v400 = vpop.permute.xlu0 %399
    %v402 = vmul.f32 %v400, %v396
    %v403 = vmul.f32 %v400, %v397
    %v404 = vadd.f32 %v388, %v402
    %v405 = vadd.f32 %v389, %v403
    %406 = vrot.lane.b32.xlu0 %v278, 111
    %v407 = vpop.permute.xlu0 %406
    %408 = vrot.lane.b32.xlu0 %v279, 111
    %v409 = vpop.permute.xlu0 %408
    %v410 = vsel %vm239, %v407, %v409
    %v411 = vsel %vm239, %v409, %v407
    %v412 = vmul.f32 %v410, %v38
    %v413 = vmul.f32 %v411, %v39
    %v414 = vmul.f32 %v412, %v50
    %v415 = vmul.f32 %v413, %v51
    %416 = vset.pattern.permute.xlu0 8
    %417 = vperm.xlu0 %416, %v280
    %v418 = vpop.permute.xlu0 %417
    %v420 = vmul.f32 %v418, %v414
    %v421 = vmul.f32 %v418, %v415
    %v422 = vadd.f32 %v404, %v420
    %v423 = vadd.f32 %v405, %v421
    %v424 = vrot.slane %v422, 5
    %v425 = vrot.slane %v423, 5
    %426 = vset.pattern.permute.xlu0 9
    %427 = vperm.xlu0 %426, %v280
    %v428 = vpop.permute.xlu0 %427
    %v430 = vmul.f32 %v428, %v424
    %v431 = vmul.f32 %v428, %v425
    %v432 = vrot.slane %v422, 6
    %v433 = vrot.slane %v423, 6
    %434 = vset.pattern.permute.xlu0 10
    %435 = vperm.xlu0 %434, %v280
    %v436 = vpop.permute.xlu0 %435
    %v438 = vmul.f32 %v436, %v432
    %v439 = vmul.f32 %v436, %v433
    %v440 = vadd.f32 %v430, %v438
    %v441 = vadd.f32 %v431, %v439
    %v442 = vrot.slane %v422, 7
    %v443 = vrot.slane %v423, 7
    %444 = vset.pattern.permute.xlu0 11
    %445 = vperm.xlu0 %444, %v280
    %v446 = vpop.permute.xlu0 %445
    %v448 = vmul.f32 %v446, %v442
    %v449 = vmul.f32 %v446, %v443
    %v450 = vadd.f32 %v440, %v448
    %v451 = vadd.f32 %v441, %v449
    %452 = vset.pattern.permute.xlu0 12
    %453 = vperm.xlu0 %452, %v280
    %v454 = vpop.permute.xlu0 %453
    %v456 = vmul.f32 %v454, %v422
    %v457 = vmul.f32 %v454, %v423
    %v458 = vadd.f32 %v450, %v456
    %v459 = vadd.f32 %v451, %v457
    %v460 = vrot.slane %v422, 1
    %v461 = vrot.slane %v423, 1
    %462 = vset.pattern.permute.xlu0 13
    %463 = vperm.xlu0 %462, %v280
    %v464 = vpop.permute.xlu0 %463
    %v466 = vmul.f32 %v464, %v460
    %v467 = vmul.f32 %v464, %v461
    %v468 = vadd.f32 %v458, %v466
    %v469 = vadd.f32 %v459, %v467
    %v470 = vrot.slane %v422, 2
    %v471 = vrot.slane %v423, 2
    %472 = vset.pattern.permute.xlu0 14
    %473 = vperm.xlu0 %472, %v280
    %v474 = vpop.permute.xlu0 %473
    %v476 = vmul.f32 %v474, %v470
    %v477 = vmul.f32 %v474, %v471
    %v478 = vadd.f32 %v468, %v476
    %v479 = vadd.f32 %v469, %v477
    %v480 = vrot.slane %v422, 3
    %v481 = vrot.slane %v423, 3
    %482 = vset.pattern.permute.xlu0 15
    %483 = vperm.xlu0 %482, %v280
    %v484 = vpop.permute.xlu0 %483
    %v486 = vmul.f32 %v484, %v480
    %v487 = vmul.f32 %v484, %v481
    %v488 = vadd.f32 %v478, %v486
    %v489 = vadd.f32 %v479, %v487
    %v490 = vmax.f32 %v488, 0.0
    %v491 = vmax.f32 %v489, 0.0
    %492 = vrot.lane.b32.xlu0 %v490, 17
    %v493 = vpop.permute.xlu0 %492
    %494 = vrot.lane.b32.xlu0 %v491, 17
    %v495 = vpop.permute.xlu0 %494
    %v496 = vsel %vm114, %v493, %v495
    %v497 = vsel %vm114, %v495, %v493
    %v498 = vmul.f32 %v497, %v44
    %v499 = vmul.f32 %v496, %v45
    %v500 = vmul.f32 %v498, %v56
    %v501 = vmul.f32 %v499, %v57
    %502 = vset.pattern.permute.xlu0 16
    %503 = vperm.xlu0 %502, %v280
    %v504 = vpop.permute.xlu0 %503
    %v506 = vmul.f32 %v504, %v500
    %v507 = vmul.f32 %v504, %v501
    %508 = vrot.lane.b32.xlu0 %v490, 16
    %v509 = vpop.permute.xlu0 %508
    %510 = vrot.lane.b32.xlu0 %v491, 16
    %v511 = vpop.permute.xlu0 %510
    %v512 = vsel %vm137, %v509, %v511
    %v513 = vsel %vm137, %v511, %v509
    %v514 = vmul.f32 %v513, %v44
    %v515 = vmul.f32 %v512, %v45
    %516 = vset.pattern.permute.xlu0 17
    %517 = vperm.xlu0 %516, %v280
    %v518 = vpop.permute.xlu0 %517
    %v520 = vmul.f32 %v518, %v514
    %v521 = vmul.f32 %v518, %v515
    %v522 = vadd.f32 %v506, %v520
    %v523 = vadd.f32 %v507, %v521
    %524 = vrot.lane.b32.xlu0 %v490, 15
    %v525 = vpop.permute.xlu0 %524
    %526 = vrot.lane.b32.xlu0 %v491, 15
    %v527 = vpop.permute.xlu0 %526
    %v528 = vsel %vm152, %v525, %v527
    %v529 = vsel %vm152, %v527, %v525
    %v530 = vmul.f32 %v529, %v44
    %v531 = vmul.f32 %v528, %v45
    %v532 = vmul.f32 %v530, %v50
    %v533 = vmul.f32 %v531, %v51
    %534 = vset.pattern.permute.xlu0 18
    %535 = vperm.xlu0 %534, %v280
    %v536 = vpop.permute.xlu0 %535
    %v538 = vmul.f32 %v536, %v532
    %v539 = vmul.f32 %v536, %v533
    %v540 = vadd.f32 %v522, %v538
    %v541 = vadd.f32 %v523, %v539
    %542 = vrot.lane.b32.xlu0 %v490, 1
    %v543 = vpop.permute.xlu0 %542
    %544 = vrot.lane.b32.xlu0 %v491, 1
    %v545 = vpop.permute.xlu0 %544
    %v546 = vsel %vm173, %v543, %v545
    %v547 = vsel %vm173, %v545, %v543
    %v548 = vmul.f32 %v547, %v56
    %v549 = vmul.f32 %v546, %v57
    %550 = vset.pattern.permute.xlu0 19
    %551 = vperm.xlu0 %550, %v280
    %v552 = vpop.permute.xlu0 %551
    %v554 = vmul.f32 %v552, %v548
    %v555 = vmul.f32 %v552, %v549
    %v556 = vadd.f32 %v540, %v554
    %v557 = vadd.f32 %v541, %v555
    %558 = vset.pattern.permute.xlu0 20
    %559 = vperm.xlu0 %558, %v280
    %v560 = vpop.permute.xlu0 %559
    %v562 = vmul.f32 %v560, %v490
    %v563 = vmul.f32 %v560, %v491
    %v564 = vadd.f32 %v556, %v562
    %v565 = vadd.f32 %v557, %v563
    %566 = vrot.lane.b32.xlu0 %v490, 127
    %v567 = vpop.permute.xlu0 %566
    %568 = vrot.lane.b32.xlu0 %v491, 127
    %v569 = vpop.permute.xlu0 %568
    %v570 = vsel %vm188, %v567, %v569
    %v571 = vsel %vm188, %v569, %v567
    %v572 = vmul.f32 %v570, %v50
    %v573 = vmul.f32 %v571, %v51
    %574 = vset.pattern.permute.xlu0 21
    %575 = vperm.xlu0 %574, %v280
    %v576 = vpop.permute.xlu0 %575
    %v578 = vmul.f32 %v576, %v572
    %v579 = vmul.f32 %v576, %v573
    %v580 = vadd.f32 %v564, %v578
    %v581 = vadd.f32 %v565, %v579
    %582 = vrot.lane.b32.xlu0 %v490, 113
    %v583 = vpop.permute.xlu0 %582
    %584 = vrot.lane.b32.xlu0 %v491, 113
    %v585 = vpop.permute.xlu0 %584
    %v586 = vsel %vm203, %v583, %v585
    %v587 = vsel %vm203, %v585, %v583
    %v588 = vmul.f32 %v586, %v38
    %v589 = vmul.f32 %v587, %v39
    %v590 = vmul.f32 %v588, %v56
    %v591 = vmul.f32 %v589, %v57
    %592 = vset.pattern.permute.xlu0 22
    %593 = vperm.xlu0 %592, %v280
    %v594 = vpop.permute.xlu0 %593
    %v596 = vmul.f32 %v594, %v590
    %v597 = vmul.f32 %v594, %v591
    %v598 = vadd.f32 %v580, %v596
    %v599 = vadd.f32 %v581, %v597
    %600 = vrot.lane.b32.xlu0 %v490, 112
    %v601 = vpop.permute.xlu0 %600
    %602 = vrot.lane.b32.xlu0 %v491, 112
    %v603 = vpop.permute.xlu0 %602
    %v604 = vsel %vm224, %v601, %v603
    %v605 = vsel %vm224, %v603, %v601
    %v606 = vmul.f32 %v604, %v38
    %v607 = vmul.f32 %v605, %v39
    %608 = vset.pattern.permute.xlu0 23
    %609 = vperm.xlu0 %608, %v280
    %v610 = vpop.permute.xlu0 %609
    %v612 = vmul.f32 %v610, %v606
    %v613 = vmul.f32 %v610, %v607
    %v614 = vadd.f32 %v598, %v612
    %v615 = vadd.f32 %v599, %v613
    %616 = vrot.lane.b32.xlu0 %v490, 111
    %v617 = vpop.permute.xlu0 %616
    %618 = vrot.lane.b32.xlu0 %v491, 111
    %v619 = vpop.permute.xlu0 %618
    %v620 = vsel %vm239, %v617, %v619
    %v621 = vsel %vm239, %v619, %v617
    %v622 = vmul.f32 %v620, %v38
    %v623 = vmul.f32 %v621, %v39
    %v624 = vmul.f32 %v622, %v50
    %v625 = vmul.f32 %v623, %v51
    %626 = vset.pattern.permute.xlu0 24
    %627 = vperm.xlu0 %626, %v280
    %v628 = vpop.permute.xlu0 %627
    %v630 = vmul.f32 %v628, %v624
    %v631 = vmul.f32 %v628, %v625
    %v632 = vadd.f32 %v614, %v630
    %v633 = vadd.f32 %v615, %v631
    %v634 = vrot.slane %v632, 5
    %v635 = vrot.slane %v633, 5
    %636 = vset.pattern.permute.xlu0 25
    %637 = vperm.xlu0 %636, %v280
    %v638 = vpop.permute.xlu0 %637
    %v640 = vmul.f32 %v638, %v634
    %v641 = vmul.f32 %v638, %v635
    %v642 = vrot.slane %v632, 6
    %v643 = vrot.slane %v633, 6
    %644 = vset.pattern.permute.xlu0 26
    %645 = vperm.xlu0 %644, %v280
    %v646 = vpop.permute.xlu0 %645
    %v648 = vmul.f32 %v646, %v642
    %v649 = vmul.f32 %v646, %v643
    %v650 = vadd.f32 %v640, %v648
    %v651 = vadd.f32 %v641, %v649
    %v652 = vrot.slane %v632, 7
    %v653 = vrot.slane %v633, 7
    %654 = vset.pattern.permute.xlu0 27
    %655 = vperm.xlu0 %654, %v280
    %v656 = vpop.permute.xlu0 %655
    %v658 = vmul.f32 %v656, %v652
    %v659 = vmul.f32 %v656, %v653
    %v660 = vadd.f32 %v650, %v658
    %v661 = vadd.f32 %v651, %v659
    %662 = vset.pattern.permute.xlu0 28
    %663 = vperm.xlu0 %662, %v280
    %v664 = vpop.permute.xlu0 %663
    %v666 = vmul.f32 %v664, %v632
    %v667 = vmul.f32 %v664, %v633
    %v668 = vadd.f32 %v660, %v666
    %v669 = vadd.f32 %v661, %v667
    %v670 = vrot.slane %v632, 1
    %v671 = vrot.slane %v633, 1
    %672 = vset.pattern.permute.xlu0 29
    %673 = vperm.xlu0 %672, %v280
    %v674 = vpop.permute.xlu0 %673
    %v676 = vmul.f32 %v674, %v670
    %v677 = vmul.f32 %v674, %v671
    %v678 = vadd.f32 %v668, %v676
    %v679 = vadd.f32 %v669, %v677
    %v680 = vrot.slane %v632, 2
    %v681 = vrot.slane %v633, 2
    %682 = vset.pattern.permute.xlu0 30
    %683 = vperm.xlu0 %682, %v280
    %v684 = vpop.permute.xlu0 %683
    %v686 = vmul.f32 %v684, %v680
    %v687 = vmul.f32 %v684, %v681
    %v688 = vadd.f32 %v678, %v686
    %v689 = vadd.f32 %v679, %v687
    %v690 = vrot.slane %v632, 3
    %v691 = vrot.slane %v633, 3
    %692 = vset.pattern.permute.xlu0 31
    %693 = vperm.xlu0 %692, %v280
    %v694 = vpop.permute.xlu0 %693
    %v696 = vmul.f32 %v694, %v690
    %v697 = vmul.f32 %v694, %v691
    %v698 = vadd.f32 %v688, %v696
    %v699 = vadd.f32 %v689, %v697
    %v700 = vadd.f32 %v276, %v698
    %v701 = vadd.f32 %v277, %v699
    %702 = vrot.lane.b32.xlu0 %v278, 34
    %v703 = vpop.permute.xlu0 %702
    %704 = vrot.lane.b32.xlu0 %v279, 34
    %v705 = vpop.permute.xlu0 %704
    %vm706 = vcmp.lt.s32.totalorder %v30, 34
    %v707 = vsel %vm706, %v703, %v705
    %v708 = vsel %vm706, %v705, %v703
    %v709 = vmul.f32 %v708, %v68
    %v710 = vmul.f32 %v707, %v69
    %v711 = vmul.f32 %v709, %v80
    %v712 = vmul.f32 %v710, %v81
    %713 = vset.pattern.permute.xlu0 32
    %714 = vperm.xlu0 %713, %v280
    %v715 = vpop.permute.xlu0 %714
    %v717 = vmul.f32 %v715, %v711
    %v718 = vmul.f32 %v715, %v712
    %719 = vrot.lane.b32.xlu0 %v278, 33
    %v720 = vpop.permute.xlu0 %719
    %721 = vrot.lane.b32.xlu0 %v279, 33
    %v722 = vpop.permute.xlu0 %721
    %vm723 = vcmp.lt.s32.totalorder %v30, 33
    %v724 = vsel %vm723, %v720, %v722
    %v725 = vsel %vm723, %v722, %v720
    %v726 = vmul.f32 %v725, %v68
    %v727 = vmul.f32 %v724, %v69
    %v728 = vmul.f32 %v726, %v56
    %v729 = vmul.f32 %v727, %v57
    %730 = vset.pattern.permute.xlu0 33
    %731 = vperm.xlu0 %730, %v280
    %v732 = vpop.permute.xlu0 %731
    %v734 = vmul.f32 %v732, %v728
    %v735 = vmul.f32 %v732, %v729
    %v736 = vadd.f32 %v717, %v734
    %v737 = vadd.f32 %v718, %v735
    %738 = vrot.lane.b32.xlu0 %v278, 32
    %v739 = vpop.permute.xlu0 %738
    %740 = vrot.lane.b32.xlu0 %v279, 32
    %v741 = vpop.permute.xlu0 %740
    %vm742 = vcmp.lt.s32.totalorder %v30, 32
    %v743 = vsel %vm742, %v739, %v741
    %v744 = vsel %vm742, %v741, %v739
    %v745 = vmul.f32 %v744, %v68
    %v746 = vmul.f32 %v743, %v69
    %747 = vset.pattern.permute.xlu0 34
    %748 = vperm.xlu0 %747, %v280
    %v749 = vpop.permute.xlu0 %748
    %v751 = vmul.f32 %v749, %v745
    %v752 = vmul.f32 %v749, %v746
    %v753 = vadd.f32 %v736, %v751
    %v754 = vadd.f32 %v737, %v752
    %755 = vrot.lane.b32.xlu0 %v278, 31
    %v756 = vpop.permute.xlu0 %755
    %757 = vrot.lane.b32.xlu0 %v279, 31
    %v758 = vpop.permute.xlu0 %757
    %vm759 = vcmp.lt.s32.totalorder %v30, 31
    %v760 = vsel %vm759, %v756, %v758
    %v761 = vsel %vm759, %v758, %v756
    %v762 = vmul.f32 %v761, %v68
    %v763 = vmul.f32 %v760, %v69
    %v764 = vmul.f32 %v762, %v50
    %v765 = vmul.f32 %v763, %v51
    %766 = vset.pattern.permute.xlu0 35
    %767 = vperm.xlu0 %766, %v280
    %v768 = vpop.permute.xlu0 %767
    %v770 = vmul.f32 %v768, %v764
    %v771 = vmul.f32 %v768, %v765
    %v772 = vadd.f32 %v753, %v770
    %v773 = vadd.f32 %v754, %v771
    %774 = vrot.lane.b32.xlu0 %v278, 30
    %v775 = vpop.permute.xlu0 %774
    %776 = vrot.lane.b32.xlu0 %v279, 30
    %v777 = vpop.permute.xlu0 %776
    %vm778 = vcmp.lt.s32.totalorder %v30, 30
    %v779 = vsel %vm778, %v775, %v777
    %v780 = vsel %vm778, %v777, %v775
    %v781 = vmul.f32 %v780, %v68
    %v782 = vmul.f32 %v779, %v69
    %v783 = vmul.f32 %v781, %v74
    %v784 = vmul.f32 %v782, %v75
    %785 = vset.pattern.permute.xlu0 36
    %786 = vperm.xlu0 %785, %v280
    %v787 = vpop.permute.xlu0 %786
    %v789 = vmul.f32 %v787, %v783
    %v790 = vmul.f32 %v787, %v784
    %v791 = vadd.f32 %v772, %v789
    %v792 = vadd.f32 %v773, %v790
    %793 = vrot.lane.b32.xlu0 %v278, 18
    %v794 = vpop.permute.xlu0 %793
    %795 = vrot.lane.b32.xlu0 %v279, 18
    %v796 = vpop.permute.xlu0 %795
    %vm797 = vcmp.lt.s32.totalorder %v30, 18
    %v798 = vsel %vm797, %v794, %v796
    %v799 = vsel %vm797, %v796, %v794
    %v800 = vmul.f32 %v799, %v44
    %v801 = vmul.f32 %v798, %v45
    %v802 = vmul.f32 %v800, %v80
    %v803 = vmul.f32 %v801, %v81
    %804 = vset.pattern.permute.xlu0 37
    %805 = vperm.xlu0 %804, %v280
    %v806 = vpop.permute.xlu0 %805
    %v808 = vmul.f32 %v806, %v802
    %v809 = vmul.f32 %v806, %v803
    %v810 = vadd.f32 %v791, %v808
    %v811 = vadd.f32 %v792, %v809
    %812 = vset.pattern.permute.xlu0 38
    %813 = vperm.xlu0 %812, %v280
    %v814 = vpop.permute.xlu0 %813
    %v816 = vmul.f32 %v814, %v289
    %v817 = vmul.f32 %v814, %v290
    %v818 = vadd.f32 %v810, %v816
    %v819 = vadd.f32 %v811, %v817
    %820 = vset.pattern.permute.xlu0 39
    %821 = vperm.xlu0 %820, %v280
    %v822 = vpop.permute.xlu0 %821
    %v824 = vmul.f32 %v822, %v304
    %v825 = vmul.f32 %v822, %v305
    %v826 = vadd.f32 %v818, %v824
    %v827 = vadd.f32 %v819, %v825
    %828 = vset.pattern.permute.xlu0 40
    %829 = vperm.xlu0 %828, %v280
    %v830 = vpop.permute.xlu0 %829
    %v832 = vmul.f32 %v830, %v322
    %v833 = vmul.f32 %v830, %v323
    %v834 = vadd.f32 %v826, %v832
    %v835 = vadd.f32 %v827, %v833
    %836 = vrot.lane.b32.xlu0 %v278, 14
    %v837 = vpop.permute.xlu0 %836
    %838 = vrot.lane.b32.xlu0 %v279, 14
    %v839 = vpop.permute.xlu0 %838
    %vm840 = vcmp.lt.s32.totalorder %v30, 14
    %v841 = vsel %vm840, %v837, %v839
    %v842 = vsel %vm840, %v839, %v837
    %v843 = vmul.f32 %v842, %v44
    %v844 = vmul.f32 %v841, %v45
    %v845 = vmul.f32 %v843, %v74
    %v846 = vmul.f32 %v844, %v75
    %847 = vset.pattern.permute.xlu0 41
    %848 = vperm.xlu0 %847, %v280
    %v849 = vpop.permute.xlu0 %848
    %v851 = vmul.f32 %v849, %v845
    %v852 = vmul.f32 %v849, %v846
    %v853 = vadd.f32 %v834, %v851
    %v854 = vadd.f32 %v835, %v852
    %855 = vrot.lane.b32.xlu0 %v278, 2
    %v856 = vpop.permute.xlu0 %855
    %857 = vrot.lane.b32.xlu0 %v279, 2
    %v858 = vpop.permute.xlu0 %857
    %vm859 = vcmp.lt.s32.totalorder %v30, 2
    %v860 = vsel %vm859, %v856, %v858
    %v861 = vsel %vm859, %v858, %v856
    %v862 = vmul.f32 %v861, %v80
    %v863 = vmul.f32 %v860, %v81
    %864 = vset.pattern.permute.xlu0 42
    %865 = vperm.xlu0 %864, %v280
    %v866 = vpop.permute.xlu0 %865
    %v868 = vmul.f32 %v866, %v862
    %v869 = vmul.f32 %v866, %v863
    %v870 = vadd.f32 %v853, %v868
    %v871 = vadd.f32 %v854, %v869
    %872 = vset.pattern.permute.xlu0 43
    %873 = vperm.xlu0 %872, %v280
    %v874 = vpop.permute.xlu0 %873
    %v876 = vmul.f32 %v874, %v338
    %v877 = vmul.f32 %v874, %v339
    %v878 = vadd.f32 %v870, %v876
    %v879 = vadd.f32 %v871, %v877
    %880 = vset.pattern.permute.xlu0 44
    %881 = vperm.xlu0 %880, %v280
    %v882 = vpop.permute.xlu0 %881
    %v884 = vmul.f32 %v882, %v278
    %v885 = vmul.f32 %v882, %v279
    %v886 = vadd.f32 %v878, %v884
    %v887 = vadd.f32 %v879, %v885
    %888 = vset.pattern.permute.xlu0 45
    %889 = vperm.xlu0 %888, %v280
    %v890 = vpop.permute.xlu0 %889
    %v892 = vmul.f32 %v890, %v362
    %v893 = vmul.f32 %v890, %v363
    %v894 = vadd.f32 %v886, %v892
    %v895 = vadd.f32 %v887, %v893
    %896 = vrot.lane.b32.xlu0 %v278, 126
    %v897 = vpop.permute.xlu0 %896
    %898 = vrot.lane.b32.xlu0 %v279, 126
    %v899 = vpop.permute.xlu0 %898
    %vm900 = vcmp.lt.s32.totalorder %v30, 126
    %v901 = vsel %vm900, %v897, %v899
    %v902 = vsel %vm900, %v899, %v897
    %v903 = vmul.f32 %v901, %v74
    %v904 = vmul.f32 %v902, %v75
    %905 = vset.pattern.permute.xlu0 46
    %906 = vperm.xlu0 %905, %v280
    %v907 = vpop.permute.xlu0 %906
    %v909 = vmul.f32 %v907, %v903
    %v910 = vmul.f32 %v907, %v904
    %v911 = vadd.f32 %v894, %v909
    %v912 = vadd.f32 %v895, %v910
    %913 = vrot.lane.b32.xlu0 %v278, 114
    %v914 = vpop.permute.xlu0 %913
    %915 = vrot.lane.b32.xlu0 %v279, 114
    %v916 = vpop.permute.xlu0 %915
    %vm917 = vcmp.lt.s32.totalorder %v30, 114
    %v918 = vsel %vm917, %v914, %v916
    %v919 = vsel %vm917, %v916, %v914
    %v920 = vmul.f32 %v918, %v38
    %v921 = vmul.f32 %v919, %v39
    %v922 = vmul.f32 %v920, %v80
    %v923 = vmul.f32 %v921, %v81
    %924 = vset.pattern.permute.xlu0 47
    %925 = vperm.xlu0 %924, %v280
    %v926 = vpop.permute.xlu0 %925
    %v928 = vmul.f32 %v926, %v922
    %v929 = vmul.f32 %v926, %v923
    %v930 = vadd.f32 %v911, %v928
    %v931 = vadd.f32 %v912, %v929
    %932 = vset.pattern.permute.xlu0 48
    %933 = vperm.xlu0 %932, %v280
    %v934 = vpop.permute.xlu0 %933
    %v936 = vmul.f32 %v934, %v380
    %v937 = vmul.f32 %v934, %v381
    %v938 = vadd.f32 %v930, %v936
    %v939 = vadd.f32 %v931, %v937
    %940 = vset.pattern.permute.xlu0 49
    %941 = vperm.xlu0 %940, %v280
    %v942 = vpop.permute.xlu0 %941
    %v944 = vmul.f32 %v942, %v396
    %v945 = vmul.f32 %v942, %v397
    %v946 = vadd.f32 %v938, %v944
    %v947 = vadd.f32 %v939, %v945
    %948 = vset.pattern.permute.xlu0 50
    %949 = vperm.xlu0 %948, %v280
    %v950 = vpop.permute.xlu0 %949
    %v952 = vmul.f32 %v950, %v414
    %v953 = vmul.f32 %v950, %v415
    %v954 = vadd.f32 %v946, %v952
    %v955 = vadd.f32 %v947, %v953
    %956 = vrot.lane.b32.xlu0 %v278, 110
    %v957 = vpop.permute.xlu0 %956
    %958 = vrot.lane.b32.xlu0 %v279, 110
    %v959 = vpop.permute.xlu0 %958
    %vm960 = vcmp.lt.s32.totalorder %v30, 110
    %v961 = vsel %vm960, %v957, %v959
    %v962 = vsel %vm960, %v959, %v957
    %v963 = vmul.f32 %v961, %v38
    %v964 = vmul.f32 %v962, %v39
    %v965 = vmul.f32 %v963, %v74
    %v966 = vmul.f32 %v964, %v75
    %967 = vset.pattern.permute.xlu0 51
    %968 = vperm.xlu0 %967, %v280
    %v969 = vpop.permute.xlu0 %968
    %v971 = vmul.f32 %v969, %v965
    %v972 = vmul.f32 %v969, %v966
    %v973 = vadd.f32 %v954, %v971
    %v974 = vadd.f32 %v955, %v972
    %975 = vrot.lane.b32.xlu0 %v278, 98
    %v976 = vpop.permute.xlu0 %975
    %977 = vrot.lane.b32.xlu0 %v279, 98
    %v978 = vpop.permute.xlu0 %977
    %vm979 = vcmp.lt.s32.totalorder %v30, 98
    %v980 = vsel %vm979, %v976, %v978
    %v981 = vsel %vm979, %v978, %v976
    %v982 = vmul.f32 %v980, %v62
    %v983 = vmul.f32 %v981, %v63
    %v984 = vmul.f32 %v982, %v80
    %v985 = vmul.f32 %v983, %v81
    %986 = vset.pattern.permute.xlu0 52
    %987 = vperm.xlu0 %986, %v280
    %v988 = vpop.permute.xlu0 %987
    %v990 = vmul.f32 %v988, %v984
    %v991 = vmul.f32 %v988, %v985
    %v992 = vadd.f32 %v973, %v990
    %v993 = vadd.f32 %v974, %v991
    %994 = vrot.lane.b32.xlu0 %v278, 97
    %v995 = vpop.permute.xlu0 %994
    %996 = vrot.lane.b32.xlu0 %v279, 97
    %v997 = vpop.permute.xlu0 %996
    %vm998 = vcmp.lt.s32.totalorder %v30, 97
    %v999 = vsel %vm998, %v995, %v997
    %v1000 = vsel %vm998, %v997, %v995
    %v1001 = vmul.f32 %v999, %v62
    %v1002 = vmul.f32 %v1000, %v63
    %v1003 = vmul.f32 %v1001, %v56
    %v1004 = vmul.f32 %v1002, %v57
    %1005 = vset.pattern.permute.xlu0 53
    %1006 = vperm.xlu0 %1005, %v280
    %v1007 = vpop.permute.xlu0 %1006
    %v1009 = vmul.f32 %v1007, %v1003
    %v1010 = vmul.f32 %v1007, %v1004
    %v1011 = vadd.f32 %v992, %v1009
    %v1012 = vadd.f32 %v993, %v1010
    %1013 = vrot.lane.b32.xlu0 %v278, 96
    %v1014 = vpop.permute.xlu0 %1013
    %1015 = vrot.lane.b32.xlu0 %v279, 96
    %v1016 = vpop.permute.xlu0 %1015
    %vm1017 = vcmp.lt.s32.totalorder %v30, 96
    %v1018 = vsel %vm1017, %v1014, %v1016
    %v1019 = vsel %vm1017, %v1016, %v1014
    %v1020 = vmul.f32 %v1018, %v62
    %v1021 = vmul.f32 %v1019, %v63
    %1022 = vset.pattern.permute.xlu0 54
    %1023 = vperm.xlu0 %1022, %v280
    %v1024 = vpop.permute.xlu0 %1023
    %v1026 = vmul.f32 %v1024, %v1020
    %v1027 = vmul.f32 %v1024, %v1021
    %v1028 = vadd.f32 %v1011, %v1026
    %v1029 = vadd.f32 %v1012, %v1027
    %1030 = vrot.lane.b32.xlu0 %v278, 95
    %v1031 = vpop.permute.xlu0 %1030
    %1032 = vrot.lane.b32.xlu0 %v279, 95
    %v1033 = vpop.permute.xlu0 %1032
    %vm1034 = vcmp.lt.s32.totalorder %v30, 95
    %v1035 = vsel %vm1034, %v1031, %v1033
    %v1036 = vsel %vm1034, %v1033, %v1031
    %v1037 = vmul.f32 %v1035, %v62
    %v1038 = vmul.f32 %v1036, %v63
    %v1039 = vmul.f32 %v1037, %v50
    %v1040 = vmul.f32 %v1038, %v51
    %1041 = vset.pattern.permute.xlu0 55
    %1042 = vperm.xlu0 %1041, %v280
    %v1043 = vpop.permute.xlu0 %1042
    %v1045 = vmul.f32 %v1043, %v1039
    %v1046 = vmul.f32 %v1043, %v1040
    %v1047 = vadd.f32 %v1028, %v1045
    %v1048 = vadd.f32 %v1029, %v1046
    %1049 = vrot.lane.b32.xlu0 %v278, 94
    %v1050 = vpop.permute.xlu0 %1049
    %1051 = vrot.lane.b32.xlu0 %v279, 94
    %v1052 = vpop.permute.xlu0 %1051
    %vm1053 = vcmp.lt.s32.totalorder %v30, 94
    %v1054 = vsel %vm1053, %v1050, %v1052
    %v1055 = vsel %vm1053, %v1052, %v1050
    %v1056 = vmul.f32 %v1054, %v62
    %v1057 = vmul.f32 %v1055, %v63
    %v1058 = vmul.f32 %v1056, %v74
    %v1059 = vmul.f32 %v1057, %v75
    %1060 = vset.pattern.permute.xlu0 56
    %1061 = vperm.xlu0 %1060, %v280
    %v1062 = vpop.permute.xlu0 %1061
    %v1064 = vmul.f32 %v1062, %v1058
    %v1065 = vmul.f32 %v1062, %v1059
    %v1066 = vadd.f32 %v1047, %v1064
    %v1067 = vadd.f32 %v1048, %v1065
    %v1068 = vrot.slane %v1066, 5
    %v1069 = vrot.slane %v1067, 5
    %1070 = vset.pattern.permute.xlu0 57
    %1071 = vperm.xlu0 %1070, %v280
    %v1072 = vpop.permute.xlu0 %1071
    %v1074 = vmul.f32 %v1072, %v1068
    %v1075 = vmul.f32 %v1072, %v1069
    %v1076 = vrot.slane %v1066, 6
    %v1077 = vrot.slane %v1067, 6
    %1078 = vset.pattern.permute.xlu0 58
    %1079 = vperm.xlu0 %1078, %v280
    %v1080 = vpop.permute.xlu0 %1079
    %v1082 = vmul.f32 %v1080, %v1076
    %v1083 = vmul.f32 %v1080, %v1077
    %v1084 = vadd.f32 %v1074, %v1082
    %v1085 = vadd.f32 %v1075, %v1083
    %v1086 = vrot.slane %v1066, 7
    %v1087 = vrot.slane %v1067, 7
    %1088 = vset.pattern.permute.xlu0 59
    %1089 = vperm.xlu0 %1088, %v280
    %v1090 = vpop.permute.xlu0 %1089
    %v1092 = vmul.f32 %v1090, %v1086
    %v1093 = vmul.f32 %v1090, %v1087
    %v1094 = vadd.f32 %v1084, %v1092
    %v1095 = vadd.f32 %v1085, %v1093
    %1096 = vset.pattern.permute.xlu0 60
    %1097 = vperm.xlu0 %1096, %v280
    %v1098 = vpop.permute.xlu0 %1097
    %v1100 = vmul.f32 %v1098, %v1066
    %v1101 = vmul.f32 %v1098, %v1067
    %v1102 = vadd.f32 %v1094, %v1100
    %v1103 = vadd.f32 %v1095, %v1101
    %v1104 = vrot.slane %v1066, 1
    %v1105 = vrot.slane %v1067, 1
    %1106 = vset.pattern.permute.xlu0 61
    %1107 = vperm.xlu0 %1106, %v280
    %v1108 = vpop.permute.xlu0 %1107
    %v1110 = vmul.f32 %v1108, %v1104
    %v1111 = vmul.f32 %v1108, %v1105
    %v1112 = vadd.f32 %v1102, %v1110
    %v1113 = vadd.f32 %v1103, %v1111
    %v1114 = vrot.slane %v1066, 2
    %v1115 = vrot.slane %v1067, 2
    %1116 = vset.pattern.permute.xlu0 62
    %1117 = vperm.xlu0 %1116, %v280
    %v1118 = vpop.permute.xlu0 %1117
    %v1120 = vmul.f32 %v1118, %v1114
    %v1121 = vmul.f32 %v1118, %v1115
    %v1122 = vadd.f32 %v1112, %v1120
    %v1123 = vadd.f32 %v1113, %v1121
    %v1124 = vrot.slane %v1066, 3
    %v1125 = vrot.slane %v1067, 3
    %1126 = vset.pattern.permute.xlu0 63
    %1127 = vperm.xlu0 %1126, %v280
    %v1128 = vpop.permute.xlu0 %1127
    %v1130 = vmul.f32 %v1128, %v1124
    %v1131 = vmul.f32 %v1128, %v1125
    %v1132 = vadd.f32 %v1122, %v1130
    %v1133 = vadd.f32 %v1123, %v1131
    %v1134 = vmax.f32 %v1132, 0.0
    %v1135 = vmax.f32 %v1133, 0.0
    %1136 = vrot.lane.b32.xlu0 %v1134, 34
    %v1137 = vpop.permute.xlu0 %1136
    %1138 = vrot.lane.b32.xlu0 %v1135, 34
    %v1139 = vpop.permute.xlu0 %1138
    %v1140 = vsel %vm706, %v1137, %v1139
    %v1141 = vsel %vm706, %v1139, %v1137
    %v1142 = vmul.f32 %v1141, %v68
    %v1143 = vmul.f32 %v1140, %v69
    %v1144 = vmul.f32 %v1142, %v80
    %v1145 = vmul.f32 %v1143, %v81
    %1146 = vset.pattern.permute.xlu0 64
    %1147 = vperm.xlu0 %1146, %v280
    %v1148 = vpop.permute.xlu0 %1147
    %v1150 = vmul.f32 %v1148, %v1144
    %v1151 = vmul.f32 %v1148, %v1145
    %1152 = vrot.lane.b32.xlu0 %v1134, 33
    %v1153 = vpop.permute.xlu0 %1152
    %1154 = vrot.lane.b32.xlu0 %v1135, 33
    %v1155 = vpop.permute.xlu0 %1154
    %v1156 = vsel %vm723, %v1153, %v1155
    %v1157 = vsel %vm723, %v1155, %v1153
    %v1158 = vmul.f32 %v1157, %v68
    %v1159 = vmul.f32 %v1156, %v69
    %v1160 = vmul.f32 %v1158, %v56
    %v1161 = vmul.f32 %v1159, %v57
    %1162 = vset.pattern.permute.xlu0 65
    %1163 = vperm.xlu0 %1162, %v280
    %v1164 = vpop.permute.xlu0 %1163
    %v1166 = vmul.f32 %v1164, %v1160
    %v1167 = vmul.f32 %v1164, %v1161
    %v1168 = vadd.f32 %v1150, %v1166
    %v1169 = vadd.f32 %v1151, %v1167
    %1170 = vrot.lane.b32.xlu0 %v1134, 32
    %v1171 = vpop.permute.xlu0 %1170
    %1172 = vrot.lane.b32.xlu0 %v1135, 32
    %v1173 = vpop.permute.xlu0 %1172
    %v1174 = vsel %vm742, %v1171, %v1173
    %v1175 = vsel %vm742, %v1173, %v1171
    %v1176 = vmul.f32 %v1175, %v68
    %v1177 = vmul.f32 %v1174, %v69
    %1178 = vset.pattern.permute.xlu0 66
    %1179 = vperm.xlu0 %1178, %v280
    %v1180 = vpop.permute.xlu0 %1179
    %v1182 = vmul.f32 %v1180, %v1176
    %v1183 = vmul.f32 %v1180, %v1177
    %v1184 = vadd.f32 %v1168, %v1182
    %v1185 = vadd.f32 %v1169, %v1183
    %1186 = vrot.lane.b32.xlu0 %v1134, 31
    %v1187 = vpop.permute.xlu0 %1186
    %1188 = vrot.lane.b32.xlu0 %v1135, 31
    %v1189 = vpop.permute.xlu0 %1188
    %v1190 = vsel %vm759, %v1187, %v1189
    %v1191 = vsel %vm759, %v1189, %v1187
    %v1192 = vmul.f32 %v1191, %v68
    %v1193 = vmul.f32 %v1190, %v69
    %v1194 = vmul.f32 %v1192, %v50
    %v1195 = vmul.f32 %v1193, %v51
    %1196 = vset.pattern.permute.xlu0 67
    %1197 = vperm.xlu0 %1196, %v280
    %v1198 = vpop.permute.xlu0 %1197
    %v1200 = vmul.f32 %v1198, %v1194
    %v1201 = vmul.f32 %v1198, %v1195
    %v1202 = vadd.f32 %v1184, %v1200
    %v1203 = vadd.f32 %v1185, %v1201
    %1204 = vrot.lane.b32.xlu0 %v1134, 30
    %v1205 = vpop.permute.xlu0 %1204
    %1206 = vrot.lane.b32.xlu0 %v1135, 30
    %v1207 = vpop.permute.xlu0 %1206
    %v1208 = vsel %vm778, %v1205, %v1207
    %v1209 = vsel %vm778, %v1207, %v1205
    %v1210 = vmul.f32 %v1209, %v68
    %v1211 = vmul.f32 %v1208, %v69
    %v1212 = vmul.f32 %v1210, %v74
    %v1213 = vmul.f32 %v1211, %v75
    %1214 = vset.pattern.permute.xlu0 68
    %1215 = vperm.xlu0 %1214, %v280
    %v1216 = vpop.permute.xlu0 %1215
    %v1218 = vmul.f32 %v1216, %v1212
    %v1219 = vmul.f32 %v1216, %v1213
    %v1220 = vadd.f32 %v1202, %v1218
    %v1221 = vadd.f32 %v1203, %v1219
    %1222 = vrot.lane.b32.xlu0 %v1134, 18
    %v1223 = vpop.permute.xlu0 %1222
    %1224 = vrot.lane.b32.xlu0 %v1135, 18
    %v1225 = vpop.permute.xlu0 %1224
    %v1226 = vsel %vm797, %v1223, %v1225
    %v1227 = vsel %vm797, %v1225, %v1223
    %v1228 = vmul.f32 %v1227, %v44
    %v1229 = vmul.f32 %v1226, %v45
    %v1230 = vmul.f32 %v1228, %v80
    %v1231 = vmul.f32 %v1229, %v81
    %1232 = vset.pattern.permute.xlu0 69
    %1233 = vperm.xlu0 %1232, %v280
    %v1234 = vpop.permute.xlu0 %1233
    %v1236 = vmul.f32 %v1234, %v1230
    %v1237 = vmul.f32 %v1234, %v1231
    %v1238 = vadd.f32 %v1220, %v1236
    %v1239 = vadd.f32 %v1221, %v1237
    %1240 = vrot.lane.b32.xlu0 %v1134, 17
    %v1241 = vpop.permute.xlu0 %1240
    %1242 = vrot.lane.b32.xlu0 %v1135, 17
    %v1243 = vpop.permute.xlu0 %1242
    %v1244 = vsel %vm114, %v1241, %v1243
    %v1245 = vsel %vm114, %v1243, %v1241
    %v1246 = vmul.f32 %v1245, %v44
    %v1247 = vmul.f32 %v1244, %v45
    %v1248 = vmul.f32 %v1246, %v56
    %v1249 = vmul.f32 %v1247, %v57
    %1250 = vset.pattern.permute.xlu0 70
    %1251 = vperm.xlu0 %1250, %v280
    %v1252 = vpop.permute.xlu0 %1251
    %v1254 = vmul.f32 %v1252, %v1248
    %v1255 = vmul.f32 %v1252, %v1249
    %v1256 = vadd.f32 %v1238, %v1254
    %v1257 = vadd.f32 %v1239, %v1255
    %1258 = vrot.lane.b32.xlu0 %v1134, 16
    %v1259 = vpop.permute.xlu0 %1258
    %1260 = vrot.lane.b32.xlu0 %v1135, 16
    %v1261 = vpop.permute.xlu0 %1260
    %v1262 = vsel %vm137, %v1259, %v1261
    %v1263 = vsel %vm137, %v1261, %v1259
    %v1264 = vmul.f32 %v1263, %v44
    %v1265 = vmul.f32 %v1262, %v45
    %1266 = vset.pattern.permute.xlu0 71
    %1267 = vperm.xlu0 %1266, %v280
    %v1268 = vpop.permute.xlu0 %1267
    %v1270 = vmul.f32 %v1268, %v1264
    %v1271 = vmul.f32 %v1268, %v1265
    %v1272 = vadd.f32 %v1256, %v1270
    %v1273 = vadd.f32 %v1257, %v1271
    %1274 = vrot.lane.b32.xlu0 %v1134, 15
    %v1275 = vpop.permute.xlu0 %1274
    %1276 = vrot.lane.b32.xlu0 %v1135, 15
    %v1277 = vpop.permute.xlu0 %1276
    %v1278 = vsel %vm152, %v1275, %v1277
    %v1279 = vsel %vm152, %v1277, %v1275
    %v1280 = vmul.f32 %v1279, %v44
    %v1281 = vmul.f32 %v1278, %v45
    %v1282 = vmul.f32 %v1280, %v50
    %v1283 = vmul.f32 %v1281, %v51
    %1284 = vset.pattern.permute.xlu0 72
    %1285 = vperm.xlu0 %1284, %v280
    %v1286 = vpop.permute.xlu0 %1285
    %v1288 = vmul.f32 %v1286, %v1282
    %v1289 = vmul.f32 %v1286, %v1283
    %v1290 = vadd.f32 %v1272, %v1288
    %v1291 = vadd.f32 %v1273, %v1289
    %1292 = vrot.lane.b32.xlu0 %v1134, 14
    %v1293 = vpop.permute.xlu0 %1292
    %1294 = vrot.lane.b32.xlu0 %v1135, 14
    %v1295 = vpop.permute.xlu0 %1294
    %v1296 = vsel %vm840, %v1293, %v1295
    %v1297 = vsel %vm840, %v1295, %v1293
    %v1298 = vmul.f32 %v1297, %v44
    %v1299 = vmul.f32 %v1296, %v45
    %v1300 = vmul.f32 %v1298, %v74
    %v1301 = vmul.f32 %v1299, %v75
    %1302 = vset.pattern.permute.xlu0 73
    %1303 = vperm.xlu0 %1302, %v280
    %v1304 = vpop.permute.xlu0 %1303
    %v1306 = vmul.f32 %v1304, %v1300
    %v1307 = vmul.f32 %v1304, %v1301
    %v1308 = vadd.f32 %v1290, %v1306
    %v1309 = vadd.f32 %v1291, %v1307
    %1310 = vrot.lane.b32.xlu0 %v1134, 2
    %v1311 = vpop.permute.xlu0 %1310
    %1312 = vrot.lane.b32.xlu0 %v1135, 2
    %v1313 = vpop.permute.xlu0 %1312
    %v1314 = vsel %vm859, %v1311, %v1313
    %v1315 = vsel %vm859, %v1313, %v1311
    %v1316 = vmul.f32 %v1315, %v80
    %v1317 = vmul.f32 %v1314, %v81
    %1318 = vset.pattern.permute.xlu0 74
    %1319 = vperm.xlu0 %1318, %v280
    %v1320 = vpop.permute.xlu0 %1319
    %v1322 = vmul.f32 %v1320, %v1316
    %v1323 = vmul.f32 %v1320, %v1317
    %v1324 = vadd.f32 %v1308, %v1322
    %v1325 = vadd.f32 %v1309, %v1323
    %1326 = vrot.lane.b32.xlu0 %v1134, 1
    %v1327 = vpop.permute.xlu0 %1326
    %1328 = vrot.lane.b32.xlu0 %v1135, 1
    %v1329 = vpop.permute.xlu0 %1328
    %v1330 = vsel %vm173, %v1327, %v1329
    %v1331 = vsel %vm173, %v1329, %v1327
    %v1332 = vmul.f32 %v1331, %v56
    %v1333 = vmul.f32 %v1330, %v57
    %1334 = vset.pattern.permute.xlu0 75
    %1335 = vperm.xlu0 %1334, %v280
    %v1336 = vpop.permute.xlu0 %1335
    %v1338 = vmul.f32 %v1336, %v1332
    %v1339 = vmul.f32 %v1336, %v1333
    %v1340 = vadd.f32 %v1324, %v1338
    %v1341 = vadd.f32 %v1325, %v1339
    %1342 = vset.pattern.permute.xlu0 76
    %1343 = vperm.xlu0 %1342, %v280
    %v1344 = vpop.permute.xlu0 %1343
    %v1346 = vmul.f32 %v1344, %v1134
    %v1347 = vmul.f32 %v1344, %v1135
    %v1348 = vadd.f32 %v1340, %v1346
    %v1349 = vadd.f32 %v1341, %v1347
    %1350 = vrot.lane.b32.xlu0 %v1134, 127
    %v1351 = vpop.permute.xlu0 %1350
    %1352 = vrot.lane.b32.xlu0 %v1135, 127
    %v1353 = vpop.permute.xlu0 %1352
    %v1354 = vsel %vm188, %v1351, %v1353
    %v1355 = vsel %vm188, %v1353, %v1351
    %v1356 = vmul.f32 %v1354, %v50
    %v1357 = vmul.f32 %v1355, %v51
    %1358 = vset.pattern.permute.xlu0 77
    %1359 = vperm.xlu0 %1358, %v280
    %v1360 = vpop.permute.xlu0 %1359
    %v1362 = vmul.f32 %v1360, %v1356
    %v1363 = vmul.f32 %v1360, %v1357
    %v1364 = vadd.f32 %v1348, %v1362
    %v1365 = vadd.f32 %v1349, %v1363
    %1366 = vrot.lane.b32.xlu0 %v1134, 126
    %v1367 = vpop.permute.xlu0 %1366
    %1368 = vrot.lane.b32.xlu0 %v1135, 126
    %v1369 = vpop.permute.xlu0 %1368
    %v1370 = vsel %vm900, %v1367, %v1369
    %v1371 = vsel %vm900, %v1369, %v1367
    %v1372 = vmul.f32 %v1370, %v74
    %v1373 = vmul.f32 %v1371, %v75
    %1374 = vset.pattern.permute.xlu0 78
    %1375 = vperm.xlu0 %1374, %v280
    %v1376 = vpop.permute.xlu0 %1375
    %v1378 = vmul.f32 %v1376, %v1372
    %v1379 = vmul.f32 %v1376, %v1373
    %v1380 = vadd.f32 %v1364, %v1378
    %v1381 = vadd.f32 %v1365, %v1379
    %1382 = vrot.lane.b32.xlu0 %v1134, 114
    %v1383 = vpop.permute.xlu0 %1382
    %1384 = vrot.lane.b32.xlu0 %v1135, 114
    %v1385 = vpop.permute.xlu0 %1384
    %v1386 = vsel %vm917, %v1383, %v1385
    %v1387 = vsel %vm917, %v1385, %v1383
    %v1388 = vmul.f32 %v1386, %v38
    %v1389 = vmul.f32 %v1387, %v39
    %v1390 = vmul.f32 %v1388, %v80
    %v1391 = vmul.f32 %v1389, %v81
    %1392 = vset.pattern.permute.xlu0 79
    %1393 = vperm.xlu0 %1392, %v280
    %v1394 = vpop.permute.xlu0 %1393
    %v1396 = vmul.f32 %v1394, %v1390
    %v1397 = vmul.f32 %v1394, %v1391
    %v1398 = vadd.f32 %v1380, %v1396
    %v1399 = vadd.f32 %v1381, %v1397
    %1400 = vrot.lane.b32.xlu0 %v1134, 113
    %v1401 = vpop.permute.xlu0 %1400
    %1402 = vrot.lane.b32.xlu0 %v1135, 113
    %v1403 = vpop.permute.xlu0 %1402
    %v1404 = vsel %vm203, %v1401, %v1403
    %v1405 = vsel %vm203, %v1403, %v1401
    %v1406 = vmul.f32 %v1404, %v38
    %v1407 = vmul.f32 %v1405, %v39
    %v1408 = vmul.f32 %v1406, %v56
    %v1409 = vmul.f32 %v1407, %v57
    %1410 = vset.pattern.permute.xlu0 80
    %1411 = vperm.xlu0 %1410, %v280
    %v1412 = vpop.permute.xlu0 %1411
    %v1414 = vmul.f32 %v1412, %v1408
    %v1415 = vmul.f32 %v1412, %v1409
    %v1416 = vadd.f32 %v1398, %v1414
    %v1417 = vadd.f32 %v1399, %v1415
    %1418 = vrot.lane.b32.xlu0 %v1134, 112
    %v1419 = vpop.permute.xlu0 %1418
    %1420 = vrot.lane.b32.xlu0 %v1135, 112
    %v1421 = vpop.permute.xlu0 %1420
    %v1422 = vsel %vm224, %v1419, %v1421
    %v1423 = vsel %vm224, %v1421, %v1419
    %v1424 = vmul.f32 %v1422, %v38
    %v1425 = vmul.f32 %v1423, %v39
    %1426 = vset.pattern.permute.xlu0 81
    %1427 = vperm.xlu0 %1426, %v280
    %v1428 = vpop.permute.xlu0 %1427
    %v1430 = vmul.f32 %v1428, %v1424
    %v1431 = vmul.f32 %v1428, %v1425
    %v1432 = vadd.f32 %v1416, %v1430
    %v1433 = vadd.f32 %v1417, %v1431
    %1434 = vrot.lane.b32.xlu0 %v1134, 111
    %v1435 = vpop.permute.xlu0 %1434
    %1436 = vrot.lane.b32.xlu0 %v1135, 111
    %v1437 = vpop.permute.xlu0 %1436
    %v1438 = vsel %vm239, %v1435, %v1437
    %v1439 = vsel %vm239, %v1437, %v1435
    %v1440 = vmul.f32 %v1438, %v38
    %v1441 = vmul.f32 %v1439, %v39
    %v1442 = vmul.f32 %v1440, %v50
    %v1443 = vmul.f32 %v1441, %v51
    %1444 = vset.pattern.permute.xlu0 82
    %1445 = vperm.xlu0 %1444, %v280
    %v1446 = vpop.permute.xlu0 %1445
    %v1448 = vmul.f32 %v1446, %v1442
    %v1449 = vmul.f32 %v1446, %v1443
    %v1450 = vadd.f32 %v1432, %v1448
    %v1451 = vadd.f32 %v1433, %v1449
    %1452 = vrot.lane.b32.xlu0 %v1134, 110
    %v1453 = vpop.permute.xlu0 %1452
    %1454 = vrot.lane.b32.xlu0 %v1135, 110
    %v1455 = vpop.permute.xlu0 %1454
    %v1456 = vsel %vm960, %v1453, %v1455
    %v1457 = vsel %vm960, %v1455, %v1453
    %v1458 = vmul.f32 %v1456, %v38
    %v1459 = vmul.f32 %v1457, %v39
    %v1460 = vmul.f32 %v1458, %v74
    %v1461 = vmul.f32 %v1459, %v75
    %1462 = vset.pattern.permute.xlu0 83
    %1463 = vperm.xlu0 %1462, %v280
    %v1464 = vpop.permute.xlu0 %1463
    %v1466 = vmul.f32 %v1464, %v1460
    %v1467 = vmul.f32 %v1464, %v1461
    %v1468 = vadd.f32 %v1450, %v1466
    %v1469 = vadd.f32 %v1451, %v1467
    %1470 = vrot.lane.b32.xlu0 %v1134, 98
    %v1471 = vpop.permute.xlu0 %1470
    %1472 = vrot.lane.b32.xlu0 %v1135, 98
    %v1473 = vpop.permute.xlu0 %1472
    %v1474 = vsel %vm979, %v1471, %v1473
    %v1475 = vsel %vm979, %v1473, %v1471
    %v1476 = vmul.f32 %v1474, %v62
    %v1477 = vmul.f32 %v1475, %v63
    %v1478 = vmul.f32 %v1476, %v80
    %v1479 = vmul.f32 %v1477, %v81
    %1480 = vset.pattern.permute.xlu0 84
    %1481 = vperm.xlu0 %1480, %v280
    %v1482 = vpop.permute.xlu0 %1481
    %v1484 = vmul.f32 %v1482, %v1478
    %v1485 = vmul.f32 %v1482, %v1479
    %v1486 = vadd.f32 %v1468, %v1484
    %v1487 = vadd.f32 %v1469, %v1485
    %1488 = vrot.lane.b32.xlu0 %v1134, 97
    %v1489 = vpop.permute.xlu0 %1488
    %1490 = vrot.lane.b32.xlu0 %v1135, 97
    %v1491 = vpop.permute.xlu0 %1490
    %v1492 = vsel %vm998, %v1489, %v1491
    %v1493 = vsel %vm998, %v1491, %v1489
    %v1494 = vmul.f32 %v1492, %v62
    %v1495 = vmul.f32 %v1493, %v63
    %v1496 = vmul.f32 %v1494, %v56
    %v1497 = vmul.f32 %v1495, %v57
    %1498 = vset.pattern.permute.xlu0 85
    %1499 = vperm.xlu0 %1498, %v280
    %v1500 = vpop.permute.xlu0 %1499
    %v1502 = vmul.f32 %v1500, %v1496
    %v1503 = vmul.f32 %v1500, %v1497
    %v1504 = vadd.f32 %v1486, %v1502
    %v1505 = vadd.f32 %v1487, %v1503
    %1506 = vrot.lane.b32.xlu0 %v1134, 96
    %v1507 = vpop.permute.xlu0 %1506
    %1508 = vrot.lane.b32.xlu0 %v1135, 96
    %v1509 = vpop.permute.xlu0 %1508
    %v1510 = vsel %vm1017, %v1507, %v1509
    %v1511 = vsel %vm1017, %v1509, %v1507
    %v1512 = vmul.f32 %v1510, %v62
    %v1513 = vmul.f32 %v1511, %v63
    %1514 = vset.pattern.permute.xlu0 86
    %1515 = vperm.xlu0 %1514, %v280
    %v1516 = vpop.permute.xlu0 %1515
    %v1518 = vmul.f32 %v1516, %v1512
    %v1519 = vmul.f32 %v1516, %v1513
    %v1520 = vadd.f32 %v1504, %v1518
    %v1521 = vadd.f32 %v1505, %v1519
    %1522 = vrot.lane.b32.xlu0 %v1134, 95
    %v1523 = vpop.permute.xlu0 %1522
    %1524 = vrot.lane.b32.xlu0 %v1135, 95
    %v1525 = vpop.permute.xlu0 %1524
    %v1526 = vsel %vm1034, %v1523, %v1525
    %v1527 = vsel %vm1034, %v1525, %v1523
    %v1528 = vmul.f32 %v1526, %v62
    %v1529 = vmul.f32 %v1527, %v63
    %v1530 = vmul.f32 %v1528, %v50
    %v1531 = vmul.f32 %v1529, %v51
    %1532 = vset.pattern.permute.xlu0 87
    %1533 = vperm.xlu0 %1532, %v280
    %v1534 = vpop.permute.xlu0 %1533
    %v1536 = vmul.f32 %v1534, %v1530
    %v1537 = vmul.f32 %v1534, %v1531
    %v1538 = vadd.f32 %v1520, %v1536
    %v1539 = vadd.f32 %v1521, %v1537
    %1540 = vrot.lane.b32.xlu0 %v1134, 94
    %v1541 = vpop.permute.xlu0 %1540
    %1542 = vrot.lane.b32.xlu0 %v1135, 94
    %v1543 = vpop.permute.xlu0 %1542
    %v1544 = vsel %vm1053, %v1541, %v1543
    %v1545 = vsel %vm1053, %v1543, %v1541
    %v1546 = vmul.f32 %v1544, %v62
    %v1547 = vmul.f32 %v1545, %v63
    %v1548 = vmul.f32 %v1546, %v74
    %v1549 = vmul.f32 %v1547, %v75
    %1550 = vset.pattern.permute.xlu0 88
    %1551 = vperm.xlu0 %1550, %v280
    %v1552 = vpop.permute.xlu0 %1551
    %v1554 = vmul.f32 %v1552, %v1548
    %v1555 = vmul.f32 %v1552, %v1549
    %v1556 = vadd.f32 %v1538, %v1554
    %v1557 = vadd.f32 %v1539, %v1555
    %v1558 = vrot.slane %v1556, 5
    %v1559 = vrot.slane %v1557, 5
    %1560 = vset.pattern.permute.xlu0 89
    %1561 = vperm.xlu0 %1560, %v280
    %v1562 = vpop.permute.xlu0 %1561
    %v1564 = vmul.f32 %v1562, %v1558
    %v1565 = vmul.f32 %v1562, %v1559
    %v1566 = vrot.slane %v1556, 6
    %v1567 = vrot.slane %v1557, 6
    %1568 = vset.pattern.permute.xlu0 90
    %1569 = vperm.xlu0 %1568, %v280
    %v1570 = vpop.permute.xlu0 %1569
    %v1572 = vmul.f32 %v1570, %v1566
    %v1573 = vmul.f32 %v1570, %v1567
    %v1574 = vadd.f32 %v1564, %v1572
    %v1575 = vadd.f32 %v1565, %v1573
    %v1576 = vrot.slane %v1556, 7
    %v1577 = vrot.slane %v1557, 7
    %1578 = vset.pattern.permute.xlu0 91
    %1579 = vperm.xlu0 %1578, %v280
    %v1580 = vpop.permute.xlu0 %1579
    %v1582 = vmul.f32 %v1580, %v1576
    %v1583 = vmul.f32 %v1580, %v1577
    %v1584 = vadd.f32 %v1574, %v1582
    %v1585 = vadd.f32 %v1575, %v1583
    %1586 = vset.pattern.permute.xlu0 92
    %1587 = vperm.xlu0 %1586, %v280
    %v1588 = vpop.permute.xlu0 %1587
    %v1590 = vmul.f32 %v1588, %v1556
    %v1591 = vmul.f32 %v1588, %v1557
    %v1592 = vadd.f32 %v1584, %v1590
    %v1593 = vadd.f32 %v1585, %v1591
    %v1594 = vrot.slane %v1556, 1
    %v1595 = vrot.slane %v1557, 1
    %1596 = vset.pattern.permute.xlu0 93
    %1597 = vperm.xlu0 %1596, %v280
    %v1598 = vpop.permute.xlu0 %1597
    %v1600 = vmul.f32 %v1598, %v1594
    %v1601 = vmul.f32 %v1598, %v1595
    %v1602 = vadd.f32 %v1592, %v1600
    %v1603 = vadd.f32 %v1593, %v1601
    %v1604 = vrot.slane %v1556, 2
    %v1605 = vrot.slane %v1557, 2
    %1606 = vset.pattern.permute.xlu0 94
    %1607 = vperm.xlu0 %1606, %v280
    %v1608 = vpop.permute.xlu0 %1607
    %v1610 = vmul.f32 %v1608, %v1604
    %v1611 = vmul.f32 %v1608, %v1605
    %v1612 = vadd.f32 %v1602, %v1610
    %v1613 = vadd.f32 %v1603, %v1611
    %v1614 = vrot.slane %v1556, 3
    %v1615 = vrot.slane %v1557, 3
    %1616 = vset.pattern.permute.xlu0 95
    %1617 = vperm.xlu0 %1616, %v280
    %v1618 = vpop.permute.xlu0 %1617
    %v1620 = vmul.f32 %v1618, %v1614
    %v1621 = vmul.f32 %v1618, %v1615
    %v1622 = vadd.f32 %v1612, %v1620
    %v1623 = vadd.f32 %v1613, %v1621
    %v1624 = vadd.f32 %v700, %v1622
    %v1625 = vadd.f32 %v701, %v1623
    %1626 = vset.pattern.permute.xlu0 96
    %1627 = vperm.xlu0 %1626, %v280
    %v1628 = vpop.permute.xlu0 %1627
    %v1630 = vmul.f32 %v1628, %v711
    %v1631 = vmul.f32 %v1628, %v712
    %1632 = vset.pattern.permute.xlu0 97
    %1633 = vperm.xlu0 %1632, %v280
    %v1634 = vpop.permute.xlu0 %1633
    %v1636 = vmul.f32 %v1634, %v745
    %v1637 = vmul.f32 %v1634, %v746
    %v1638 = vadd.f32 %v1630, %v1636
    %v1639 = vadd.f32 %v1631, %v1637
    %1640 = vset.pattern.permute.xlu0 98
    %1641 = vperm.xlu0 %1640, %v280
    %v1642 = vpop.permute.xlu0 %1641
    %v1644 = vmul.f32 %v1642, %v783
    %v1645 = vmul.f32 %v1642, %v784
    %v1646 = vadd.f32 %v1638, %v1644
    %v1647 = vadd.f32 %v1639, %v1645
    %1648 = vset.pattern.permute.xlu0 99
    %1649 = vperm.xlu0 %1648, %v280
    %v1650 = vpop.permute.xlu0 %1649
    %v1652 = vmul.f32 %v1650, %v862
    %v1653 = vmul.f32 %v1650, %v863
    %v1654 = vadd.f32 %v1646, %v1652
    %v1655 = vadd.f32 %v1647, %v1653
    %1656 = vset.pattern.permute.xlu0 100
    %1657 = vperm.xlu0 %1656, %v280
    %v1658 = vpop.permute.xlu0 %1657
    %v1660 = vmul.f32 %v1658, %v278
    %v1661 = vmul.f32 %v1658, %v279
    %v1662 = vadd.f32 %v1654, %v1660
    %v1663 = vadd.f32 %v1655, %v1661
    %1664 = vset.pattern.permute.xlu0 101
    %1665 = vperm.xlu0 %1664, %v280
    %v1666 = vpop.permute.xlu0 %1665
    %v1668 = vmul.f32 %v1666, %v903
    %v1669 = vmul.f32 %v1666, %v904
    %v1670 = vadd.f32 %v1662, %v1668
    %v1671 = vadd.f32 %v1663, %v1669
    %1672 = vset.pattern.permute.xlu0 102
    %1673 = vperm.xlu0 %1672, %v280
    %v1674 = vpop.permute.xlu0 %1673
    %v1676 = vmul.f32 %v1674, %v984
    %v1677 = vmul.f32 %v1674, %v985
    %v1678 = vadd.f32 %v1670, %v1676
    %v1679 = vadd.f32 %v1671, %v1677
    %1680 = vset.pattern.permute.xlu0 103
    %1681 = vperm.xlu0 %1680, %v280
    %v1682 = vpop.permute.xlu0 %1681
    %v1684 = vmul.f32 %v1682, %v1020
    %v1685 = vmul.f32 %v1682, %v1021
    %v1686 = vadd.f32 %v1678, %v1684
    %v1687 = vadd.f32 %v1679, %v1685
    %1688 = vset.pattern.permute.xlu0 104
    %1689 = vperm.xlu0 %1688, %v280
    %v1690 = vpop.permute.xlu0 %1689
    %v1692 = vmul.f32 %v1690, %v1058
    %v1693 = vmul.f32 %v1690, %v1059
    %v1694 = vadd.f32 %v1686, %v1692
    %v1695 = vadd.f32 %v1687, %v1693
    %v1696 = vrot.slane %v1694, 5
    %v1697 = vrot.slane %v1695, 5
    %1698 = vset.pattern.permute.xlu0 105
    %1699 = vperm.xlu0 %1698, %v280
    %v1700 = vpop.permute.xlu0 %1699
    %v1702 = vmul.f32 %v1700, %v1696
    %v1703 = vmul.f32 %v1700, %v1697
    %v1704 = vrot.slane %v1694, 6
    %v1705 = vrot.slane %v1695, 6
    %1706 = vset.pattern.permute.xlu0 106
    %1707 = vperm.xlu0 %1706, %v280
    %v1708 = vpop.permute.xlu0 %1707
    %v1710 = vmul.f32 %v1708, %v1704
    %v1711 = vmul.f32 %v1708, %v1705
    %v1712 = vadd.f32 %v1702, %v1710
    %v1713 = vadd.f32 %v1703, %v1711
    %v1714 = vrot.slane %v1694, 7
    %v1715 = vrot.slane %v1695, 7
    %1716 = vset.pattern.permute.xlu0 107
    %1717 = vperm.xlu0 %1716, %v280
    %v1718 = vpop.permute.xlu0 %1717
    %v1720 = vmul.f32 %v1718, %v1714
    %v1721 = vmul.f32 %v1718, %v1715
    %v1722 = vadd.f32 %v1712, %v1720
    %v1723 = vadd.f32 %v1713, %v1721
    %1724 = vset.pattern.permute.xlu0 108
    %1725 = vperm.xlu0 %1724, %v280
    %v1726 = vpop.permute.xlu0 %1725
    %v1728 = vmul.f32 %v1726, %v1694
    %v1729 = vmul.f32 %v1726, %v1695
    %v1730 = vadd.f32 %v1722, %v1728
    %v1731 = vadd.f32 %v1723, %v1729
    %v1732 = vrot.slane %v1694, 1
    %v1733 = vrot.slane %v1695, 1
    %1734 = vset.pattern.permute.xlu0 109
    %1735 = vperm.xlu0 %1734, %v280
    %v1736 = vpop.permute.xlu0 %1735
    %v1738 = vmul.f32 %v1736, %v1732
    %v1739 = vmul.f32 %v1736, %v1733
    %v1740 = vadd.f32 %v1730, %v1738
    %v1741 = vadd.f32 %v1731, %v1739
    %v1742 = vrot.slane %v1694, 2
    %v1743 = vrot.slane %v1695, 2
    %1744 = vset.pattern.permute.xlu0 110
    %1745 = vperm.xlu0 %1744, %v280
    %v1746 = vpop.permute.xlu0 %1745
    %v1748 = vmul.f32 %v1746, %v1742
    %v1749 = vmul.f32 %v1746, %v1743
    %v1750 = vadd.f32 %v1740, %v1748
    %v1751 = vadd.f32 %v1741, %v1749
    %v1752 = vrot.slane %v1694, 3
    %v1753 = vrot.slane %v1695, 3
    %1754 = vset.pattern.permute.xlu0 111
    %1755 = vperm.xlu0 %1754, %v280
    %v1756 = vpop.permute.xlu0 %1755
    %v1758 = vmul.f32 %v1756, %v1752
    %v1759 = vmul.f32 %v1756, %v1753
    %v1760 = vadd.f32 %v1750, %v1758
    %v1761 = vadd.f32 %v1751, %v1759
    %v1762 = vadd.f32 %v1624, %v1760
    %v1763 = vadd.f32 %v1625, %v1761
    %1764 = vrot.lane.b32.xlu0 %v278, 68
    %v1765 = vpop.permute.xlu0 %1764
    %1766 = vrot.lane.b32.xlu0 %v279, 68
    %v1767 = vpop.permute.xlu0 %1766
    %vm1768 = vcmp.lt.s32.totalorder %v30, 68
    %v1769 = vsel %vm1768, %v1765, %v1767
    %v1770 = vsel %vm1768, %v1767, %v1765
    %v1771 = vmul.f32 %v1770, %v92
    %v1772 = vmul.f32 %v1769, %v93
    %v1773 = vmul.f32 %v1771, %v104
    %v1774 = vmul.f32 %v1772, %v105
    %1775 = vset.pattern.permute.xlu0 112
    %1776 = vperm.xlu0 %1775, %v280
    %v1777 = vpop.permute.xlu0 %1776
    %v1779 = vmul.f32 %v1777, %v1773
    %v1780 = vmul.f32 %v1777, %v1774
    %1781 = vrot.lane.b32.xlu0 %v278, 66
    %v1782 = vpop.permute.xlu0 %1781
    %1783 = vrot.lane.b32.xlu0 %v279, 66
    %v1784 = vpop.permute.xlu0 %1783
    %vm1785 = vcmp.lt.s32.totalorder %v30, 66
    %v1786 = vsel %vm1785, %v1782, %v1784
    %v1787 = vsel %vm1785, %v1784, %v1782
    %v1788 = vmul.f32 %v1787, %v92
    %v1789 = vmul.f32 %v1786, %v93
    %v1790 = vmul.f32 %v1788, %v80
    %v1791 = vmul.f32 %v1789, %v81
    %1792 = vset.pattern.permute.xlu0 113
    %1793 = vperm.xlu0 %1792, %v280
    %v1794 = vpop.permute.xlu0 %1793
    %v1796 = vmul.f32 %v1794, %v1790
    %v1797 = vmul.f32 %v1794, %v1791
    %v1798 = vadd.f32 %v1779, %v1796
    %v1799 = vadd.f32 %v1780, %v1797
    %1800 = vrot.lane.b32.xlu0 %v278, 64
    %v1801 = vpop.permute.xlu0 %1800
    %1802 = vrot.lane.b32.xlu0 %v279, 64
    %v1803 = vpop.permute.xlu0 %1802
    %vm1804 = vcmp.lt.s32.totalorder %v30, 64
    %v1805 = vsel %vm1804, %v1801, %v1803
    %v1806 = vsel %vm1804, %v1803, %v1801
    %v1807 = vmul.f32 %v1806, %v92
    %v1808 = vmul.f32 %v1805, %v93
    %1809 = vset.pattern.permute.xlu0 114
    %1810 = vperm.xlu0 %1809, %v280
    %v1811 = vpop.permute.xlu0 %1810
    %v1813 = vmul.f32 %v1811, %v1807
    %v1814 = vmul.f32 %v1811, %v1808
    %v1815 = vadd.f32 %v1798, %v1813
    %v1816 = vadd.f32 %v1799, %v1814
    %1817 = vrot.lane.b32.xlu0 %v278, 62
    %v1818 = vpop.permute.xlu0 %1817
    %1819 = vrot.lane.b32.xlu0 %v279, 62
    %v1820 = vpop.permute.xlu0 %1819
    %vm1821 = vcmp.lt.s32.totalorder %v30, 62
    %v1822 = vsel %vm1821, %v1818, %v1820
    %v1823 = vsel %vm1821, %v1820, %v1818
    %v1824 = vmul.f32 %v1823, %v92
    %v1825 = vmul.f32 %v1822, %v93
    %v1826 = vmul.f32 %v1824, %v74
    %v1827 = vmul.f32 %v1825, %v75
    %1828 = vset.pattern.permute.xlu0 115
    %1829 = vperm.xlu0 %1828, %v280
    %v1830 = vpop.permute.xlu0 %1829
    %v1832 = vmul.f32 %v1830, %v1826
    %v1833 = vmul.f32 %v1830, %v1827
    %v1834 = vadd.f32 %v1815, %v1832
    %v1835 = vadd.f32 %v1816, %v1833
    %1836 = vrot.lane.b32.xlu0 %v278, 60
    %v1837 = vpop.permute.xlu0 %1836
    %1838 = vrot.lane.b32.xlu0 %v279, 60
    %v1839 = vpop.permute.xlu0 %1838
    %vm1840 = vcmp.lt.s32.totalorder %v30, 60
    %v1841 = vsel %vm1840, %v1837, %v1839
    %v1842 = vsel %vm1840, %v1839, %v1837
    %v1843 = vmul.f32 %v1842, %v92
    %v1844 = vmul.f32 %v1841, %v93
    %v1845 = vmul.f32 %v1843, %v98
    %v1846 = vmul.f32 %v1844, %v99
    %1847 = vset.pattern.permute.xlu0 116
    %1848 = vperm.xlu0 %1847, %v280
    %v1849 = vpop.permute.xlu0 %1848
    %v1851 = vmul.f32 %v1849, %v1845
    %v1852 = vmul.f32 %v1849, %v1846
    %v1853 = vadd.f32 %v1834, %v1851
    %v1854 = vadd.f32 %v1835, %v1852
    %1855 = vrot.lane.b32.xlu0 %v278, 36
    %v1856 = vpop.permute.xlu0 %1855
    %1857 = vrot.lane.b32.xlu0 %v279, 36
    %v1858 = vpop.permute.xlu0 %1857
    %vm1859 = vcmp.lt.s32.totalorder %v30, 36
    %v1860 = vsel %vm1859, %v1856, %v1858
    %v1861 = vsel %vm1859, %v1858, %v1856
    %v1862 = vmul.f32 %v1861, %v68
    %v1863 = vmul.f32 %v1860, %v69
    %v1864 = vmul.f32 %v1862, %v104
    %v1865 = vmul.f32 %v1863, %v105
    %1866 = vset.pattern.permute.xlu0 117
    %1867 = vperm.xlu0 %1866, %v280
    %v1868 = vpop.permute.xlu0 %1867
    %v1870 = vmul.f32 %v1868, %v1864
    %v1871 = vmul.f32 %v1868, %v1865
    %v1872 = vadd.f32 %v1853, %v1870
    %v1873 = vadd.f32 %v1854, %v1871
    %1874 = vset.pattern.permute.xlu0 118
    %1875 = vperm.xlu0 %1874, %v280
    %v1876 = vpop.permute.xlu0 %1875
    %v1878 = vmul.f32 %v1876, %v711
    %v1879 = vmul.f32 %v1876, %v712
    %v1880 = vadd.f32 %v1872, %v1878
    %v1881 = vadd.f32 %v1873, %v1879
    %1882 = vset.pattern.permute.xlu0 119
    %1883 = vperm.xlu0 %1882, %v280
    %v1884 = vpop.permute.xlu0 %1883
    %v1886 = vmul.f32 %v1884, %v745
    %v1887 = vmul.f32 %v1884, %v746
    %v1888 = vadd.f32 %v1880, %v1886
    %v1889 = vadd.f32 %v1881, %v1887
    %1890 = vset.pattern.permute.xlu0 120
    %1891 = vperm.xlu0 %1890, %v280
    %v1892 = vpop.permute.xlu0 %1891
    %v1894 = vmul.f32 %v1892, %v783
    %v1895 = vmul.f32 %v1892, %v784
    %v1896 = vadd.f32 %v1888, %v1894
    %v1897 = vadd.f32 %v1889, %v1895
    %1898 = vrot.lane.b32.xlu0 %v278, 28
    %v1899 = vpop.permute.xlu0 %1898
    %1900 = vrot.lane.b32.xlu0 %v279, 28
    %v1901 = vpop.permute.xlu0 %1900
    %vm1902 = vcmp.lt.s32.totalorder %v30, 28
    %v1903 = vsel %vm1902, %v1899, %v1901
    %v1904 = vsel %vm1902, %v1901, %v1899
    %v1905 = vmul.f32 %v1904, %v68
    %v1906 = vmul.f32 %v1903, %v69
    %v1907 = vmul.f32 %v1905, %v98
    %v1908 = vmul.f32 %v1906, %v99
    %1909 = vset.pattern.permute.xlu0 121
    %1910 = vperm.xlu0 %1909, %v280
    %v1911 = vpop.permute.xlu0 %1910
    %v1913 = vmul.f32 %v1911, %v1907
    %v1914 = vmul.f32 %v1911, %v1908
    %v1915 = vadd.f32 %v1896, %v1913
    %v1916 = vadd.f32 %v1897, %v1914
    %1917 = vrot.lane.b32.xlu0 %v278, 4
    %v1918 = vpop.permute.xlu0 %1917
    %1919 = vrot.lane.b32.xlu0 %v279, 4
    %v1920 = vpop.permute.xlu0 %1919
    %vm1921 = vcmp.lt.s32.totalorder %v30, 4
    %v1922 = vsel %vm1921, %v1918, %v1920
    %v1923 = vsel %vm1921, %v1920, %v1918
    %v1924 = vmul.f32 %v1923, %v104
    %v1925 = vmul.f32 %v1922, %v105
    %1926 = vset.pattern.permute.xlu0 122
    %1927 = vperm.xlu0 %1926, %v280
    %v1928 = vpop.permute.xlu0 %1927
    %v1930 = vmul.f32 %v1928, %v1924
    %v1931 = vmul.f32 %v1928, %v1925
    %v1932 = vadd.f32 %v1915, %v1930
    %v1933 = vadd.f32 %v1916, %v1931
    %1934 = vset.pattern.permute.xlu0 123
    %1935 = vperm.xlu0 %1934, %v280
    %v1936 = vpop.permute.xlu0 %1935
    %v1938 = vmul.f32 %v1936, %v862
    %v1939 = vmul.f32 %v1936, %v863
    %v1940 = vadd.f32 %v1932, %v1938
    %v1941 = vadd.f32 %v1933, %v1939
    %1942 = vset.pattern.permute.xlu0 124
    %1943 = vperm.xlu0 %1942, %v280
    %v1944 = vpop.permute.xlu0 %1943
    %v1946 = vmul.f32 %v1944, %v278
    %v1947 = vmul.f32 %v1944, %v279
    %v1948 = vadd.f32 %v1940, %v1946
    %v1949 = vadd.f32 %v1941, %v1947
    %1950 = vset.pattern.permute.xlu0 125
    %1951 = vperm.xlu0 %1950, %v280
    %v1952 = vpop.permute.xlu0 %1951
    %v1954 = vmul.f32 %v1952, %v903
    %v1955 = vmul.f32 %v1952, %v904
    %v1956 = vadd.f32 %v1948, %v1954
    %v1957 = vadd.f32 %v1949, %v1955
    %1958 = vrot.lane.b32.xlu0 %v278, 124
    %v1959 = vpop.permute.xlu0 %1958
    %1960 = vrot.lane.b32.xlu0 %v279, 124
    %v1961 = vpop.permute.xlu0 %1960
    %vm1962 = vcmp.lt.s32.totalorder %v30, 124
    %v1963 = vsel %vm1962, %v1959, %v1961
    %v1964 = vsel %vm1962, %v1961, %v1959
    %v1965 = vmul.f32 %v1963, %v98
    %v1966 = vmul.f32 %v1964, %v99
    %1967 = vset.pattern.permute.xlu0 126
    %1968 = vperm.xlu0 %1967, %v280
    %v1969 = vpop.permute.xlu0 %1968
    %v1971 = vmul.f32 %v1969, %v1965
    %v1972 = vmul.f32 %v1969, %v1966
    %v1973 = vadd.f32 %v1956, %v1971
    %v1974 = vadd.f32 %v1957, %v1972
    %1975 = vrot.lane.b32.xlu0 %v278, 100
    %v1976 = vpop.permute.xlu0 %1975
    %1977 = vrot.lane.b32.xlu0 %v279, 100
    %v1978 = vpop.permute.xlu0 %1977
    %vm1979 = vcmp.lt.s32.totalorder %v30, 100
    %v1980 = vsel %vm1979, %v1976, %v1978
    %v1981 = vsel %vm1979, %v1978, %v1976
    %v1982 = vmul.f32 %v1980, %v62
    %v1983 = vmul.f32 %v1981, %v63
    %v1984 = vmul.f32 %v1982, %v104
    %v1985 = vmul.f32 %v1983, %v105
    %1986 = vset.pattern.permute.xlu0 127
    %1987 = vperm.xlu0 %1986, %v280
    %v1988 = vpop.permute.xlu0 %1987
    %v1990 = vmul.f32 %v1988, %v1984
    %v1991 = vmul.f32 %v1988, %v1985
    %v1992 = vadd.f32 %v1973, %v1990
    %v1993 = vadd.f32 %v1974, %v1991
    %v1994 = vld [vmem:[%s1 + $0x8] sm:$0xff]
    %1996 = vset.pattern.permute.xlu0 0
    %1997 = vperm.xlu0 %1996, %v1994
    %v1998 = vpop.permute.xlu0 %1997
    %v2000 = vmul.f32 %v1998, %v984
    %v2001 = vmul.f32 %v1998, %v985
    %v2002 = vadd.f32 %v1992, %v2000
    %v2003 = vadd.f32 %v1993, %v2001
    %2004 = vset.pattern.permute.xlu0 1
    %2005 = vperm.xlu0 %2004, %v1994
    %v2006 = vpop.permute.xlu0 %2005
    %v2008 = vmul.f32 %v2006, %v1020
    %v2009 = vmul.f32 %v2006, %v1021
    %v2010 = vadd.f32 %v2002, %v2008
    %v2011 = vadd.f32 %v2003, %v2009
    %2012 = vset.pattern.permute.xlu0 2
    %2013 = vperm.xlu0 %2012, %v1994
    %v2014 = vpop.permute.xlu0 %2013
    %v2016 = vmul.f32 %v2014, %v1058
    %v2017 = vmul.f32 %v2014, %v1059
    %v2018 = vadd.f32 %v2010, %v2016
    %v2019 = vadd.f32 %v2011, %v2017
    %2020 = vrot.lane.b32.xlu0 %v278, 92
    %v2021 = vpop.permute.xlu0 %2020
    %2022 = vrot.lane.b32.xlu0 %v279, 92
    %v2023 = vpop.permute.xlu0 %2022
    %vm2024 = vcmp.lt.s32.totalorder %v30, 92
    %v2025 = vsel %vm2024, %v2021, %v2023
    %v2026 = vsel %vm2024, %v2023, %v2021
    %v2027 = vmul.f32 %v2025, %v62
    %v2028 = vmul.f32 %v2026, %v63
    %v2029 = vmul.f32 %v2027, %v98
    %v2030 = vmul.f32 %v2028, %v99
    %2031 = vset.pattern.permute.xlu0 3
    %2032 = vperm.xlu0 %2031, %v1994
    %v2033 = vpop.permute.xlu0 %2032
    %v2035 = vmul.f32 %v2033, %v2029
    %v2036 = vmul.f32 %v2033, %v2030
    %v2037 = vadd.f32 %v2018, %v2035
    %v2038 = vadd.f32 %v2019, %v2036
    %v2039 = vmul.f32 %v1769, %v86
    %v2040 = vmul.f32 %v1770, %v87
    %v2041 = vmul.f32 %v2039, %v104
    %v2042 = vmul.f32 %v2040, %v105
    %2043 = vset.pattern.permute.xlu0 4
    %2044 = vperm.xlu0 %2043, %v1994
    %v2045 = vpop.permute.xlu0 %2044
    %v2047 = vmul.f32 %v2045, %v2041
    %v2048 = vmul.f32 %v2045, %v2042
    %v2049 = vadd.f32 %v2037, %v2047
    %v2050 = vadd.f32 %v2038, %v2048
    %v2051 = vmul.f32 %v1786, %v86
    %v2052 = vmul.f32 %v1787, %v87
    %v2053 = vmul.f32 %v2051, %v80
    %v2054 = vmul.f32 %v2052, %v81
    %2055 = vset.pattern.permute.xlu0 5
    %2056 = vperm.xlu0 %2055, %v1994
    %v2057 = vpop.permute.xlu0 %2056
    %v2059 = vmul.f32 %v2057, %v2053
    %v2060 = vmul.f32 %v2057, %v2054
    %v2061 = vadd.f32 %v2049, %v2059
    %v2062 = vadd.f32 %v2050, %v2060
    %v2063 = vmul.f32 %v1805, %v86
    %v2064 = vmul.f32 %v1806, %v87
    %2065 = vset.pattern.permute.xlu0 6
    %2066 = vperm.xlu0 %2065, %v1994
    %v2067 = vpop.permute.xlu0 %2066
    %v2069 = vmul.f32 %v2067, %v2063
    %v2070 = vmul.f32 %v2067, %v2064
    %v2071 = vadd.f32 %v2061, %v2069
    %v2072 = vadd.f32 %v2062, %v2070
    %v2073 = vmul.f32 %v1822, %v86
    %v2074 = vmul.f32 %v1823, %v87
    %v2075 = vmul.f32 %v2073, %v74
    %v2076 = vmul.f32 %v2074, %v75
    %2077 = vset.pattern.permute.xlu0 7
    %2078 = vperm.xlu0 %2077, %v1994
    %v2079 = vpop.permute.xlu0 %2078
    %v2081 = vmul.f32 %v2079, %v2075
    %v2082 = vmul.f32 %v2079, %v2076
    %v2083 = vadd.f32 %v2071, %v2081
    %v2084 = vadd.f32 %v2072, %v2082
    %v2085 = vmul.f32 %v1841, %v86
    %v2086 = vmul.f32 %v1842, %v87
    %v2087 = vmul.f32 %v2085, %v98
    %v2088 = vmul.f32 %v2086, %v99
    %2089 = vset.pattern.permute.xlu0 8
    %2090 = vperm.xlu0 %2089, %v1994
    %v2091 = vpop.permute.xlu0 %2090
    %v2093 = vmul.f32 %v2091, %v2087
    %v2094 = vmul.f32 %v2091, %v2088
    %v2095 = vadd.f32 %v2083, %v2093
    %v2096 = vadd.f32 %v2084, %v2094
    %v2097 = vrot.slane %v2095, 5
    %v2098 = vrot.slane %v2096, 5
    %2099 = vset.pattern.permute.xlu0 9
    %2100 = vperm.xlu0 %2099, %v1994
    %v2101 = vpop.permute.xlu0 %2100
    %v2103 = vmul.f32 %v2101, %v2097
    %v2104 = vmul.f32 %v2101, %v2098
    %v2105 = vrot.slane %v2095, 6
    %v2106 = vrot.slane %v2096, 6
    %2107 = vset.pattern.permute.xlu0 10
    %2108 = vperm.xlu0 %2107, %v1994
    %v2109 = vpop.permute.xlu0 %2108
    %v2111 = vmul.f32 %v2109, %v2105
    %v2112 = vmul.f32 %v2109, %v2106
    %v2113 = vadd.f32 %v2103, %v2111
    %v2114 = vadd.f32 %v2104, %v2112
    %v2115 = vrot.slane %v2095, 7
    %v2116 = vrot.slane %v2096, 7
    %2117 = vset.pattern.permute.xlu0 11
    %2118 = vperm.xlu0 %2117, %v1994
    %v2119 = vpop.permute.xlu0 %2118
    %v2121 = vmul.f32 %v2119, %v2115
    %v2122 = vmul.f32 %v2119, %v2116
    %v2123 = vadd.f32 %v2113, %v2121
    %v2124 = vadd.f32 %v2114, %v2122
    %2125 = vset.pattern.permute.xlu0 12
    %2126 = vperm.xlu0 %2125, %v1994
    %v2127 = vpop.permute.xlu0 %2126
    %v2129 = vmul.f32 %v2127, %v2095
    %v2130 = vmul.f32 %v2127, %v2096
    %v2131 = vadd.f32 %v2123, %v2129
    %v2132 = vadd.f32 %v2124, %v2130
    %v2133 = vrot.slane %v2095, 1
    %v2134 = vrot.slane %v2096, 1
    %2135 = vset.pattern.permute.xlu0 13
    %2136 = vperm.xlu0 %2135, %v1994
    %v2137 = vpop.permute.xlu0 %2136
    %v2139 = vmul.f32 %v2137, %v2133
    %v2140 = vmul.f32 %v2137, %v2134
    %v2141 = vadd.f32 %v2131, %v2139
    %v2142 = vadd.f32 %v2132, %v2140
    %v2143 = vrot.slane %v2095, 2
    %v2144 = vrot.slane %v2096, 2
    %2145 = vset.pattern.permute.xlu0 14
    %2146 = vperm.xlu0 %2145, %v1994
    %v2147 = vpop.permute.xlu0 %2146
    %v2149 = vmul.f32 %v2147, %v2143
    %v2150 = vmul.f32 %v2147, %v2144
    %v2151 = vadd.f32 %v2141, %v2149
    %v2152 = vadd.f32 %v2142, %v2150
    %v2153 = vrot.slane %v2095, 3
    %v2154 = vrot.slane %v2096, 3
    %2155 = vset.pattern.permute.xlu0 15
    %2156 = vperm.xlu0 %2155, %v1994
    %v2157 = vpop.permute.xlu0 %2156
    %v2159 = vmul.f32 %v2157, %v2153
    %v2160 = vmul.f32 %v2157, %v2154
    %v2161 = vadd.f32 %v2151, %v2159
    %v2162 = vadd.f32 %v2152, %v2160
    %v2163 = vadd.f32 %v1762, %v2161
    %v2164 = vadd.f32 %v1763, %v2162
    %2165 = vst [vmem:[%s3] sm:$0xff] %v2163
    %2166 = vst [vmem:[%s3 + $0x8] sm:$0xff] %v2164
    // Predicated region
    $region18: #{mixed_op_forward.1} parent=1 // pred_check
      _
    $region19: #{mixed_op_forward.1} parent=1 // pred_check_branch
      %2168 = sbr.rel (0) target = $region21
    $region20: #{mixed_op_forward.1} parent=1 // pred_region
      _
    $region21: #{mixed_op_forward.1} parent=1 // pred_fallthru
      _
    // Predicated region
    $region22: #{mixed_op_forward.1} parent=1 // pred_check
      _
    $region23: #{mixed_op_forward.1} parent=1 // pred_check_branch
      %2170 = sbr.rel (0) target = $region25
    $region24: #{mixed_op_forward.1} parent=1 // pred_region
      _
    $region25: #{mixed_op_forward.1} parent=1 // pred_fallthru
      _
    %2171 = vsyncpa [#allocation3], 1

</llo_original>
